<compile_context>
chip_gen: v5e
topology: v5e:2x2
jax: 0.10.0
libtpu: 0.0.40
codegen_flags: <defaults>
</compile_context>

<pallas_src>
import functools

import jax
import jax.numpy as jnp
from jax import lax
from jax.experimental import pallas as pl
from jax.experimental.pallas import tpu as pltpu


# ----------------------------------------------------------------------------
# In-kernel helpers
# ----------------------------------------------------------------------------
def _maxpool2x2(y_flat, H, W):
    """2x2/stride-2 max pool. y_flat: (H*W, C) rows ordered h*W + w.

    Returns (H//2, W//2, C). Vectorized: one reshape + two maxes, no per-element
    stores.
    """
    C = y_flat.shape[-1]
    y5 = y_flat.reshape(H // 2, 2, W // 2, 2, C)
    return jnp.max(jnp.max(y5, axis=3), axis=1)


def _fused_forward_kernel(xcol_ref, w1_ref, b1_ref, w2_ref, b2_ref,
                          w3_ref, b3_ref, fc1w_ref, fc1b_ref, hw_ref, hb_ref,
                          out_ref, pad2, pad3, *, H, W):
    # xcol_ref : (1, H*W, 27)   im2col patches of one image (built in wrapper)
    # w1_ref   : (27, 32)       conv1 weights flattened (kh, kw, cin) x cout
    # w2_ref   : (3, 3, 32, 64) conv2 HWIO     w3_ref: (3, 3, 64, 128)
    # fc1w_ref : (S2, 128, 512) fc1 weights, HWC-permuted, chunked per position
    # hw_ref   : (512, HPAD)    all 7 heads concatenated, lane-padded
    # out_ref  : (1, 1, HPAD)   padded logits for one image
    # pad2/pad3: VMEM scratch for the zero-padded conv2/conv3 inputs
    f32 = jnp.float32
    H2, W2 = H // 2, W // 2
    H4, W4 = H // 4, W // 4
    H8, W8 = H // 8, W // 8

    # ---- conv1 + ReLU: one (H*W, 27) @ (27, 32) matmul, single epilogue -----
    y = jnp.dot(xcol_ref[0], w1_ref[...], preferred_element_type=f32)
    y = jnp.maximum(y + b1_ref[...], 0.0)                      # (H*W, 32)
    pool1 = _maxpool2x2(y, H, W)                               # (H2, W2, 32)

    # In-kernel zero padding for conv2.  Scratch persists across grid steps and
    # the grid may be split across cores, so re-zero every step (tiny cost).
    pad2[...] = jnp.zeros(pad2.shape, f32)
    pad2[1:H2 + 1, 1:W2 + 1, :] = pool1

    # ---- conv2 + ReLU: 9 taps, each one (H2*W2, 32) @ (32, 64) matmul --------
    acc = jnp.zeros((H2 * W2, 64), f32)
    for kh in range(3):
        for kw in range(3):
            patch = pad2[kh:kh + H2, kw:kw + W2, :].reshape(H2 * W2, 32)
            acc = acc + jnp.dot(patch, w2_ref[kh, kw],
                                preferred_element_type=f32)
    y = jnp.maximum(acc + b2_ref[...], 0.0)                    # (H2*W2, 64)
    pool2 = _maxpool2x2(y, H2, W2)                             # (H4, W4, 64)

    pad3[...] = jnp.zeros(pad3.shape, f32)
    pad3[1:H4 + 1, 1:W4 + 1, :] = pool2

    # ---- conv3 + ReLU --------------------------------------------------------
    acc = jnp.zeros((H4 * W4, 128), f32)
    for kh in range(3):
        for kw in range(3):
            patch = pad3[kh:kh + H4, kw:kw + W4, :].reshape(H4 * W4, 64)
            acc = acc + jnp.dot(patch, w3_ref[kh, kw],
                                preferred_element_type=f32)
    y = jnp.maximum(acc + b3_ref[...], 0.0)                    # (H4*W4, 128)
    pool3 = _maxpool2x2(y, H4, W4)                             # (H8, W8, 128)

    # ---- flatten (HWC order; fc1 weights were permuted to match) + fc1+ReLU --
    feat = pool3.reshape(H8 * W8, 128)                         # (S2, 128)
    h1 = fc1b_ref[...]                                         # (1, 512)
    for pi in range(H8 * W8):
        h1 = h1 + jnp.dot(feat[pi:pi + 1, :], fc1w_ref[pi],
                          preferred_element_type=f32)
    h1 = jnp.maximum(h1, 0.0)                                  # (1, 512)

    # ---- all 7 heads as one (1, 512) @ (512, HPAD) matmul (lane-dense store) -
    out_ref[0] = jnp.dot(h1, hw_ref[...], preferred_element_type=f32) + hb_ref[...]


# ----------------------------------------------------------------------------
# pallas_call wrapper
# ----------------------------------------------------------------------------
def _fused_forward(xcol, kp, img_size):
    N = xcol.shape[0]
    H = W = img_size
    H2, W2 = H // 2, W // 2
    H4, W4 = H // 4, W // 4
    hpad = kp["heads_w_pad"].shape[1]

    kern = functools.partial(_fused_forward_kernel, H=H, W=W)
    return pl.pallas_call(
        kern,
        out_shape=jax.ShapeDtypeStruct((N, 1, hpad), jnp.float32),
        grid_spec=pltpu.PrefetchScalarGridSpec(
            num_scalar_prefetch=0,
            grid=(N,),
            in_specs=[
                pl.BlockSpec((1, H * W, 27), lambda n: (n, 0, 0)),
                pl.BlockSpec(kp["conv1_wf"].shape, lambda n: (0, 0)),
                pl.BlockSpec(kp["conv1_b"].shape, lambda n: (0, 0)),
                pl.BlockSpec(kp["conv2_w"].shape, lambda n: (0, 0, 0, 0)),
                pl.BlockSpec(kp["conv2_b"].shape, lambda n: (0, 0)),
                pl.BlockSpec(kp["conv3_w"].shape, lambda n: (0, 0, 0, 0)),
                pl.BlockSpec(kp["conv3_b"].shape, lambda n: (0, 0)),
                pl.BlockSpec(kp["fc1_w_k"].shape, lambda n: (0, 0, 0)),
                pl.BlockSpec(kp["fc1_b"].shape, lambda n: (0, 0)),
                pl.BlockSpec(kp["heads_w_pad"].shape, lambda n: (0, 0)),
                pl.BlockSpec(kp["heads_b_pad"].shape, lambda n: (0, 0)),
            ],
            out_specs=pl.BlockSpec((1, 1, hpad), lambda n: (n, 0, 0)),
            scratch_shapes=[
                pltpu.VMEM((H2 + 2, W2 + 2, 32), jnp.float32),   # padded conv2 in
                pltpu.VMEM((H4 + 2, W4 + 2, 64), jnp.float32),   # padded conv3 in
            ],
        ),
        compiler_params=pltpu.CompilerParams(
            dimension_semantics=("parallel",)),   # batch across v7x's 2 TCs
    )(xcol, kp["conv1_wf"], kp["conv1_b"], kp["conv2_w"], kp["conv2_b"],
      kp["conv3_w"], kp["conv3_b"], kp["fc1_w_k"], kp["fc1_b"],
      kp["heads_w_pad"], kp["heads_b_pad"])


# ----------------------------------------------------------------------------
# Host-side prep: im2col for conv1, weight re-layouts, head padding
# ----------------------------------------------------------------------------
def _im2col3x3(x_nhwc):
    """(N, H, W, C) -> (N, H*W, 9*C); feature order (kh, kw, cin) matches
    HWIO weight .reshape(9*C, Cout)."""
    N, H, W, C = x_nhwc.shape
    xp = jnp.pad(x_nhwc, ((0, 0), (1, 1), (1, 1), (0, 0)))
    cols = [xp[:, kh:kh + H, kw:kw + W, :] for kh in range(3) for kw in range(3)]
    return jnp.concatenate(cols, axis=-1).reshape(N, H * W, 9 * C)


def prepare_params(params, img_size):
    """Re-layout torch-equivalent params into kernel-friendly shapes."""
    s = img_size // 8
    feat = 128 * s * s
    total = params["heads_w"].shape[1]
    hpad = ((total + 127) // 128) * 128
    kp = dict(params)
    # conv1 weights flattened to (27, 32) to match the wrapper im2col order.
    kp["conv1_wf"] = params["conv1_w"].reshape(-1, 32)
    # fc1 rows permuted from torch CHW-flatten order to the kernel's HWC-flatten
    # order, then chunked per spatial position -> (s*s, 128, 512).
    fc1_hwc = (params["fc1_w"].reshape(128, s, s, 512)
               .transpose(1, 2, 0, 3).reshape(feat, 512))
    kp["fc1_w_k"] = fc1_hwc.reshape(s * s, 128, 512)
    # all 7 heads concatenated and lane-padded to a multiple of 128.
    kp["heads_w_pad"] = jnp.pad(params["heads_w"], ((0, 0), (0, hpad - total)))
    kp["heads_b_pad"] = jnp.pad(params["heads_b"], ((0, 0), (0, hpad - total)))
    return kp


# ----------------------------------------------------------------------------
# Parameter init (deterministic, synthetic) and full forward pass
# ----------------------------------------------------------------------------
def init_params(key, img_size, head_sizes):
    ks = jax.random.split(key, 10)

    def norm(k, shape, scale=0.05):
        return (scale * jax.random.normal(k, shape)).astype(jnp.float32)

    feat = 128 * (img_size // 8) * (img_size // 8)
    total = sum(head_sizes)
    return {
        "conv1_w": norm(ks[0], (3, 3, 3, 32)),     # HWIO
        "conv1_b": norm(ks[1], (1, 32)),
        "conv2_w": norm(ks[2], (3, 3, 32, 64)),
        "conv2_b": norm(ks[3], (1, 64)),
        "conv3_w": norm(ks[4], (3, 3, 64, 128)),
        "conv3_b": norm(ks[5], (1, 128)),
        "fc1_w": norm(ks[6], (feat, 512)),         # rows in torch CHW order
        "fc1_b": norm(ks[7], (1, 512)),
        "heads_w": norm(ks[8], (512, total)),      # 7 heads concatenated
        "heads_b": norm(ks[9], (1, total)),
    }


def cnn_model1_forward(params, x_nchw, head_sizes):
    # x_nchw: (N, 3, H, W) f32 (PyTorch input convention)
    img_size = x_nchw.shape[-1]
    assert img_size % 8 == 0
    kp = prepare_params(params, img_size)
    x = jnp.transpose(x_nchw, (0, 2, 3, 1))                 # NCHW -> NHWC
    xcol = _im2col3x3(x)                                    # (N, H*W, 27)
    logits = _fused_forward(xcol, kp, img_size)[:, 0, :]    # (N, HPAD)
    logits = logits[:, :sum(head_sizes)]
    outs, off = [], 0
    for n in head_sizes:
        outs.append(logits[:, off:off + n])
        off += n
    return tuple(outs)  # (gender, masterCategory, subCategory, articleType,
                        #  baseColour, season, usage)


# ----------------------------------------------------------------------------
# Pure-JAX/XLA reference (torch-equivalent) for a numerical sanity check
# ----------------------------------------------------------------------------
def _reference_forward(params, x_nchw, head_sizes):
    x = jnp.transpose(x_nchw, (0, 2, 3, 1))

    def conv_relu_pool(x, w, b):
        y = lax.conv_general_dilated(
            x, w, window_strides=(1, 1), padding="SAME",
            dimension_numbers=("NHWC", "HWIO", "NHWC"))
        y = jnp.maximum(y + b.reshape(1, 1, 1, -1), 0.0)
        return lax.reduce_window(y, -jnp.inf, lax.max,
                                 (1, 2, 2, 1), (1, 2, 2, 1), "VALID")

    x = conv_relu_pool(x, params["conv1_w"], params["conv1_b"])
    x = conv_relu_pool(x, params["conv2_w"], params["conv2_b"])
    x = conv_relu_pool(x, params["conv3_w"], params["conv3_b"])
    N = x.shape[0]
    feat = jnp.transpose(x, (0, 3, 1, 2)).reshape(N, -1)    # torch .view order
    h = jnp.maximum(feat @ params["fc1_w"] + params["fc1_b"], 0.0)
    logits = h @ params["heads_w"] + params["heads_b"]
    outs, off = [], 0
    for n in head_sizes:
        outs.append(logits[:, off:off + n])
        off += n
    return tuple(outs)


if __name__ == "__main__":
    img_size = 16
    batch = 2
    # synthetic stand-ins for len(set(df[col])) per task:
    # gender, masterCategory, subCategory, articleType, baseColour, season, usage
    head_sizes = (5, 4, 7, 10, 11, 4, 8)

    key = jax.random.PRNGKey(0)
    pkey, xkey = jax.random.split(key)
    params = init_params(pkey, img_size, head_sizes)
    x = jax.random.normal(xkey, (batch, 3, img_size, img_size), dtype=jnp.float32)

    fwd = jax.jit(functools.partial(cnn_model1_forward, head_sizes=head_sizes))
    outs = jax.block_until_ready(fwd(params, x))

    assert tuple(o.shape for o in outs) == tuple((batch, n) for n in head_sizes)
    assert all(o.dtype == jnp.float32 for o in outs)

    # numerical check vs. a pure-XLA reference of the same module
    refs = _reference_forward(params, x, head_sizes)
    for o, r in zip(outs, refs):
        err = float(jnp.max(jnp.abs(o - r)))
        assert jnp.allclose(o, r, rtol=2e-2, atol=2e-2), err

    print("KERNEL_OK")
</pallas_src>

<mosaic_0001>
module attributes {stable_mosaic.version = 11 : i64} {
  func.func @_fused_forward_kernel(%arg0: i32, %arg1: memref<1x256x27xf32, #tpu.memory_space<vmem>>, %arg2: memref<27x32xf32, #tpu.memory_space<vmem>>, %arg3: memref<1x32xf32, #tpu.memory_space<vmem>>, %arg4: memref<3x3x32x64xf32, #tpu.memory_space<vmem>>, %arg5: memref<1x64xf32, #tpu.memory_space<vmem>>, %arg6: memref<3x3x64x128xf32, #tpu.memory_space<vmem>>, %arg7: memref<1x128xf32, #tpu.memory_space<vmem>>, %arg8: memref<4x128x512xf32, #tpu.memory_space<vmem>>, %arg9: memref<1x512xf32, #tpu.memory_space<vmem>>, %arg10: memref<512x128xf32, #tpu.memory_space<vmem>>, %arg11: memref<1x128xf32, #tpu.memory_space<vmem>>, %arg12: memref<1x1x128xf32, #tpu.memory_space<vmem>>, %arg13: memref<10x10x32xf32, #tpu.memory_space<vmem>>, %arg14: memref<6x6x64xf32, #tpu.memory_space<vmem>>) attributes {dimension_semantics = [#tpu.dimension_semantics<parallel>], iteration_bounds = array<i64: 2>, scalar_prefetch = 0 : i64, scratch_operands = 2 : i64, tpu.core_type = #tpu.core_type<tc>, window_params = [{transform_indices = @transform_0, window_bounds = array<i64: 1, 256, 27>}, {pipeline_mode = #tpu.pipeline_mode<synchronous>, transform_indices = @transform_1, window_bounds = array<i64: 27, 32>}, {pipeline_mode = #tpu.pipeline_mode<synchronous>, transform_indices = @transform_2, window_bounds = array<i64: 1, 32>}, {pipeline_mode = #tpu.pipeline_mode<synchronous>, transform_indices = @transform_3, window_bounds = array<i64: 3, 3, 32, 64>}, {pipeline_mode = #tpu.pipeline_mode<synchronous>, transform_indices = @transform_4, window_bounds = array<i64: 1, 64>}, {pipeline_mode = #tpu.pipeline_mode<synchronous>, transform_indices = @transform_5, window_bounds = array<i64: 3, 3, 64, 128>}, {pipeline_mode = #tpu.pipeline_mode<synchronous>, transform_indices = @transform_6, window_bounds = array<i64: 1, 128>}, {pipeline_mode = #tpu.pipeline_mode<synchronous>, transform_indices = @transform_7, window_bounds = array<i64: 4, 128, 512>}, {pipeline_mode = #tpu.pipeline_mode<synchronous>, transform_indices = @transform_8, window_bounds = array<i64: 1, 512>}, {pipeline_mode = #tpu.pipeline_mode<synchronous>, transform_indices = @transform_9, window_bounds = array<i64: 512, 128>}, {pipeline_mode = #tpu.pipeline_mode<synchronous>, transform_indices = @transform_10, window_bounds = array<i64: 1, 128>}, {transform_indices = @transform_11, window_bounds = array<i64: 1, 1, 128>}]} {
    %c0 = arith.constant 0 : index
    %c0_0 = arith.constant 0 : index
    %c0_1 = arith.constant 0 : index
    %0 = vector.load %arg1[%c0, %c0_0, %c0_1] : memref<1x256x27xf32, #tpu.memory_space<vmem>>, vector<1x256x27xf32>
    %1 = vector.shape_cast %0 : vector<1x256x27xf32> to vector<256x27xf32>
    %c0_2 = arith.constant 0 : index
    %c0_3 = arith.constant 0 : index
    %2 = vector.load %arg2[%c0_2, %c0_3] : memref<27x32xf32, #tpu.memory_space<vmem>>, vector<27x32xf32>
    %cst = arith.constant dense<0.000000e+00> : vector<256x32xf32>
    %3 = tpu.matmul %1, %2, %cst {dimension_numbers = #tpu.dot_dimension_numbers<[1], [0], [0], [1], [0, 0, 1, 1], [], []>} : vector<256x27xf32>, vector<27x32xf32>, vector<256x32xf32> -> vector<256x32xf32>
    %c0_4 = arith.constant 0 : index
    %c0_5 = arith.constant 0 : index
    %4 = vector.load %arg3[%c0_4, %c0_5] : memref<1x32xf32, #tpu.memory_space<vmem>>, vector<1x32xf32>
    %5 = vector.broadcast %4 : vector<1x32xf32> to vector<256x32xf32>
    %6 = arith.addf %3, %5 : vector<256x32xf32>
    %cst_6 = arith.constant 0.000000e+00 : f32
    %7 = vector.broadcast %cst_6 : f32 to vector<256x32xf32>
    %8 = arith.maximumf %6, %7 : vector<256x32xf32>
    %9 = vector.shape_cast %8 : vector<256x32xf32> to vector<8x2x8x2x32xf32>
    %cst_7 = arith.constant dense<0xFF800000> : vector<8x2x8x32xf32>
    %10 = vector.multi_reduction <maximumf>, %9, %cst_7 [3] : vector<8x2x8x2x32xf32> to vector<8x2x8x32xf32>
    %cst_8 = arith.constant dense<0xFF800000> : vector<8x8x32xf32>
    %11 = vector.multi_reduction <maximumf>, %10, %cst_8 [1] : vector<8x2x8x32xf32> to vector<8x8x32xf32>
    %cst_9 = arith.constant 0.000000e+00 : f32
    %12 = vector.broadcast %cst_9 : f32 to vector<10x10x32xf32>
    %c0_10 = arith.constant 0 : index
    %c0_11 = arith.constant 0 : index
    %c0_12 = arith.constant 0 : index
    %13 = vector.load %arg13[%c0_10, %c0_11, %c0_12] : memref<10x10x32xf32, #tpu.memory_space<vmem>>, vector<10x10x32xf32>
    tpu.vector_store %arg13[%c0_10, %c0_11, %c0_12], %12 {strides = array<i32>} : memref<10x10x32xf32, #tpu.memory_space<vmem>>, vector<10x10x32xf32>,
    %c1 = arith.constant 1 : index
    %c1_13 = arith.constant 1 : index
    %c0_14 = arith.constant 0 : index
    %14 = vector.load %arg13[%c1, %c1_13, %c0_14] : memref<10x10x32xf32, #tpu.memory_space<vmem>>, vector<8x8x32xf32>
    tpu.vector_store %arg13[%c1, %c1_13, %c0_14], %11 {strides = array<i32>} : memref<10x10x32xf32, #tpu.memory_space<vmem>>, vector<8x8x32xf32>,
    %cst_15 = arith.constant 0.000000e+00 : f32
    %15 = vector.broadcast %cst_15 : f32 to vector<64x64xf32>
    %c0_16 = arith.constant 0 : index
    %c0_17 = arith.constant 0 : index
    %c0_18 = arith.constant 0 : index
    %16 = vector.load %arg13[%c0_16, %c0_17, %c0_18] : memref<10x10x32xf32, #tpu.memory_space<vmem>>, vector<8x8x32xf32>
    %17 = vector.shape_cast %16 : vector<8x8x32xf32> to vector<64x32xf32>
    %c0_19 = arith.constant 0 : index
    %c0_20 = arith.constant 0 : index
    %c0_21 = arith.constant 0 : index
    %c0_22 = arith.constant 0 : index
    %18 = vector.load %arg4[%c0_19, %c0_20, %c0_21, %c0_22] : memref<3x3x32x64xf32, #tpu.memory_space<vmem>>, vector<1x1x32x64xf32>
    %19 = vector.shape_cast %18 : vector<1x1x32x64xf32> to vector<32x64xf32>
    %cst_23 = arith.constant dense<0.000000e+00> : vector<64x64xf32>
    %20 = tpu.matmul %17, %19, %cst_23 {dimension_numbers = #tpu.dot_dimension_numbers<[1], [0], [0], [1], [0, 0, 1, 1], [], []>} : vector<64x32xf32>, vector<32x64xf32>, vector<64x64xf32> -> vector<64x64xf32>
    %21 = arith.addf %15, %20 : vector<64x64xf32>
    %c0_24 = arith.constant 0 : index
    %c1_25 = arith.constant 1 : index
    %c0_26 = arith.constant 0 : index
    %22 = vector.load %arg13[%c0_24, %c1_25, %c0_26] : memref<10x10x32xf32, #tpu.memory_space<vmem>>, vector<8x8x32xf32>
    %23 = vector.shape_cast %22 : vector<8x8x32xf32> to vector<64x32xf32>
    %c0_27 = arith.constant 0 : index
    %c1_28 = arith.constant 1 : index
    %c0_29 = arith.constant 0 : index
    %c0_30 = arith.constant 0 : index
    %24 = vector.load %arg4[%c0_27, %c1_28, %c0_29, %c0_30] : memref<3x3x32x64xf32, #tpu.memory_space<vmem>>, vector<1x1x32x64xf32>
    %25 = vector.shape_cast %24 : vector<1x1x32x64xf32> to vector<32x64xf32>
    %cst_31 = arith.constant dense<0.000000e+00> : vector<64x64xf32>
    %26 = tpu.matmul %23, %25, %cst_31 {dimension_numbers = #tpu.dot_dimension_numbers<[1], [0], [0], [1], [0, 0, 1, 1], [], []>} : vector<64x32xf32>, vector<32x64xf32>, vector<64x64xf32> -> vector<64x64xf32>
    %27 = arith.addf %21, %26 : vector<64x64xf32>
    %c0_32 = arith.constant 0 : index
    %c2 = arith.constant 2 : index
    %c0_33 = arith.constant 0 : index
    %28 = vector.load %arg13[%c0_32, %c2, %c0_33] : memref<10x10x32xf32, #tpu.memory_space<vmem>>, vector<8x8x32xf32>
    %29 = vector.shape_cast %28 : vector<8x8x32xf32> to vector<64x32xf32>
    %c0_34 = arith.constant 0 : index
    %c2_35 = arith.constant 2 : index
    %c0_36 = arith.constant 0 : index
    %c0_37 = arith.constant 0 : index
    %30 = vector.load %arg4[%c0_34, %c2_35, %c0_36, %c0_37] : memref<3x3x32x64xf32, #tpu.memory_space<vmem>>, vector<1x1x32x64xf32>
    %31 = vector.shape_cast %30 : vector<1x1x32x64xf32> to vector<32x64xf32>
    %cst_38 = arith.constant dense<0.000000e+00> : vector<64x64xf32>
    %32 = tpu.matmul %29, %31, %cst_38 {dimension_numbers = #tpu.dot_dimension_numbers<[1], [0], [0], [1], [0, 0, 1, 1], [], []>} : vector<64x32xf32>, vector<32x64xf32>, vector<64x64xf32> -> vector<64x64xf32>
    %33 = arith.addf %27, %32 : vector<64x64xf32>
    %c1_39 = arith.constant 1 : index
    %c0_40 = arith.constant 0 : index
    %c0_41 = arith.constant 0 : index
    %34 = vector.load %arg13[%c1_39, %c0_40, %c0_41] : memref<10x10x32xf32, #tpu.memory_space<vmem>>, vector<8x8x32xf32>
    %35 = vector.shape_cast %34 : vector<8x8x32xf32> to vector<64x32xf32>
    %c1_42 = arith.constant 1 : index
    %c0_43 = arith.constant 0 : index
    %c0_44 = arith.constant 0 : index
    %c0_45 = arith.constant 0 : index
    %36 = vector.load %arg4[%c1_42, %c0_43, %c0_44, %c0_45] : memref<3x3x32x64xf32, #tpu.memory_space<vmem>>, vector<1x1x32x64xf32>
    %37 = vector.shape_cast %36 : vector<1x1x32x64xf32> to vector<32x64xf32>
    %cst_46 = arith.constant dense<0.000000e+00> : vector<64x64xf32>
    %38 = tpu.matmul %35, %37, %cst_46 {dimension_numbers = #tpu.dot_dimension_numbers<[1], [0], [0], [1], [0, 0, 1, 1], [], []>} : vector<64x32xf32>, vector<32x64xf32>, vector<64x64xf32> -> vector<64x64xf32>
    %39 = arith.addf %33, %38 : vector<64x64xf32>
    %c1_47 = arith.constant 1 : index
    %c1_48 = arith.constant 1 : index
    %c0_49 = arith.constant 0 : index
    %40 = vector.load %arg13[%c1_47, %c1_48, %c0_49] : memref<10x10x32xf32, #tpu.memory_space<vmem>>, vector<8x8x32xf32>
    %41 = vector.shape_cast %40 : vector<8x8x32xf32> to vector<64x32xf32>
    %c1_50 = arith.constant 1 : index
    %c1_51 = arith.constant 1 : index
    %c0_52 = arith.constant 0 : index
    %c0_53 = arith.constant 0 : index
    %42 = vector.load %arg4[%c1_50, %c1_51, %c0_52, %c0_53] : memref<3x3x32x64xf32, #tpu.memory_space<vmem>>, vector<1x1x32x64xf32>
    %43 = vector.shape_cast %42 : vector<1x1x32x64xf32> to vector<32x64xf32>
    %cst_54 = arith.constant dense<0.000000e+00> : vector<64x64xf32>
    %44 = tpu.matmul %41, %43, %cst_54 {dimension_numbers = #tpu.dot_dimension_numbers<[1], [0], [0], [1], [0, 0, 1, 1], [], []>} : vector<64x32xf32>, vector<32x64xf32>, vector<64x64xf32> -> vector<64x64xf32>
    %45 = arith.addf %39, %44 : vector<64x64xf32>
    %c1_55 = arith.constant 1 : index
    %c2_56 = arith.constant 2 : index
    %c0_57 = arith.constant 0 : index
    %46 = vector.load %arg13[%c1_55, %c2_56, %c0_57] : memref<10x10x32xf32, #tpu.memory_space<vmem>>, vector<8x8x32xf32>
    %47 = vector.shape_cast %46 : vector<8x8x32xf32> to vector<64x32xf32>
    %c1_58 = arith.constant 1 : index
    %c2_59 = arith.constant 2 : index
    %c0_60 = arith.constant 0 : index
    %c0_61 = arith.constant 0 : index
    %48 = vector.load %arg4[%c1_58, %c2_59, %c0_60, %c0_61] : memref<3x3x32x64xf32, #tpu.memory_space<vmem>>, vector<1x1x32x64xf32>
    %49 = vector.shape_cast %48 : vector<1x1x32x64xf32> to vector<32x64xf32>
    %cst_62 = arith.constant dense<0.000000e+00> : vector<64x64xf32>
    %50 = tpu.matmul %47, %49, %cst_62 {dimension_numbers = #tpu.dot_dimension_numbers<[1], [0], [0], [1], [0, 0, 1, 1], [], []>} : vector<64x32xf32>, vector<32x64xf32>, vector<64x64xf32> -> vector<64x64xf32>
    %51 = arith.addf %45, %50 : vector<64x64xf32>
    %c2_63 = arith.constant 2 : index
    %c0_64 = arith.constant 0 : index
    %c0_65 = arith.constant 0 : index
    %52 = vector.load %arg13[%c2_63, %c0_64, %c0_65] : memref<10x10x32xf32, #tpu.memory_space<vmem>>, vector<8x8x32xf32>
    %53 = vector.shape_cast %52 : vector<8x8x32xf32> to vector<64x32xf32>
    %c2_66 = arith.constant 2 : index
    %c0_67 = arith.constant 0 : index
    %c0_68 = arith.constant 0 : index
    %c0_69 = arith.constant 0 : index
    %54 = vector.load %arg4[%c2_66, %c0_67, %c0_68, %c0_69] : memref<3x3x32x64xf32, #tpu.memory_space<vmem>>, vector<1x1x32x64xf32>
    %55 = vector.shape_cast %54 : vector<1x1x32x64xf32> to vector<32x64xf32>
    %cst_70 = arith.constant dense<0.000000e+00> : vector<64x64xf32>
    %56 = tpu.matmul %53, %55, %cst_70 {dimension_numbers = #tpu.dot_dimension_numbers<[1], [0], [0], [1], [0, 0, 1, 1], [], []>} : vector<64x32xf32>, vector<32x64xf32>, vector<64x64xf32> -> vector<64x64xf32>
    %57 = arith.addf %51, %56 : vector<64x64xf32>
    %c2_71 = arith.constant 2 : index
    %c1_72 = arith.constant 1 : index
    %c0_73 = arith.constant 0 : index
    %58 = vector.load %arg13[%c2_71, %c1_72, %c0_73] : memref<10x10x32xf32, #tpu.memory_space<vmem>>, vector<8x8x32xf32>
    %59 = vector.shape_cast %58 : vector<8x8x32xf32> to vector<64x32xf32>
    %c2_74 = arith.constant 2 : index
    %c1_75 = arith.constant 1 : index
    %c0_76 = arith.constant 0 : index
    %c0_77 = arith.constant 0 : index
    %60 = vector.load %arg4[%c2_74, %c1_75, %c0_76, %c0_77] : memref<3x3x32x64xf32, #tpu.memory_space<vmem>>, vector<1x1x32x64xf32>
    %61 = vector.shape_cast %60 : vector<1x1x32x64xf32> to vector<32x64xf32>
    %cst_78 = arith.constant dense<0.000000e+00> : vector<64x64xf32>
    %62 = tpu.matmul %59, %61, %cst_78 {dimension_numbers = #tpu.dot_dimension_numbers<[1], [0], [0], [1], [0, 0, 1, 1], [], []>} : vector<64x32xf32>, vector<32x64xf32>, vector<64x64xf32> -> vector<64x64xf32>
    %63 = arith.addf %57, %62 : vector<64x64xf32>
    %c2_79 = arith.constant 2 : index
    %c2_80 = arith.constant 2 : index
    %c0_81 = arith.constant 0 : index
    %64 = vector.load %arg13[%c2_79, %c2_80, %c0_81] : memref<10x10x32xf32, #tpu.memory_space<vmem>>, vector<8x8x32xf32>
    %65 = vector.shape_cast %64 : vector<8x8x32xf32> to vector<64x32xf32>
    %c2_82 = arith.constant 2 : index
    %c2_83 = arith.constant 2 : index
    %c0_84 = arith.constant 0 : index
    %c0_85 = arith.constant 0 : index
    %66 = vector.load %arg4[%c2_82, %c2_83, %c0_84, %c0_85] : memref<3x3x32x64xf32, #tpu.memory_space<vmem>>, vector<1x1x32x64xf32>
    %67 = vector.shape_cast %66 : vector<1x1x32x64xf32> to vector<32x64xf32>
    %cst_86 = arith.constant dense<0.000000e+00> : vector<64x64xf32>
    %68 = tpu.matmul %65, %67, %cst_86 {dimension_numbers = #tpu.dot_dimension_numbers<[1], [0], [0], [1], [0, 0, 1, 1], [], []>} : vector<64x32xf32>, vector<32x64xf32>, vector<64x64xf32> -> vector<64x64xf32>
    %69 = arith.addf %63, %68 : vector<64x64xf32>
    %c0_87 = arith.constant 0 : index
    %c0_88 = arith.constant 0 : index
    %70 = vector.load %arg5[%c0_87, %c0_88] : memref<1x64xf32, #tpu.memory_space<vmem>>, vector<1x64xf32>
    %71 = vector.broadcast %70 : vector<1x64xf32> to vector<64x64xf32>
    %72 = arith.addf %69, %71 : vector<64x64xf32>
    %cst_89 = arith.constant 0.000000e+00 : f32
    %73 = vector.broadcast %cst_89 : f32 to vector<64x64xf32>
    %74 = arith.maximumf %72, %73 : vector<64x64xf32>
    %75 = vector.shape_cast %74 : vector<64x64xf32> to vector<4x2x4x2x64xf32>
    %cst_90 = arith.constant dense<0xFF800000> : vector<4x2x4x64xf32>
    %76 = vector.multi_reduction <maximumf>, %75, %cst_90 [3] : vector<4x2x4x2x64xf32> to vector<4x2x4x64xf32>
    %cst_91 = arith.constant dense<0xFF800000> : vector<4x4x64xf32>
    %77 = vector.multi_reduction <maximumf>, %76, %cst_91 [1] : vector<4x2x4x64xf32> to vector<4x4x64xf32>
    %cst_92 = arith.constant 0.000000e+00 : f32
    %78 = vector.broadcast %cst_92 : f32 to vector<6x6x64xf32>
    %c0_93 = arith.constant 0 : index
    %c0_94 = arith.constant 0 : index
    %c0_95 = arith.constant 0 : index
    %79 = vector.load %arg14[%c0_93, %c0_94, %c0_95] : memref<6x6x64xf32, #tpu.memory_space<vmem>>, vector<6x6x64xf32>
    tpu.vector_store %arg14[%c0_93, %c0_94, %c0_95], %78 {strides = array<i32>} : memref<6x6x64xf32, #tpu.memory_space<vmem>>, vector<6x6x64xf32>,
    %c1_96 = arith.constant 1 : index
    %c1_97 = arith.constant 1 : index
    %c0_98 = arith.constant 0 : index
    %80 = vector.load %arg14[%c1_96, %c1_97, %c0_98] : memref<6x6x64xf32, #tpu.memory_space<vmem>>, vector<4x4x64xf32>
    tpu.vector_store %arg14[%c1_96, %c1_97, %c0_98], %77 {strides = array<i32>} : memref<6x6x64xf32, #tpu.memory_space<vmem>>, vector<4x4x64xf32>,
    %cst_99 = arith.constant 0.000000e+00 : f32
    %81 = vector.broadcast %cst_99 : f32 to vector<16x128xf32>
    %c0_100 = arith.constant 0 : index
    %c0_101 = arith.constant 0 : index
    %c0_102 = arith.constant 0 : index
    %82 = vector.load %arg14[%c0_100, %c0_101, %c0_102] : memref<6x6x64xf32, #tpu.memory_space<vmem>>, vector<4x4x64xf32>
    %83 = vector.shape_cast %82 : vector<4x4x64xf32> to vector<16x64xf32>
    %c0_103 = arith.constant 0 : index
    %c0_104 = arith.constant 0 : index
    %c0_105 = arith.constant 0 : index
    %c0_106 = arith.constant 0 : index
    %84 = vector.load %arg6[%c0_103, %c0_104, %c0_105, %c0_106] : memref<3x3x64x128xf32, #tpu.memory_space<vmem>>, vector<1x1x64x128xf32>
    %85 = vector.shape_cast %84 : vector<1x1x64x128xf32> to vector<64x128xf32>
    %cst_107 = arith.constant dense<0.000000e+00> : vector<16x128xf32>
    %86 = tpu.matmul %83, %85, %cst_107 {dimension_numbers = #tpu.dot_dimension_numbers<[1], [0], [0], [1], [0, 0, 1, 1], [], []>} : vector<16x64xf32>, vector<64x128xf32>, vector<16x128xf32> -> vector<16x128xf32>
    %87 = arith.addf %81, %86 : vector<16x128xf32>
    %c0_108 = arith.constant 0 : index
    %c1_109 = arith.constant 1 : index
    %c0_110 = arith.constant 0 : index
    %88 = vector.load %arg14[%c0_108, %c1_109, %c0_110] : memref<6x6x64xf32, #tpu.memory_space<vmem>>, vector<4x4x64xf32>
    %89 = vector.shape_cast %88 : vector<4x4x64xf32> to vector<16x64xf32>
    %c0_111 = arith.constant 0 : index
    %c1_112 = arith.constant 1 : index
    %c0_113 = arith.constant 0 : index
    %c0_114 = arith.constant 0 : index
    %90 = vector.load %arg6[%c0_111, %c1_112, %c0_113, %c0_114] : memref<3x3x64x128xf32, #tpu.memory_space<vmem>>, vector<1x1x64x128xf32>
    %91 = vector.shape_cast %90 : vector<1x1x64x128xf32> to vector<64x128xf32>
    %cst_115 = arith.constant dense<0.000000e+00> : vector<16x128xf32>
    %92 = tpu.matmul %89, %91, %cst_115 {dimension_numbers = #tpu.dot_dimension_numbers<[1], [0], [0], [1], [0, 0, 1, 1], [], []>} : vector<16x64xf32>, vector<64x128xf32>, vector<16x128xf32> -> vector<16x128xf32>
    %93 = arith.addf %87, %92 : vector<16x128xf32>
    %c0_116 = arith.constant 0 : index
    %c2_117 = arith.constant 2 : index
    %c0_118 = arith.constant 0 : index
    %94 = vector.load %arg14[%c0_116, %c2_117, %c0_118] : memref<6x6x64xf32, #tpu.memory_space<vmem>>, vector<4x4x64xf32>
    %95 = vector.shape_cast %94 : vector<4x4x64xf32> to vector<16x64xf32>
    %c0_119 = arith.constant 0 : index
    %c2_120 = arith.constant 2 : index
    %c0_121 = arith.constant 0 : index
    %c0_122 = arith.constant 0 : index
    %96 = vector.load %arg6[%c0_119, %c2_120, %c0_121, %c0_122] : memref<3x3x64x128xf32, #tpu.memory_space<vmem>>, vector<1x1x64x128xf32>
    %97 = vector.shape_cast %96 : vector<1x1x64x128xf32> to vector<64x128xf32>
    %cst_123 = arith.constant dense<0.000000e+00> : vector<16x128xf32>
    %98 = tpu.matmul %95, %97, %cst_123 {dimension_numbers = #tpu.dot_dimension_numbers<[1], [0], [0], [1], [0, 0, 1, 1], [], []>} : vector<16x64xf32>, vector<64x128xf32>, vector<16x128xf32> -> vector<16x128xf32>
    %99 = arith.addf %93, %98 : vector<16x128xf32>
    %c1_124 = arith.constant 1 : index
    %c0_125 = arith.constant 0 : index
    %c0_126 = arith.constant 0 : index
    %100 = vector.load %arg14[%c1_124, %c0_125, %c0_126] : memref<6x6x64xf32, #tpu.memory_space<vmem>>, vector<4x4x64xf32>
    %101 = vector.shape_cast %100 : vector<4x4x64xf32> to vector<16x64xf32>
    %c1_127 = arith.constant 1 : index
    %c0_128 = arith.constant 0 : index
    %c0_129 = arith.constant 0 : index
    %c0_130 = arith.constant 0 : index
    %102 = vector.load %arg6[%c1_127, %c0_128, %c0_129, %c0_130] : memref<3x3x64x128xf32, #tpu.memory_space<vmem>>, vector<1x1x64x128xf32>
    %103 = vector.shape_cast %102 : vector<1x1x64x128xf32> to vector<64x128xf32>
    %cst_131 = arith.constant dense<0.000000e+00> : vector<16x128xf32>
    %104 = tpu.matmul %101, %103, %cst_131 {dimension_numbers = #tpu.dot_dimension_numbers<[1], [0], [0], [1], [0, 0, 1, 1], [], []>} : vector<16x64xf32>, vector<64x128xf32>, vector<16x128xf32> -> vector<16x128xf32>
    %105 = arith.addf %99, %104 : vector<16x128xf32>
    %c1_132 = arith.constant 1 : index
    %c1_133 = arith.constant 1 : index
    %c0_134 = arith.constant 0 : index
    %106 = vector.load %arg14[%c1_132, %c1_133, %c0_134] : memref<6x6x64xf32, #tpu.memory_space<vmem>>, vector<4x4x64xf32>
    %107 = vector.shape_cast %106 : vector<4x4x64xf32> to vector<16x64xf32>
    %c1_135 = arith.constant 1 : index
    %c1_136 = arith.constant 1 : index
    %c0_137 = arith.constant 0 : index
    %c0_138 = arith.constant 0 : index
    %108 = vector.load %arg6[%c1_135, %c1_136, %c0_137, %c0_138] : memref<3x3x64x128xf32, #tpu.memory_space<vmem>>, vector<1x1x64x128xf32>
    %109 = vector.shape_cast %108 : vector<1x1x64x128xf32> to vector<64x128xf32>
    %cst_139 = arith.constant dense<0.000000e+00> : vector<16x128xf32>
    %110 = tpu.matmul %107, %109, %cst_139 {dimension_numbers = #tpu.dot_dimension_numbers<[1], [0], [0], [1], [0, 0, 1, 1], [], []>} : vector<16x64xf32>, vector<64x128xf32>, vector<16x128xf32> -> vector<16x128xf32>
    %111 = arith.addf %105, %110 : vector<16x128xf32>
    %c1_140 = arith.constant 1 : index
    %c2_141 = arith.constant 2 : index
    %c0_142 = arith.constant 0 : index
    %112 = vector.load %arg14[%c1_140, %c2_141, %c0_142] : memref<6x6x64xf32, #tpu.memory_space<vmem>>, vector<4x4x64xf32>
    %113 = vector.shape_cast %112 : vector<4x4x64xf32> to vector<16x64xf32>
    %c1_143 = arith.constant 1 : index
    %c2_144 = arith.constant 2 : index
    %c0_145 = arith.constant 0 : index
    %c0_146 = arith.constant 0 : index
    %114 = vector.load %arg6[%c1_143, %c2_144, %c0_145, %c0_146] : memref<3x3x64x128xf32, #tpu.memory_space<vmem>>, vector<1x1x64x128xf32>
    %115 = vector.shape_cast %114 : vector<1x1x64x128xf32> to vector<64x128xf32>
    %cst_147 = arith.constant dense<0.000000e+00> : vector<16x128xf32>
    %116 = tpu.matmul %113, %115, %cst_147 {dimension_numbers = #tpu.dot_dimension_numbers<[1], [0], [0], [1], [0, 0, 1, 1], [], []>} : vector<16x64xf32>, vector<64x128xf32>, vector<16x128xf32> -> vector<16x128xf32>
    %117 = arith.addf %111, %116 : vector<16x128xf32>
    %c2_148 = arith.constant 2 : index
    %c0_149 = arith.constant 0 : index
    %c0_150 = arith.constant 0 : index
    %118 = vector.load %arg14[%c2_148, %c0_149, %c0_150] : memref<6x6x64xf32, #tpu.memory_space<vmem>>, vector<4x4x64xf32>
    %119 = vector.shape_cast %118 : vector<4x4x64xf32> to vector<16x64xf32>
    %c2_151 = arith.constant 2 : index
    %c0_152 = arith.constant 0 : index
    %c0_153 = arith.constant 0 : index
    %c0_154 = arith.constant 0 : index
    %120 = vector.load %arg6[%c2_151, %c0_152, %c0_153, %c0_154] : memref<3x3x64x128xf32, #tpu.memory_space<vmem>>, vector<1x1x64x128xf32>
    %121 = vector.shape_cast %120 : vector<1x1x64x128xf32> to vector<64x128xf32>
    %cst_155 = arith.constant dense<0.000000e+00> : vector<16x128xf32>
    %122 = tpu.matmul %119, %121, %cst_155 {dimension_numbers = #tpu.dot_dimension_numbers<[1], [0], [0], [1], [0, 0, 1, 1], [], []>} : vector<16x64xf32>, vector<64x128xf32>, vector<16x128xf32> -> vector<16x128xf32>
    %123 = arith.addf %117, %122 : vector<16x128xf32>
    %c2_156 = arith.constant 2 : index
    %c1_157 = arith.constant 1 : index
    %c0_158 = arith.constant 0 : index
    %124 = vector.load %arg14[%c2_156, %c1_157, %c0_158] : memref<6x6x64xf32, #tpu.memory_space<vmem>>, vector<4x4x64xf32>
    %125 = vector.shape_cast %124 : vector<4x4x64xf32> to vector<16x64xf32>
    %c2_159 = arith.constant 2 : index
    %c1_160 = arith.constant 1 : index
    %c0_161 = arith.constant 0 : index
    %c0_162 = arith.constant 0 : index
    %126 = vector.load %arg6[%c2_159, %c1_160, %c0_161, %c0_162] : memref<3x3x64x128xf32, #tpu.memory_space<vmem>>, vector<1x1x64x128xf32>
    %127 = vector.shape_cast %126 : vector<1x1x64x128xf32> to vector<64x128xf32>
    %cst_163 = arith.constant dense<0.000000e+00> : vector<16x128xf32>
    %128 = tpu.matmul %125, %127, %cst_163 {dimension_numbers = #tpu.dot_dimension_numbers<[1], [0], [0], [1], [0, 0, 1, 1], [], []>} : vector<16x64xf32>, vector<64x128xf32>, vector<16x128xf32> -> vector<16x128xf32>
    %129 = arith.addf %123, %128 : vector<16x128xf32>
    %c2_164 = arith.constant 2 : index
    %c2_165 = arith.constant 2 : index
    %c0_166 = arith.constant 0 : index
    %130 = vector.load %arg14[%c2_164, %c2_165, %c0_166] : memref<6x6x64xf32, #tpu.memory_space<vmem>>, vector<4x4x64xf32>
    %131 = vector.shape_cast %130 : vector<4x4x64xf32> to vector<16x64xf32>
    %c2_167 = arith.constant 2 : index
    %c2_168 = arith.constant 2 : index
    %c0_169 = arith.constant 0 : index
    %c0_170 = arith.constant 0 : index
    %132 = vector.load %arg6[%c2_167, %c2_168, %c0_169, %c0_170] : memref<3x3x64x128xf32, #tpu.memory_space<vmem>>, vector<1x1x64x128xf32>
    %133 = vector.shape_cast %132 : vector<1x1x64x128xf32> to vector<64x128xf32>
    %cst_171 = arith.constant dense<0.000000e+00> : vector<16x128xf32>
    %134 = tpu.matmul %131, %133, %cst_171 {dimension_numbers = #tpu.dot_dimension_numbers<[1], [0], [0], [1], [0, 0, 1, 1], [], []>} : vector<16x64xf32>, vector<64x128xf32>, vector<16x128xf32> -> vector<16x128xf32>
    %135 = arith.addf %129, %134 : vector<16x128xf32>
    %c0_172 = arith.constant 0 : index
    %c0_173 = arith.constant 0 : index
    %136 = vector.load %arg7[%c0_172, %c0_173] : memref<1x128xf32, #tpu.memory_space<vmem>>, vector<1x128xf32>
    %137 = vector.broadcast %136 : vector<1x128xf32> to vector<16x128xf32>
    %138 = arith.addf %135, %137 : vector<16x128xf32>
    %cst_174 = arith.constant 0.000000e+00 : f32
    %139 = vector.broadcast %cst_174 : f32 to vector<16x128xf32>
    %140 = arith.maximumf %138, %139 : vector<16x128xf32>
    %141 = vector.shape_cast %140 : vector<16x128xf32> to vector<2x2x2x2x128xf32>
    %cst_175 = arith.constant dense<0xFF800000> : vector<2x2x2x128xf32>
    %142 = vector.multi_reduction <maximumf>, %141, %cst_175 [3] : vector<2x2x2x2x128xf32> to vector<2x2x2x128xf32>
    %cst_176 = arith.constant dense<0xFF800000> : vector<2x2x128xf32>
    %143 = vector.multi_reduction <maximumf>, %142, %cst_176 [1] : vector<2x2x2x128xf32> to vector<2x2x128xf32>
    %144 = vector.shape_cast %143 : vector<2x2x128xf32> to vector<4x128xf32>
    %c0_177 = arith.constant 0 : index
    %c0_178 = arith.constant 0 : index
    %145 = vector.load %arg9[%c0_177, %c0_178] : memref<1x512xf32, #tpu.memory_space<vmem>>, vector<1x512xf32>
    %146 = vector.extract_strided_slice %144 {offsets = [0, 0], sizes = [1, 128], strides = [1, 1]} : vector<4x128xf32> to vector<1x128xf32>
    %c0_179 = arith.constant 0 : index
    %c0_180 = arith.constant 0 : index
    %c0_181 = arith.constant 0 : index
    %147 = vector.load %arg8[%c0_179, %c0_180, %c0_181] : memref<4x128x512xf32, #tpu.memory_space<vmem>>, vector<1x128x512xf32>
    %148 = vector.shape_cast %147 : vector<1x128x512xf32> to vector<128x512xf32>
    %cst_182 = arith.constant dense<0.000000e+00> : vector<1x512xf32>
    %149 = tpu.matmul %146, %148, %cst_182 {dimension_numbers = #tpu.dot_dimension_numbers<[1], [0], [0], [1], [0, 0, 1, 1], [], []>} : vector<1x128xf32>, vector<128x512xf32>, vector<1x512xf32> -> vector<1x512xf32>
    %150 = arith.addf %145, %149 : vector<1x512xf32>
    %151 = vector.extract_strided_slice %144 {offsets = [1, 0], sizes = [1, 128], strides = [1, 1]} : vector<4x128xf32> to vector<1x128xf32>
    %c1_183 = arith.constant 1 : index
    %c0_184 = arith.constant 0 : index
    %c0_185 = arith.constant 0 : index
    %152 = vector.load %arg8[%c1_183, %c0_184, %c0_185] : memref<4x128x512xf32, #tpu.memory_space<vmem>>, vector<1x128x512xf32>
    %153 = vector.shape_cast %152 : vector<1x128x512xf32> to vector<128x512xf32>
    %cst_186 = arith.constant dense<0.000000e+00> : vector<1x512xf32>
    %154 = tpu.matmul %151, %153, %cst_186 {dimension_numbers = #tpu.dot_dimension_numbers<[1], [0], [0], [1], [0, 0, 1, 1], [], []>} : vector<1x128xf32>, vector<128x512xf32>, vector<1x512xf32> -> vector<1x512xf32>
    %155 = arith.addf %150, %154 : vector<1x512xf32>
    %156 = vector.extract_strided_slice %144 {offsets = [2, 0], sizes = [1, 128], strides = [1, 1]} : vector<4x128xf32> to vector<1x128xf32>
    %c2_187 = arith.constant 2 : index
    %c0_188 = arith.constant 0 : index
    %c0_189 = arith.constant 0 : index
    %157 = vector.load %arg8[%c2_187, %c0_188, %c0_189] : memref<4x128x512xf32, #tpu.memory_space<vmem>>, vector<1x128x512xf32>
    %158 = vector.shape_cast %157 : vector<1x128x512xf32> to vector<128x512xf32>
    %cst_190 = arith.constant dense<0.000000e+00> : vector<1x512xf32>
    %159 = tpu.matmul %156, %158, %cst_190 {dimension_numbers = #tpu.dot_dimension_numbers<[1], [0], [0], [1], [0, 0, 1, 1], [], []>} : vector<1x128xf32>, vector<128x512xf32>, vector<1x512xf32> -> vector<1x512xf32>
    %160 = arith.addf %155, %159 : vector<1x512xf32>
    %161 = vector.extract_strided_slice %144 {offsets = [3, 0], sizes = [1, 128], strides = [1, 1]} : vector<4x128xf32> to vector<1x128xf32>
    %c3 = arith.constant 3 : index
    %c0_191 = arith.constant 0 : index
    %c0_192 = arith.constant 0 : index
    %162 = vector.load %arg8[%c3, %c0_191, %c0_192] : memref<4x128x512xf32, #tpu.memory_space<vmem>>, vector<1x128x512xf32>
    %163 = vector.shape_cast %162 : vector<1x128x512xf32> to vector<128x512xf32>
    %cst_193 = arith.constant dense<0.000000e+00> : vector<1x512xf32>
    %164 = tpu.matmul %161, %163, %cst_193 {dimension_numbers = #tpu.dot_dimension_numbers<[1], [0], [0], [1], [0, 0, 1, 1], [], []>} : vector<1x128xf32>, vector<128x512xf32>, vector<1x512xf32> -> vector<1x512xf32>
    %165 = arith.addf %160, %164 : vector<1x512xf32>
    %cst_194 = arith.constant 0.000000e+00 : f32
    %166 = vector.broadcast %cst_194 : f32 to vector<1x512xf32>
    %167 = arith.maximumf %165, %166 : vector<1x512xf32>
    %c0_195 = arith.constant 0 : index
    %c0_196 = arith.constant 0 : index
    %168 = vector.load %arg10[%c0_195, %c0_196] : memref<512x128xf32, #tpu.memory_space<vmem>>, vector<512x128xf32>
    %cst_197 = arith.constant dense<0.000000e+00> : vector<1x128xf32>
    %169 = tpu.matmul %167, %168, %cst_197 {dimension_numbers = #tpu.dot_dimension_numbers<[1], [0], [0], [1], [0, 0, 1, 1], [], []>} : vector<1x512xf32>, vector<512x128xf32>, vector<1x128xf32> -> vector<1x128xf32>
    %c0_198 = arith.constant 0 : index
    %c0_199 = arith.constant 0 : index
    %170 = vector.load %arg11[%c0_198, %c0_199] : memref<1x128xf32, #tpu.memory_space<vmem>>, vector<1x128xf32>
    %171 = arith.addf %169, %170 : vector<1x128xf32>
    %c0_200 = arith.constant 0 : index
    %c0_201 = arith.constant 0 : index
    %c0_202 = arith.constant 0 : index
    %172 = vector.load %arg12[%c0_200, %c0_201, %c0_202] : memref<1x1x128xf32, #tpu.memory_space<vmem>>, vector<1x1x128xf32>
    %173 = vector.shape_cast %172 : vector<1x1x128xf32> to vector<1x128xf32>
    %174 = vector.shape_cast %171 : vector<1x128xf32> to vector<1x1x128xf32>
    tpu.vector_store %arg12[%c0_200, %c0_201, %c0_202], %174 {strides = array<i32>} : memref<1x1x128xf32, #tpu.memory_space<vmem>>, vector<1x1x128xf32>,
    return
  }
  func.func @transform_0(%arg0: i32) -> (i32, i32, i32) {
    %c0_i32 = arith.constant 0 : i32
    %c0_i32_0 = arith.constant 0 : i32
    %c0_i32_1 = arith.constant 0 : i32
    return %arg0, %c0_i32, %c0_i32_0 : i32, i32, i32
  }
  func.func @transform_1(%arg0: i32) -> (i32, i32) {
    %c0_i32 = arith.constant 0 : i32
    %c0_i32_0 = arith.constant 0 : i32
    %c0_i32_1 = arith.constant 0 : i32
    return %c0_i32, %c0_i32_0 : i32, i32
  }
  func.func @transform_2(%arg0: i32) -> (i32, i32) {
    %c0_i32 = arith.constant 0 : i32
    %c0_i32_0 = arith.constant 0 : i32
    %c0_i32_1 = arith.constant 0 : i32
    return %c0_i32, %c0_i32_0 : i32, i32
  }
  func.func @transform_3(%arg0: i32) -> (i32, i32, i32, i32) {
    %c0_i32 = arith.constant 0 : i32
    %c0_i32_0 = arith.constant 0 : i32
    %c0_i32_1 = arith.constant 0 : i32
    %c0_i32_2 = arith.constant 0 : i32
    %c0_i32_3 = arith.constant 0 : i32
    return %c0_i32, %c0_i32_0, %c0_i32_1, %c0_i32_2 : i32, i32, i32, i32
  }
  func.func @transform_4(%arg0: i32) -> (i32, i32) {
    %c0_i32 = arith.constant 0 : i32
    %c0_i32_0 = arith.constant 0 : i32
    %c0_i32_1 = arith.constant 0 : i32
    return %c0_i32, %c0_i32_0 : i32, i32
  }
  func.func @transform_5(%arg0: i32) -> (i32, i32, i32, i32) {
    %c0_i32 = arith.constant 0 : i32
    %c0_i32_0 = arith.constant 0 : i32
    %c0_i32_1 = arith.constant 0 : i32
    %c0_i32_2 = arith.constant 0 : i32
    %c0_i32_3 = arith.constant 0 : i32
    return %c0_i32, %c0_i32_0, %c0_i32_1, %c0_i32_2 : i32, i32, i32, i32
  }
  func.func @transform_6(%arg0: i32) -> (i32, i32) {
    %c0_i32 = arith.constant 0 : i32
    %c0_i32_0 = arith.constant 0 : i32
    %c0_i32_1 = arith.constant 0 : i32
    return %c0_i32, %c0_i32_0 : i32, i32
  }
  func.func @transform_7(%arg0: i32) -> (i32, i32, i32) {
    %c0_i32 = arith.constant 0 : i32
    %c0_i32_0 = arith.constant 0 : i32
    %c0_i32_1 = arith.constant 0 : i32
    %c0_i32_2 = arith.constant 0 : i32
    return %c0_i32, %c0_i32_0, %c0_i32_1 : i32, i32, i32
  }
  func.func @transform_8(%arg0: i32) -> (i32, i32) {
    %c0_i32 = arith.constant 0 : i32
    %c0_i32_0 = arith.constant 0 : i32
    %c0_i32_1 = arith.constant 0 : i32
    return %c0_i32, %c0_i32_0 : i32, i32
  }
  func.func @transform_9(%arg0: i32) -> (i32, i32) {
    %c0_i32 = arith.constant 0 : i32
    %c0_i32_0 = arith.constant 0 : i32
    %c0_i32_1 = arith.constant 0 : i32
    return %c0_i32, %c0_i32_0 : i32, i32
  }
  func.func @transform_10(%arg0: i32) -> (i32, i32) {
    %c0_i32 = arith.constant 0 : i32
    %c0_i32_0 = arith.constant 0 : i32
    %c0_i32_1 = arith.constant 0 : i32
    return %c0_i32, %c0_i32_0 : i32, i32
  }
  func.func @transform_11(%arg0: i32) -> (i32, i32, i32) {
    %c0_i32 = arith.constant 0 : i32
    %c0_i32_0 = arith.constant 0 : i32
    %c0_i32_1 = arith.constant 0 : i32
    return %arg0, %c0_i32, %c0_i32_0 : i32, i32, i32
  }
}

</mosaic_0001>

<llo_original>
// kernel: cnn_model1_forward.1
$region0: #{cnn_model1_forward.1}
  #allocation0 [shape = 'u32[]', space=smem, size = 0x4, offset = 0x4, fixed_abs, tag = 'smem constant byte address 0x4 - core index']
  #allocation1 [shape = 'u32[72,128]{1,0:T(1,128)}', space=vmem, size = 0x9000, scoped, tag = 'internal scratch']
  #allocation2 [shape = 'f32[10,10,32]{2,1,0:T(8,128)}', space=vmem, size = 0x14000, scoped, tag = 'scratch operand']
  #allocation3 [shape = 'f32[6,6,64]{2,1,0:T(8,128)}', space=vmem, size = 0x6000, scoped, tag = 'scratch operand']
  %s0 = inlined_call_operand.vmem [shape: f32[2,256,27], index: 0, kind: input, shape index: {}]
  %s1 = inlined_call_operand.vmem [shape: f32[27,32], index: 1, kind: input, shape index: {}]
  %s2 = inlined_call_operand.vmem [shape: f32[1,32], index: 2, kind: input, shape index: {}]
  %s3 = inlined_call_operand.vmem [shape: f32[3,3,32,64], index: 3, kind: input, shape index: {}]
  %s4 = inlined_call_operand.vmem [shape: f32[1,64], index: 4, kind: input, shape index: {}]
  %s5 = inlined_call_operand.vmem [shape: f32[3,3,64,128], index: 5, kind: input, shape index: {}]
  %s6 = inlined_call_operand.vmem [shape: f32[1,128], index: 6, kind: input, shape index: {}]
  %s7 = inlined_call_operand.vmem [shape: f32[4,128,512], index: 7, kind: input, shape index: {}]
  %s8 = inlined_call_operand.vmem [shape: f32[1,512], index: 8, kind: input, shape index: {}]
  %s9 = inlined_call_operand.vmem [shape: f32[512,128], index: 9, kind: input, shape index: {}]
  %s10 = inlined_call_operand.vmem [shape: f32[1,128], index: 10, kind: input, shape index: {}]
  %s11 = inlined_call_operand.vmem [shape: f32[2,1,128], index: 11, kind: output, shape index: {}]
  %s12 = sld [smem:[#allocation0]]
  $region77: #{cnn_model1_forward.1} parent=0
    _
  %s14 = ssub.s32 1, %s12
  %s15 = scalar_select 0, %s14, %s12
  loop: start=0, step=1, limit=4
  $region2: #{cnn_model1_forward.1} parent=0 // loop_pre_header
    _
  $region3: #{cnn_model1_forward.1} parent=0 // loop_header
    %s17 = sphi 0, %s21
    %p18 = scmp.ge.s32.totalorder %s17, 4
    %s27 = sphi 0, %s29
    %s30 = sphi 0, %s27
    %s31 = sphi 0, %s30
    %s47 = sphi 0, %s31
    %s51 = sphi 0, %s51
    %s53 = sphi 0, %s51
    %s54 = sphi 0, %s53
    %s68 = sphi 0, %s54
    %s72 = sphi 0, %s72
    %s74 = sphi 0, %s72
    %s75 = sphi 0, %s74
    %s89 = sphi 0, %s75
    %s93 = sphi 0, %s93
    %s95 = sphi 0, %s93
    %s96 = sphi 0, %s95
    %s110 = sphi 0, %s96
    %s114 = sphi 0, %s114
    %s116 = sphi 0, %s114
    %s117 = sphi 0, %s116
    %s131 = sphi 0, %s117
    %s135 = sphi 0, %s135
    %s137 = sphi 0, %s135
    %s138 = sphi 0, %s137
    %s152 = sphi 0, %s138
    %s156 = sphi 0, %s156
    %s158 = sphi 0, %s156
    %s159 = sphi 0, %s158
    %s173 = sphi 0, %s159
    %s177 = sphi 0, %s177
    %s179 = sphi 0, %s177
    %s180 = sphi 0, %s179
    %s194 = sphi 0, %s180
    %s198 = sphi 0, %s198
    %s200 = sphi 0, %s198
    %s201 = sphi 0, %s200
    %s215 = sphi 0, %s201
    %s219 = sphi 0, %s219
    %s221 = sphi 0, %s219
    %s222 = sphi 0, %s221
    %s236 = sphi 0, %s222
    %s240 = sphi 0, %s240
    %s242 = sphi 0, %s240
    %s243 = sphi 0, %s242
    %s257 = sphi 0, %s243
    %s263 = sphi 0, %s265
    %s266 = sphi 0, %s263
    %s267 = sphi 0, %s266
    %s283 = sphi 0, %s267
  $region4: #{cnn_model1_forward.1} parent=0 // loop_header_branch
    %20 = sbr.rel (%p18) target = $region8
  $region5: #{cnn_model1_forward.1} parent=0 // loop_body
    %s22 = ssub.s32 %s17, 1
    %s23 = ssub.s32 %s17, 2
    %s24 = sadd.s32 %s17, 1
    %s25 = ssub.s32 %s17, %s24
    %p26 = scmp.eq.s32.totalorder %s25, 0
    %s28 = sadd.s32 %s27, 1
    %s29 = scalar_select %p26, %s27, %s28
    %p32 = pneg %p26
    %p33 = scmp.eq.s32.totalorder %s17, 1
    %p34 = por %p32, %p33
    %p35 = scmp.ne.s32.totalorder %s27, %s30
    %p36 = scmp.eq.s32.totalorder %s17, 0
    %p37 = por %p35, %p36
    %p38 = scmp.ne.s32.totalorder %s27, %s30
    %p39 = scmp.eq.s32.totalorder %s22, 1
    %p40 = por %p38, %p39
    %p41 = scmp.ne.s32.totalorder %s30, %s31
    %p42 = scmp.eq.s32.totalorder %s22, 0
    %p43 = por %p41, %p42
    %p44 = scmp.ne.s32.totalorder %s30, %s31
    %p45 = scmp.eq.s32.totalorder %s23, 1
    %p46 = por %p44, %p45
    %p48 = scmp.ne.s32.totalorder %s31, %s47
    %p49 = scmp.eq.s32.totalorder %s23, 0
    %p50 = por %p48, %p49
    %s52 = sadd.s32 %s51, 1
    %p55 = scmp.eq.s32.totalorder %s17, 1
    %p56 = scmp.ne.s32.totalorder %s51, %s53
    %p57 = scmp.eq.s32.totalorder %s17, 0
    %p58 = por %p56, %p57
    %p59 = scmp.ne.s32.totalorder %s51, %s53
    %p60 = scmp.eq.s32.totalorder %s22, 1
    %p61 = por %p59, %p60
    %p62 = scmp.ne.s32.totalorder %s53, %s54
    %p63 = scmp.eq.s32.totalorder %s22, 0
    %p64 = por %p62, %p63
    %p65 = scmp.ne.s32.totalorder %s53, %s54
    %p66 = scmp.eq.s32.totalorder %s23, 1
    %p67 = por %p65, %p66
    %p69 = scmp.ne.s32.totalorder %s54, %s68
    %p70 = scmp.eq.s32.totalorder %s23, 0
    %p71 = por %p69, %p70
    %s73 = sadd.s32 %s72, 1
    %p76 = scmp.eq.s32.totalorder %s17, 1
    %p77 = scmp.ne.s32.totalorder %s72, %s74
    %p78 = scmp.eq.s32.totalorder %s17, 0
    %p79 = por %p77, %p78
    %p80 = scmp.ne.s32.totalorder %s72, %s74
    %p81 = scmp.eq.s32.totalorder %s22, 1
    %p82 = por %p80, %p81
    %p83 = scmp.ne.s32.totalorder %s74, %s75
    %p84 = scmp.eq.s32.totalorder %s22, 0
    %p85 = por %p83, %p84
    %p86 = scmp.ne.s32.totalorder %s74, %s75
    %p87 = scmp.eq.s32.totalorder %s23, 1
    %p88 = por %p86, %p87
    %p90 = scmp.ne.s32.totalorder %s75, %s89
    %p91 = scmp.eq.s32.totalorder %s23, 0
    %p92 = por %p90, %p91
    %s94 = sadd.s32 %s93, 1
    %p97 = scmp.eq.s32.totalorder %s17, 1
    %p98 = scmp.ne.s32.totalorder %s93, %s95
    %p99 = scmp.eq.s32.totalorder %s17, 0
    %p100 = por %p98, %p99
    %p101 = scmp.ne.s32.totalorder %s93, %s95
    %p102 = scmp.eq.s32.totalorder %s22, 1
    %p103 = por %p101, %p102
    %p104 = scmp.ne.s32.totalorder %s95, %s96
    %p105 = scmp.eq.s32.totalorder %s22, 0
    %p106 = por %p104, %p105
    %p107 = scmp.ne.s32.totalorder %s95, %s96
    %p108 = scmp.eq.s32.totalorder %s23, 1
    %p109 = por %p107, %p108
    %p111 = scmp.ne.s32.totalorder %s96, %s110
    %p112 = scmp.eq.s32.totalorder %s23, 0
    %p113 = por %p111, %p112
    %s115 = sadd.s32 %s114, 1
    %p118 = scmp.eq.s32.totalorder %s17, 1
    %p119 = scmp.ne.s32.totalorder %s114, %s116
    %p120 = scmp.eq.s32.totalorder %s17, 0
    %p121 = por %p119, %p120
    %p122 = scmp.ne.s32.totalorder %s114, %s116
    %p123 = scmp.eq.s32.totalorder %s22, 1
    %p124 = por %p122, %p123
    %p125 = scmp.ne.s32.totalorder %s116, %s117
    %p126 = scmp.eq.s32.totalorder %s22, 0
    %p127 = por %p125, %p126
    %p128 = scmp.ne.s32.totalorder %s116, %s117
    %p129 = scmp.eq.s32.totalorder %s23, 1
    %p130 = por %p128, %p129
    %p132 = scmp.ne.s32.totalorder %s117, %s131
    %p133 = scmp.eq.s32.totalorder %s23, 0
    %p134 = por %p132, %p133
    %s136 = sadd.s32 %s135, 1
    %p139 = scmp.eq.s32.totalorder %s17, 1
    %p140 = scmp.ne.s32.totalorder %s135, %s137
    %p141 = scmp.eq.s32.totalorder %s17, 0
    %p142 = por %p140, %p141
    %p143 = scmp.ne.s32.totalorder %s135, %s137
    %p144 = scmp.eq.s32.totalorder %s22, 1
    %p145 = por %p143, %p144
    %p146 = scmp.ne.s32.totalorder %s137, %s138
    %p147 = scmp.eq.s32.totalorder %s22, 0
    %p148 = por %p146, %p147
    %p149 = scmp.ne.s32.totalorder %s137, %s138
    %p150 = scmp.eq.s32.totalorder %s23, 1
    %p151 = por %p149, %p150
    %p153 = scmp.ne.s32.totalorder %s138, %s152
    %p154 = scmp.eq.s32.totalorder %s23, 0
    %p155 = por %p153, %p154
    %s157 = sadd.s32 %s156, 1
    %p160 = scmp.eq.s32.totalorder %s17, 1
    %p161 = scmp.ne.s32.totalorder %s156, %s158
    %p162 = scmp.eq.s32.totalorder %s17, 0
    %p163 = por %p161, %p162
    %p164 = scmp.ne.s32.totalorder %s156, %s158
    %p165 = scmp.eq.s32.totalorder %s22, 1
    %p166 = por %p164, %p165
    %p167 = scmp.ne.s32.totalorder %s158, %s159
    %p168 = scmp.eq.s32.totalorder %s22, 0
    %p169 = por %p167, %p168
    %p170 = scmp.ne.s32.totalorder %s158, %s159
    %p171 = scmp.eq.s32.totalorder %s23, 1
    %p172 = por %p170, %p171
    %p174 = scmp.ne.s32.totalorder %s159, %s173
    %p175 = scmp.eq.s32.totalorder %s23, 0
    %p176 = por %p174, %p175
    %s178 = sadd.s32 %s177, 1
    %p181 = scmp.eq.s32.totalorder %s17, 1
    %p182 = scmp.ne.s32.totalorder %s177, %s179
    %p183 = scmp.eq.s32.totalorder %s17, 0
    %p184 = por %p182, %p183
    %p185 = scmp.ne.s32.totalorder %s177, %s179
    %p186 = scmp.eq.s32.totalorder %s22, 1
    %p187 = por %p185, %p186
    %p188 = scmp.ne.s32.totalorder %s179, %s180
    %p189 = scmp.eq.s32.totalorder %s22, 0
    %p190 = por %p188, %p189
    %p191 = scmp.ne.s32.totalorder %s179, %s180
    %p192 = scmp.eq.s32.totalorder %s23, 1
    %p193 = por %p191, %p192
    %p195 = scmp.ne.s32.totalorder %s180, %s194
    %p196 = scmp.eq.s32.totalorder %s23, 0
    %p197 = por %p195, %p196
    %s199 = sadd.s32 %s198, 1
    %p202 = scmp.eq.s32.totalorder %s17, 1
    %p203 = scmp.ne.s32.totalorder %s198, %s200
    %p204 = scmp.eq.s32.totalorder %s17, 0
    %p205 = por %p203, %p204
    %p206 = scmp.ne.s32.totalorder %s198, %s200
    %p207 = scmp.eq.s32.totalorder %s22, 1
    %p208 = por %p206, %p207
    %p209 = scmp.ne.s32.totalorder %s200, %s201
    %p210 = scmp.eq.s32.totalorder %s22, 0
    %p211 = por %p209, %p210
    %p212 = scmp.ne.s32.totalorder %s200, %s201
    %p213 = scmp.eq.s32.totalorder %s23, 1
    %p214 = por %p212, %p213
    %p216 = scmp.ne.s32.totalorder %s201, %s215
    %p217 = scmp.eq.s32.totalorder %s23, 0
    %p218 = por %p216, %p217
    %s220 = sadd.s32 %s219, 1
    %p223 = scmp.eq.s32.totalorder %s17, 1
    %p224 = scmp.ne.s32.totalorder %s219, %s221
    %p225 = scmp.eq.s32.totalorder %s17, 0
    %p226 = por %p224, %p225
    %p227 = scmp.ne.s32.totalorder %s219, %s221
    %p228 = scmp.eq.s32.totalorder %s22, 1
    %p229 = por %p227, %p228
    %p230 = scmp.ne.s32.totalorder %s221, %s222
    %p231 = scmp.eq.s32.totalorder %s22, 0
    %p232 = por %p230, %p231
    %p233 = scmp.ne.s32.totalorder %s221, %s222
    %p234 = scmp.eq.s32.totalorder %s23, 1
    %p235 = por %p233, %p234
    %p237 = scmp.ne.s32.totalorder %s222, %s236
    %p238 = scmp.eq.s32.totalorder %s23, 0
    %p239 = por %p237, %p238
    %s241 = sadd.s32 %s240, 1
    %p244 = scmp.eq.s32.totalorder %s17, 1
    %p245 = scmp.ne.s32.totalorder %s240, %s242
    %p246 = scmp.eq.s32.totalorder %s17, 0
    %p247 = por %p245, %p246
    %p248 = scmp.ne.s32.totalorder %s240, %s242
    %p249 = scmp.eq.s32.totalorder %s22, 1
    %p250 = por %p248, %p249
    %p251 = scmp.ne.s32.totalorder %s242, %s243
    %p252 = scmp.eq.s32.totalorder %s22, 0
    %p253 = por %p251, %p252
    %p254 = scmp.ne.s32.totalorder %s242, %s243
    %p255 = scmp.eq.s32.totalorder %s23, 1
    %p256 = por %p254, %p255
    %p258 = scmp.ne.s32.totalorder %s243, %s257
    %p259 = scmp.eq.s32.totalorder %s23, 0
    %p260 = por %p258, %p259
    %s261 = ssub.s32 %s17, %s24
    %p262 = scmp.eq.s32.totalorder %s261, 0
    %s264 = sadd.s32 %s263, 1
    %s265 = scalar_select %p262, %s263, %s264
    %p268 = pneg %p262
    %p269 = scmp.eq.s32.totalorder %s17, 1
    %p270 = por %p268, %p269
    %p271 = scmp.ne.s32.totalorder %s263, %s266
    %p272 = scmp.eq.s32.totalorder %s17, 0
    %p273 = por %p271, %p272
    %p274 = scmp.ne.s32.totalorder %s263, %s266
    %p275 = scmp.eq.s32.totalorder %s22, 1
    %p276 = por %p274, %p275
    %p277 = scmp.ne.s32.totalorder %s266, %s267
    %p278 = scmp.eq.s32.totalorder %s22, 0
    %p279 = por %p277, %p278
    %p280 = scmp.ne.s32.totalorder %s266, %s267
    %p281 = scmp.eq.s32.totalorder %s23, 1
    %p282 = por %p280, %p281
    %p284 = scmp.ne.s32.totalorder %s267, %s283
    %p285 = scmp.eq.s32.totalorder %s23, 0
    %p286 = por %p284, %p285
    %p287 = scmp.le.s32.totalorder 1, %s17
    %p288 = scmp.lt.s32.totalorder %s17, 3
    %p289 = pnand %p287, %p288
    %p290 = pneg %p289
    // Predicated region
    $region9: #{cnn_model1_forward.1} parent=5 // pred_check
      _
    $region10: #{cnn_model1_forward.1} parent=5 // pred_check_branch
      %292 = sbr.rel (%p289) target = $region12
    $region11: #{cnn_model1_forward.1} parent=5 // pred_region
      %s293 = ssub.s32 %s17, 1
      // Predicated region
      $region13: #{cnn_model1_forward.1} parent=11 // pred_check
        %p294 = pneg %p64
      $region14: #{cnn_model1_forward.1} parent=11 // pred_check_branch
        %296 = sbr.rel (%p294) target = $region16
      $region15: #{cnn_model1_forward.1} parent=11 // pred_region
        _
      $region16: #{cnn_model1_forward.1} parent=11 // pred_fallthru
        _
      // Predicated region
      $region17: #{cnn_model1_forward.1} parent=11 // pred_check
        %p297 = pneg %p85
      $region18: #{cnn_model1_forward.1} parent=11 // pred_check_branch
        %299 = sbr.rel (%p297) target = $region20
      $region19: #{cnn_model1_forward.1} parent=11 // pred_region
        _
      $region20: #{cnn_model1_forward.1} parent=11 // pred_fallthru
        _
      // Predicated region
      $region21: #{cnn_model1_forward.1} parent=11 // pred_check
        %p300 = pneg %p106
      $region22: #{cnn_model1_forward.1} parent=11 // pred_check_branch
        %302 = sbr.rel (%p300) target = $region24
      $region23: #{cnn_model1_forward.1} parent=11 // pred_region
        _
      $region24: #{cnn_model1_forward.1} parent=11 // pred_fallthru
        _
      // Predicated region
      $region25: #{cnn_model1_forward.1} parent=11 // pred_check
        %p303 = pneg %p127
      $region26: #{cnn_model1_forward.1} parent=11 // pred_check_branch
        %305 = sbr.rel (%p303) target = $region28
      $region27: #{cnn_model1_forward.1} parent=11 // pred_region
        _
      $region28: #{cnn_model1_forward.1} parent=11 // pred_fallthru
        _
      // Predicated region
      $region29: #{cnn_model1_forward.1} parent=11 // pred_check
        %p306 = pneg %p148
      $region30: #{cnn_model1_forward.1} parent=11 // pred_check_branch
        %308 = sbr.rel (%p306) target = $region32
      $region31: #{cnn_model1_forward.1} parent=11 // pred_region
        _
      $region32: #{cnn_model1_forward.1} parent=11 // pred_fallthru
        _
      // Predicated region
      $region33: #{cnn_model1_forward.1} parent=11 // pred_check
        %p309 = pneg %p169
      $region34: #{cnn_model1_forward.1} parent=11 // pred_check_branch
        %311 = sbr.rel (%p309) target = $region36
      $region35: #{cnn_model1_forward.1} parent=11 // pred_region
        _
      $region36: #{cnn_model1_forward.1} parent=11 // pred_fallthru
        _
      // Predicated region
      $region37: #{cnn_model1_forward.1} parent=11 // pred_check
        %p312 = pneg %p190
      $region38: #{cnn_model1_forward.1} parent=11 // pred_check_branch
        %314 = sbr.rel (%p312) target = $region40
      $region39: #{cnn_model1_forward.1} parent=11 // pred_region
        _
      $region40: #{cnn_model1_forward.1} parent=11 // pred_fallthru
        _
      // Predicated region
      $region41: #{cnn_model1_forward.1} parent=11 // pred_check
        %p315 = pneg %p211
      $region42: #{cnn_model1_forward.1} parent=11 // pred_check_branch
        %317 = sbr.rel (%p315) target = $region44
      $region43: #{cnn_model1_forward.1} parent=11 // pred_region
        _
      $region44: #{cnn_model1_forward.1} parent=11 // pred_fallthru
        _
      // Predicated region
      $region45: #{cnn_model1_forward.1} parent=11 // pred_check
        %p318 = pneg %p232
      $region46: #{cnn_model1_forward.1} parent=11 // pred_check_branch
        %320 = sbr.rel (%p318) target = $region48
      $region47: #{cnn_model1_forward.1} parent=11 // pred_region
        _
      $region48: #{cnn_model1_forward.1} parent=11 // pred_fallthru
        _
      // Predicated region
      $region49: #{cnn_model1_forward.1} parent=11 // pred_check
        %p321 = pneg %p253
      $region50: #{cnn_model1_forward.1} parent=11 // pred_check_branch
        %323 = sbr.rel (%p321) target = $region52
      $region51: #{cnn_model1_forward.1} parent=11 // pred_region
        _
      $region52: #{cnn_model1_forward.1} parent=11 // pred_fallthru
        _
    $region12: #{cnn_model1_forward.1} parent=5 // pred_fallthru
      _
    %p324 = scmp.lt.s32.totalorder %s17, 2
    // Predicated region
    $region53: #{cnn_model1_forward.1} parent=5 // pred_check
      %p325 = pneg %p324
    $region54: #{cnn_model1_forward.1} parent=5 // pred_check_branch
      %327 = sbr.rel (%p325) target = $region56
    $region55: #{cnn_model1_forward.1} parent=5 // pred_region
      // Predicated region
      $region57: #{cnn_model1_forward.1} parent=55 // pred_check
        %p328 = pneg %p37
      $region58: #{cnn_model1_forward.1} parent=55 // pred_check_branch
        %330 = sbr.rel (%p328) target = $region60
      $region59: #{cnn_model1_forward.1} parent=55 // pred_region
        %p331 = scmp.lt.s32.totalorder %s17, 1
        %s332 = scalar_select %p331, %s17, 1
        %s333 = smul.addr %s332, 32
        %s334 = smul.addr %s333, 8
        %s335 = scalar_lea.vmem %s0, %s334
      $region60: #{cnn_model1_forward.1} parent=55 // pred_fallthru
        _
    $region56: #{cnn_model1_forward.1} parent=5 // pred_fallthru
      _
    %p336 = scmp.le.s32.totalorder 1, %s17
    %p337 = scmp.lt.s32.totalorder %s17, 3
    %p338 = pnand %p336, %p337
    %p339 = pneg %p338
    // Predicated region
    $region61: #{cnn_model1_forward.1} parent=5 // pred_check
      _
    $region62: #{cnn_model1_forward.1} parent=5 // pred_check_branch
      %341 = sbr.rel (%p338) target = $region64
    $region63: #{cnn_model1_forward.1} parent=5 // pred_region
      %s342 = ssub.s32 %s17, 1
      %p343 = scmp.lt.s32.totalorder %s22, 1
      %s344 = scalar_select %p343, %s22, 1
      %s345 = smul.addr %s344, 32
      %s346 = smul.addr %s345, 8
      %s347 = scalar_lea.vmem %s0, %s346
      %p348 = pneg %p43
      %p349 = pneg %p40
      %p350 = pneg %p64
      %p351 = pneg %p61
      %p352 = pneg %p85
      %p353 = pneg %p82
      %p354 = pneg %p106
      %p355 = pneg %p103
      %p356 = pneg %p127
      %p357 = pneg %p124
      %p358 = pneg %p148
      %p359 = pneg %p145
      %p360 = pneg %p169
      %p361 = pneg %p166
      %p362 = pneg %p190
      %p363 = pneg %p187
      %p364 = pneg %p211
      %p365 = pneg %p208
      %p366 = pneg %p232
      %p367 = pneg %p229
      %p368 = pneg %p253
      %p369 = pneg %p250
      %p370 = pneg %p279
      %p371 = pneg %p276
      %p372 = scmp.lt.s32.totalorder %s22, 1
      %s373 = scalar_select %p372, %s22, 1
      %s374 = scalar_lea.vmem %s11, %s373
      %p375 = scmp.lt.s32.totalorder %s22, 1
      %s376 = scalar_select %p375, %s22, 1
      %s377 = smul.addr %s376, 32
      %s378 = smul.addr %s377, 8
      %s379 = scalar_lea.vmem %s0, %s378
      %p380 = scmp.lt.s32.totalorder %s22, 1
      %s381 = scalar_select %p380, %s22, 1
      %s382 = scalar_lea.vmem %s11, %s381
      %v383 = vld [vmem:[%s379] sm:$0xff]
      %v384 = vld [vmem:[%s379 + $0x8] sm:$0xff]
      %v385 = vld [vmem:[%s379 + $0x10] sm:$0xff]
      %v386 = vld [vmem:[%s379 + $0x18] sm:$0xff]
      %v387 = vld [vmem:[%s379 + $0x20] sm:$0xff]
      %v388 = vld [vmem:[%s379 + $0x28] sm:$0xff]
      %v389 = vld [vmem:[%s379 + $0x30] sm:$0xff]
      %v390 = vld [vmem:[%s379 + $0x38] sm:$0xff]
      %v391 = vld [vmem:[%s379 + $0x40] sm:$0xff]
      %v392 = vld [vmem:[%s379 + $0x48] sm:$0xff]
      %v393 = vld [vmem:[%s379 + $0x50] sm:$0xff]
      %v394 = vld [vmem:[%s379 + $0x58] sm:$0xff]
      %v395 = vld [vmem:[%s379 + $0x60] sm:$0xff]
      %v396 = vld [vmem:[%s379 + $0x68] sm:$0xff]
      %v397 = vld [vmem:[%s379 + $0x70] sm:$0xff]
      %v398 = vld [vmem:[%s379 + $0x78] sm:$0xff]
      %v399 = vld [vmem:[%s379 + $0x80] sm:$0xff]
      %v400 = vld [vmem:[%s379 + $0x88] sm:$0xff]
      %v401 = vld [vmem:[%s379 + $0x90] sm:$0xff]
      %v402 = vld [vmem:[%s379 + $0x98] sm:$0xff]
      %v403 = vld [vmem:[%s379 + $0xa0] sm:$0xff]
      %v404 = vld [vmem:[%s379 + $0xa8] sm:$0xff]
      %v405 = vld [vmem:[%s379 + $0xb0] sm:$0xff]
      %v406 = vld [vmem:[%s379 + $0xb8] sm:$0xff]
      %v407 = vld [vmem:[%s379 + $0xc0] sm:$0xff]
      %v408 = vld [vmem:[%s379 + $0xc8] sm:$0xff]
      %v409 = vld [vmem:[%s379 + $0xd0] sm:$0xff]
      %v410 = vld [vmem:[%s379 + $0xd8] sm:$0xff]
      %v411 = vld [vmem:[%s379 + $0xe0] sm:$0xff]
      %v412 = vld [vmem:[%s379 + $0xe8] sm:$0xff]
      %v413 = vld [vmem:[%s379 + $0xf0] sm:$0xff]
      %v414 = vld [vmem:[%s379 + $0xf8] sm:$0xff]
      %v415 = vld [vmem:[%s1] sm:$0xff]
      %v416 = vld [vmem:[%s1 + $0x8] sm:$0xff]
      %v417 = vld [vmem:[%s1 + $0x10] sm:$0xff]
      %v418 = vld [vmem:[%s1 + $0x18] sm:$0x7]
      %v419 = vld [vmem:[%s2] sm:$0x1]
      %v421 = vperm.slane %v419, 0
      %vm423 = vcmask 220160
      %v425 = vsel %vm423, %v383, 0
      %v428 = vsel %vm423, %v384, 0
      %v431 = vsel %vm423, %v385, 0
      %v434 = vsel %vm423, %v386, 0
      %v437 = vsel %vm423, %v387, 0
      %v440 = vsel %vm423, %v388, 0
      %v443 = vsel %vm423, %v389, 0
      %v446 = vsel %vm423, %v390, 0
      %v449 = vsel %vm423, %v391, 0
      %v452 = vsel %vm423, %v392, 0
      %v455 = vsel %vm423, %v393, 0
      %v458 = vsel %vm423, %v394, 0
      %v461 = vsel %vm423, %v395, 0
      %v464 = vsel %vm423, %v396, 0
      %v467 = vsel %vm423, %v397, 0
      %v470 = vsel %vm423, %v398, 0
      %v473 = vsel %vm423, %v399, 0
      %v476 = vsel %vm423, %v400, 0
      %v479 = vsel %vm423, %v401, 0
      %v482 = vsel %vm423, %v402, 0
      %v485 = vsel %vm423, %v403, 0
      %v488 = vsel %vm423, %v404, 0
      %v491 = vsel %vm423, %v405, 0
      %v494 = vsel %vm423, %v406, 0
      %v497 = vsel %vm423, %v407, 0
      %v500 = vsel %vm423, %v408, 0
      %v503 = vsel %vm423, %v409, 0
      %v506 = vsel %vm423, %v410, 0
      %v509 = vsel %vm423, %v411, 0
      %v512 = vsel %vm423, %v412, 0
      %v515 = vsel %vm423, %v413, 0
      %v518 = vsel %vm423, %v414, 0
      %vm520 = vcmask 1042432
      %v522 = vsel %vm520, %v418, 0
      %524 = vmatpush.msra.mxu0 0.0
      %525 = vmatpush.msra.mxu0 0.0
      %526 = vmatpush.msra.mxu0 0.0
      %527 = vmatpush.msra.mxu0 0.0
      %528 = vmatpush.msra.mxu0 0.0
      %529 = vmatpush.msra.mxu0 0.0
      %530 = vmatpush.msra.mxu0 0.0
      %531 = vmatpush.msra.mxu0 0.0
      %532 = vmatpush.msra.mxu0 0.0
      %533 = vmatpush.msra.mxu0 0.0
      %534 = vmatpush.msra.mxu0 0.0
      %535 = vmatpush.msra.mxu0 0.0
      %536 = vmatpush.msra.mxu0 %v522
      %537 = vmatpush.msra.mxu0 %v417
      %538 = vmatpush.msra.mxu0 %v416
      %539 = vmatpush.msra.mxu0 %v415
      %540 = vmatmul.f32.gmra.mxu0 %v425
      %v541 = vpop.f32.mrf.mxu0
      %v542 = vadd.f32 %v421, %v541
      %543 = vmatmul.f32.gmra.mxu0 %v428
      %v544 = vpop.f32.mrf.mxu0
      %v545 = vadd.f32 %v421, %v544
      %546 = vmatmul.f32.gmra.mxu0 %v431
      %v547 = vpop.f32.mrf.mxu0
      %v548 = vadd.f32 %v421, %v547
      %549 = vmatmul.f32.gmra.mxu0 %v434
      %v550 = vpop.f32.mrf.mxu0
      %v551 = vadd.f32 %v421, %v550
      %552 = vmatmul.f32.gmra.mxu0 %v437
      %v553 = vpop.f32.mrf.mxu0
      %v554 = vadd.f32 %v421, %v553
      %555 = vmatmul.f32.gmra.mxu0 %v440
      %v556 = vpop.f32.mrf.mxu0
      %v557 = vadd.f32 %v421, %v556
      %558 = vmatmul.f32.gmra.mxu0 %v443
      %v559 = vpop.f32.mrf.mxu0
      %v560 = vadd.f32 %v421, %v559
      %561 = vmatmul.f32.gmra.mxu0 %v446
      %v562 = vpop.f32.mrf.mxu0
      %v563 = vadd.f32 %v421, %v562
      %564 = vmatmul.f32.gmra.mxu0 %v449
      %v565 = vpop.f32.mrf.mxu0
      %v566 = vadd.f32 %v421, %v565
      %567 = vmatmul.f32.gmra.mxu0 %v452
      %v568 = vpop.f32.mrf.mxu0
      %v569 = vadd.f32 %v421, %v568
      %570 = vmatmul.f32.gmra.mxu0 %v455
      %v571 = vpop.f32.mrf.mxu0
      %v572 = vadd.f32 %v421, %v571
      %573 = vmatmul.f32.gmra.mxu0 %v458
      %v574 = vpop.f32.mrf.mxu0
      %v575 = vadd.f32 %v421, %v574
      %576 = vmatmul.f32.gmra.mxu0 %v461
      %v577 = vpop.f32.mrf.mxu0
      %v578 = vadd.f32 %v421, %v577
      %579 = vmatmul.f32.gmra.mxu0 %v464
      %v580 = vpop.f32.mrf.mxu0
      %v581 = vadd.f32 %v421, %v580
      %582 = vmatmul.f32.gmra.mxu0 %v467
      %v583 = vpop.f32.mrf.mxu0
      %v584 = vadd.f32 %v421, %v583
      %585 = vmatmul.f32.gmra.mxu0 %v470
      %v586 = vpop.f32.mrf.mxu0
      %v587 = vadd.f32 %v421, %v586
      %588 = vmatmul.f32.gmra.mxu0 %v473
      %v589 = vpop.f32.mrf.mxu0
      %v590 = vadd.f32 %v421, %v589
      %591 = vmatmul.f32.gmra.mxu0 %v476
      %v592 = vpop.f32.mrf.mxu0
      %v593 = vadd.f32 %v421, %v592
      %594 = vmatmul.f32.gmra.mxu0 %v479
      %v595 = vpop.f32.mrf.mxu0
      %v596 = vadd.f32 %v421, %v595
      %597 = vmatmul.f32.gmra.mxu0 %v482
      %v598 = vpop.f32.mrf.mxu0
      %v599 = vadd.f32 %v421, %v598
      %600 = vmatmul.f32.gmra.mxu0 %v485
      %v601 = vpop.f32.mrf.mxu0
      %v602 = vadd.f32 %v421, %v601
      %603 = vmatmul.f32.gmra.mxu0 %v488
      %v604 = vpop.f32.mrf.mxu0
      %v605 = vadd.f32 %v421, %v604
      %606 = vmatmul.f32.gmra.mxu0 %v491
      %v607 = vpop.f32.mrf.mxu0
      %v608 = vadd.f32 %v421, %v607
      %609 = vmatmul.f32.gmra.mxu0 %v494
      %v610 = vpop.f32.mrf.mxu0
      %v611 = vadd.f32 %v421, %v610
      %612 = vmatmul.f32.gmra.mxu0 %v497
      %v613 = vpop.f32.mrf.mxu0
      %v614 = vadd.f32 %v421, %v613
      %615 = vmatmul.f32.gmra.mxu0 %v500
      %v616 = vpop.f32.mrf.mxu0
      %v617 = vadd.f32 %v421, %v616
      %618 = vmatmul.f32.gmra.mxu0 %v503
      %v619 = vpop.f32.mrf.mxu0
      %v620 = vadd.f32 %v421, %v619
      %621 = vmatmul.f32.gmra.mxu0 %v506
      %v622 = vpop.f32.mrf.mxu0
      %v623 = vadd.f32 %v421, %v622
      %624 = vmatmul.f32.gmra.mxu0 %v509
      %v625 = vpop.f32.mrf.mxu0
      %v626 = vadd.f32 %v421, %v625
      %627 = vmatmul.f32.gmra.mxu0 %v512
      %v628 = vpop.f32.mrf.mxu0
      %v629 = vadd.f32 %v421, %v628
      %630 = vmatmul.f32.gmra.mxu0 %v515
      %v631 = vpop.f32.mrf.mxu0
      %v632 = vadd.f32 %v421, %v631
      %633 = vmatmul.f32.gmra.mxu0 %v518
      %v634 = vpop.f32.mrf.mxu0
      %v635 = vadd.f32 %v421, %v634
      %636 = vdwg.mxu0
      %v637 = vmax.f32 %v542, 0.0
      %v638 = vmax.f32 %v545, 0.0
      %v639 = vmax.f32 %v548, 0.0
      %v640 = vmax.f32 %v551, 0.0
      %v641 = vmax.f32 %v554, 0.0
      %v642 = vmax.f32 %v557, 0.0
      %v643 = vmax.f32 %v560, 0.0
      %v644 = vmax.f32 %v563, 0.0
      %v645 = vmax.f32 %v566, 0.0
      %v646 = vmax.f32 %v569, 0.0
      %v647 = vmax.f32 %v572, 0.0
      %v648 = vmax.f32 %v575, 0.0
      %v649 = vmax.f32 %v578, 0.0
      %v650 = vmax.f32 %v581, 0.0
      %v651 = vmax.f32 %v584, 0.0
      %v652 = vmax.f32 %v587, 0.0
      %v653 = vmax.f32 %v590, 0.0
      %v654 = vmax.f32 %v593, 0.0
      %v655 = vmax.f32 %v596, 0.0
      %v656 = vmax.f32 %v599, 0.0
      %v657 = vmax.f32 %v602, 0.0
      %v658 = vmax.f32 %v605, 0.0
      %v659 = vmax.f32 %v608, 0.0
      %v660 = vmax.f32 %v611, 0.0
      %v661 = vmax.f32 %v614, 0.0
      %v662 = vmax.f32 %v617, 0.0
      %v663 = vmax.f32 %v620, 0.0
      %v664 = vmax.f32 %v623, 0.0
      %v665 = vmax.f32 %v626, 0.0
      %v666 = vmax.f32 %v629, 0.0
      %v667 = vmax.f32 %v632, 0.0
      %v668 = vmax.f32 %v635, 0.0
      %v701 = vrot.slane %v637, 2
      %v702 = vrot.slane %v637, 4
      %v703 = vrot.slane %v637, 6
      %v704 = vrot.slane %v638, 2
      %v705 = vrot.slane %v638, 4
      %v706 = vrot.slane %v638, 6
      %v707 = vrot.slane %v639, 2
      %v708 = vrot.slane %v639, 4
      %v709 = vrot.slane %v639, 6
      %v710 = vrot.slane %v640, 2
      %v711 = vrot.slane %v640, 4
      %v712 = vrot.slane %v640, 6
      %v713 = vrot.slane %v641, 2
      %v714 = vrot.slane %v641, 4
      %v715 = vrot.slane %v641, 6
      %v716 = vrot.slane %v642, 2
      %v717 = vrot.slane %v642, 4
      %v718 = vrot.slane %v642, 6
      %v719 = vrot.slane %v643, 2
      %v720 = vrot.slane %v643, 4
      %v721 = vrot.slane %v643, 6
      %v722 = vrot.slane %v644, 2
      %v723 = vrot.slane %v644, 4
      %v724 = vrot.slane %v644, 6
      %v725 = vrot.slane %v645, 2
      %v726 = vrot.slane %v645, 4
      %v727 = vrot.slane %v645, 6
      %v728 = vrot.slane %v646, 2
      %v729 = vrot.slane %v646, 4
      %v730 = vrot.slane %v646, 6
      %v731 = vrot.slane %v647, 2
      %v732 = vrot.slane %v647, 4
      %v733 = vrot.slane %v647, 6
      %v734 = vrot.slane %v648, 2
      %v735 = vrot.slane %v648, 4
      %v736 = vrot.slane %v648, 6
      %v737 = vrot.slane %v649, 2
      %v738 = vrot.slane %v649, 4
      %v739 = vrot.slane %v649, 6
      %v740 = vrot.slane %v650, 2
      %v741 = vrot.slane %v650, 4
      %v742 = vrot.slane %v650, 6
      %v743 = vrot.slane %v651, 2
      %v744 = vrot.slane %v651, 4
      %v745 = vrot.slane %v651, 6
      %v746 = vrot.slane %v652, 2
      %v747 = vrot.slane %v652, 4
      %v748 = vrot.slane %v652, 6
      %v749 = vrot.slane %v653, 2
      %v750 = vrot.slane %v653, 4
      %v751 = vrot.slane %v653, 6
      %v752 = vrot.slane %v654, 2
      %v753 = vrot.slane %v654, 4
      %v754 = vrot.slane %v654, 6
      %v755 = vrot.slane %v655, 2
      %v756 = vrot.slane %v655, 4
      %v757 = vrot.slane %v655, 6
      %v758 = vrot.slane %v656, 2
      %v759 = vrot.slane %v656, 4
      %v760 = vrot.slane %v656, 6
      %v761 = vrot.slane %v657, 2
      %v762 = vrot.slane %v657, 4
      %v763 = vrot.slane %v657, 6
      %v764 = vrot.slane %v658, 2
      %v765 = vrot.slane %v658, 4
      %v766 = vrot.slane %v658, 6
      %v767 = vrot.slane %v659, 2
      %v768 = vrot.slane %v659, 4
      %v769 = vrot.slane %v659, 6
      %v770 = vrot.slane %v660, 2
      %v771 = vrot.slane %v660, 4
      %v772 = vrot.slane %v660, 6
      %v773 = vrot.slane %v661, 2
      %v774 = vrot.slane %v661, 4
      %v775 = vrot.slane %v661, 6
      %v776 = vrot.slane %v662, 2
      %v777 = vrot.slane %v662, 4
      %v778 = vrot.slane %v662, 6
      %v779 = vrot.slane %v663, 2
      %v780 = vrot.slane %v663, 4
      %v781 = vrot.slane %v663, 6
      %v782 = vrot.slane %v664, 2
      %v783 = vrot.slane %v664, 4
      %v784 = vrot.slane %v664, 6
      %v785 = vrot.slane %v665, 2
      %v786 = vrot.slane %v665, 4
      %v787 = vrot.slane %v665, 6
      %v788 = vrot.slane %v666, 2
      %v789 = vrot.slane %v666, 4
      %v790 = vrot.slane %v666, 6
      %v791 = vrot.slane %v667, 2
      %v792 = vrot.slane %v667, 4
      %v793 = vrot.slane %v667, 6
      %v794 = vrot.slane %v668, 2
      %v795 = vrot.slane %v668, 4
      %v796 = vrot.slane %v668, 6
      %vm893 = vcmask 254976
      %v894 = vsel %vm893, %v637, -inf
      %v895 = vrot.slane %v894, 4
      %v896 = vmax.f32 %v894, %v895
      %v897 = vrot.slane %v896, 2
      %v898 = vmax.f32 %v896, %v897
      %v899 = vrot.slane %v898, 1
      %v900 = vmax.f32 %v898, %v899
      %v901 = vsel %vm893, %v701, -inf
      %v902 = vrot.slane %v901, 4
      %v903 = vmax.f32 %v901, %v902
      %v904 = vrot.slane %v903, 2
      %v905 = vmax.f32 %v903, %v904
      %v906 = vrot.slane %v905, 1
      %v907 = vmax.f32 %v905, %v906
      %v908 = vsel %vm893, %v702, -inf
      %v909 = vrot.slane %v908, 4
      %v910 = vmax.f32 %v908, %v909
      %v911 = vrot.slane %v910, 2
      %v912 = vmax.f32 %v910, %v911
      %v913 = vrot.slane %v912, 1
      %v914 = vmax.f32 %v912, %v913
      %v915 = vsel %vm893, %v703, -inf
      %v916 = vrot.slane %v915, 4
      %v917 = vmax.f32 %v915, %v916
      %v918 = vrot.slane %v917, 2
      %v919 = vmax.f32 %v917, %v918
      %v920 = vrot.slane %v919, 1
      %v921 = vmax.f32 %v919, %v920
      %v922 = vsel %vm893, %v638, -inf
      %v923 = vrot.slane %v922, 4
      %v924 = vmax.f32 %v922, %v923
      %v925 = vrot.slane %v924, 2
      %v926 = vmax.f32 %v924, %v925
      %v927 = vrot.slane %v926, 1
      %v928 = vmax.f32 %v926, %v927
      %v929 = vsel %vm893, %v704, -inf
      %v930 = vrot.slane %v929, 4
      %v931 = vmax.f32 %v929, %v930
      %v932 = vrot.slane %v931, 2
      %v933 = vmax.f32 %v931, %v932
      %v934 = vrot.slane %v933, 1
      %v935 = vmax.f32 %v933, %v934
      %v936 = vsel %vm893, %v705, -inf
      %v937 = vrot.slane %v936, 4
      %v938 = vmax.f32 %v936, %v937
      %v939 = vrot.slane %v938, 2
      %v940 = vmax.f32 %v938, %v939
      %v941 = vrot.slane %v940, 1
      %v942 = vmax.f32 %v940, %v941
      %v943 = vsel %vm893, %v706, -inf
      %v944 = vrot.slane %v943, 4
      %v945 = vmax.f32 %v943, %v944
      %v946 = vrot.slane %v945, 2
      %v947 = vmax.f32 %v945, %v946
      %v948 = vrot.slane %v947, 1
      %v949 = vmax.f32 %v947, %v948
      %v950 = vsel %vm893, %v639, -inf
      %v951 = vrot.slane %v950, 4
      %v952 = vmax.f32 %v950, %v951
      %v953 = vrot.slane %v952, 2
      %v954 = vmax.f32 %v952, %v953
      %v955 = vrot.slane %v954, 1
      %v956 = vmax.f32 %v954, %v955
      %v957 = vsel %vm893, %v707, -inf
      %v958 = vrot.slane %v957, 4
      %v959 = vmax.f32 %v957, %v958
      %v960 = vrot.slane %v959, 2
      %v961 = vmax.f32 %v959, %v960
      %v962 = vrot.slane %v961, 1
      %v963 = vmax.f32 %v961, %v962
      %v964 = vsel %vm893, %v708, -inf
      %v965 = vrot.slane %v964, 4
      %v966 = vmax.f32 %v964, %v965
      %v967 = vrot.slane %v966, 2
      %v968 = vmax.f32 %v966, %v967
      %v969 = vrot.slane %v968, 1
      %v970 = vmax.f32 %v968, %v969
      %v971 = vsel %vm893, %v709, -inf
      %v972 = vrot.slane %v971, 4
      %v973 = vmax.f32 %v971, %v972
      %v974 = vrot.slane %v973, 2
      %v975 = vmax.f32 %v973, %v974
      %v976 = vrot.slane %v975, 1
      %v977 = vmax.f32 %v975, %v976
      %v978 = vsel %vm893, %v640, -inf
      %v979 = vrot.slane %v978, 4
      %v980 = vmax.f32 %v978, %v979
      %v981 = vrot.slane %v980, 2
      %v982 = vmax.f32 %v980, %v981
      %v983 = vrot.slane %v982, 1
      %v984 = vmax.f32 %v982, %v983
      %v985 = vsel %vm893, %v710, -inf
      %v986 = vrot.slane %v985, 4
      %v987 = vmax.f32 %v985, %v986
      %v988 = vrot.slane %v987, 2
      %v989 = vmax.f32 %v987, %v988
      %v990 = vrot.slane %v989, 1
      %v991 = vmax.f32 %v989, %v990
      %v992 = vsel %vm893, %v711, -inf
      %v993 = vrot.slane %v992, 4
      %v994 = vmax.f32 %v992, %v993
      %v995 = vrot.slane %v994, 2
      %v996 = vmax.f32 %v994, %v995
      %v997 = vrot.slane %v996, 1
      %v998 = vmax.f32 %v996, %v997
      %v999 = vsel %vm893, %v712, -inf
      %v1000 = vrot.slane %v999, 4
      %v1001 = vmax.f32 %v999, %v1000
      %v1002 = vrot.slane %v1001, 2
      %v1003 = vmax.f32 %v1001, %v1002
      %v1004 = vrot.slane %v1003, 1
      %v1005 = vmax.f32 %v1003, %v1004
      %v1006 = vsel %vm893, %v641, -inf
      %v1007 = vrot.slane %v1006, 4
      %v1008 = vmax.f32 %v1006, %v1007
      %v1009 = vrot.slane %v1008, 2
      %v1010 = vmax.f32 %v1008, %v1009
      %v1011 = vrot.slane %v1010, 1
      %v1012 = vmax.f32 %v1010, %v1011
      %v1013 = vsel %vm893, %v713, -inf
      %v1014 = vrot.slane %v1013, 4
      %v1015 = vmax.f32 %v1013, %v1014
      %v1016 = vrot.slane %v1015, 2
      %v1017 = vmax.f32 %v1015, %v1016
      %v1018 = vrot.slane %v1017, 1
      %v1019 = vmax.f32 %v1017, %v1018
      %v1020 = vsel %vm893, %v714, -inf
      %v1021 = vrot.slane %v1020, 4
      %v1022 = vmax.f32 %v1020, %v1021
      %v1023 = vrot.slane %v1022, 2
      %v1024 = vmax.f32 %v1022, %v1023
      %v1025 = vrot.slane %v1024, 1
      %v1026 = vmax.f32 %v1024, %v1025
      %v1027 = vsel %vm893, %v715, -inf
      %v1028 = vrot.slane %v1027, 4
      %v1029 = vmax.f32 %v1027, %v1028
      %v1030 = vrot.slane %v1029, 2
      %v1031 = vmax.f32 %v1029, %v1030
      %v1032 = vrot.slane %v1031, 1
      %v1033 = vmax.f32 %v1031, %v1032
      %v1034 = vsel %vm893, %v642, -inf
      %v1035 = vrot.slane %v1034, 4
      %v1036 = vmax.f32 %v1034, %v1035
      %v1037 = vrot.slane %v1036, 2
      %v1038 = vmax.f32 %v1036, %v1037
      %v1039 = vrot.slane %v1038, 1
      %v1040 = vmax.f32 %v1038, %v1039
      %v1041 = vsel %vm893, %v716, -inf
      %v1042 = vrot.slane %v1041, 4
      %v1043 = vmax.f32 %v1041, %v1042
      %v1044 = vrot.slane %v1043, 2
      %v1045 = vmax.f32 %v1043, %v1044
      %v1046 = vrot.slane %v1045, 1
      %v1047 = vmax.f32 %v1045, %v1046
      %v1048 = vsel %vm893, %v717, -inf
      %v1049 = vrot.slane %v1048, 4
      %v1050 = vmax.f32 %v1048, %v1049
      %v1051 = vrot.slane %v1050, 2
      %v1052 = vmax.f32 %v1050, %v1051
      %v1053 = vrot.slane %v1052, 1
      %v1054 = vmax.f32 %v1052, %v1053
      %v1055 = vsel %vm893, %v718, -inf
      %v1056 = vrot.slane %v1055, 4
      %v1057 = vmax.f32 %v1055, %v1056
      %v1058 = vrot.slane %v1057, 2
      %v1059 = vmax.f32 %v1057, %v1058
      %v1060 = vrot.slane %v1059, 1
      %v1061 = vmax.f32 %v1059, %v1060
      %v1062 = vsel %vm893, %v643, -inf
      %v1063 = vrot.slane %v1062, 4
      %v1064 = vmax.f32 %v1062, %v1063
      %v1065 = vrot.slane %v1064, 2
      %v1066 = vmax.f32 %v1064, %v1065
      %v1067 = vrot.slane %v1066, 1
      %v1068 = vmax.f32 %v1066, %v1067
      %v1069 = vsel %vm893, %v719, -inf
      %v1070 = vrot.slane %v1069, 4
      %v1071 = vmax.f32 %v1069, %v1070
      %v1072 = vrot.slane %v1071, 2
      %v1073 = vmax.f32 %v1071, %v1072
      %v1074 = vrot.slane %v1073, 1
      %v1075 = vmax.f32 %v1073, %v1074
      %v1076 = vsel %vm893, %v720, -inf
      %v1077 = vrot.slane %v1076, 4
      %v1078 = vmax.f32 %v1076, %v1077
      %v1079 = vrot.slane %v1078, 2
      %v1080 = vmax.f32 %v1078, %v1079
      %v1081 = vrot.slane %v1080, 1
      %v1082 = vmax.f32 %v1080, %v1081
      %v1083 = vsel %vm893, %v721, -inf
      %v1084 = vrot.slane %v1083, 4
      %v1085 = vmax.f32 %v1083, %v1084
      %v1086 = vrot.slane %v1085, 2
      %v1087 = vmax.f32 %v1085, %v1086
      %v1088 = vrot.slane %v1087, 1
      %v1089 = vmax.f32 %v1087, %v1088
      %v1090 = vsel %vm893, %v644, -inf
      %v1091 = vrot.slane %v1090, 4
      %v1092 = vmax.f32 %v1090, %v1091
      %v1093 = vrot.slane %v1092, 2
      %v1094 = vmax.f32 %v1092, %v1093
      %v1095 = vrot.slane %v1094, 1
      %v1096 = vmax.f32 %v1094, %v1095
      %v1097 = vsel %vm893, %v722, -inf
      %v1098 = vrot.slane %v1097, 4
      %v1099 = vmax.f32 %v1097, %v1098
      %v1100 = vrot.slane %v1099, 2
      %v1101 = vmax.f32 %v1099, %v1100
      %v1102 = vrot.slane %v1101, 1
      %v1103 = vmax.f32 %v1101, %v1102
      %v1104 = vsel %vm893, %v723, -inf
      %v1105 = vrot.slane %v1104, 4
      %v1106 = vmax.f32 %v1104, %v1105
      %v1107 = vrot.slane %v1106, 2
      %v1108 = vmax.f32 %v1106, %v1107
      %v1109 = vrot.slane %v1108, 1
      %v1110 = vmax.f32 %v1108, %v1109
      %v1111 = vsel %vm893, %v724, -inf
      %v1112 = vrot.slane %v1111, 4
      %v1113 = vmax.f32 %v1111, %v1112
      %v1114 = vrot.slane %v1113, 2
      %v1115 = vmax.f32 %v1113, %v1114
      %v1116 = vrot.slane %v1115, 1
      %v1117 = vmax.f32 %v1115, %v1116
      %v1118 = vsel %vm893, %v645, -inf
      %v1119 = vrot.slane %v1118, 4
      %v1120 = vmax.f32 %v1118, %v1119
      %v1121 = vrot.slane %v1120, 2
      %v1122 = vmax.f32 %v1120, %v1121
      %v1123 = vrot.slane %v1122, 1
      %v1124 = vmax.f32 %v1122, %v1123
      %v1125 = vsel %vm893, %v725, -inf
      %v1126 = vrot.slane %v1125, 4
      %v1127 = vmax.f32 %v1125, %v1126
      %v1128 = vrot.slane %v1127, 2
      %v1129 = vmax.f32 %v1127, %v1128
      %v1130 = vrot.slane %v1129, 1
      %v1131 = vmax.f32 %v1129, %v1130
      %v1132 = vsel %vm893, %v726, -inf
      %v1133 = vrot.slane %v1132, 4
      %v1134 = vmax.f32 %v1132, %v1133
      %v1135 = vrot.slane %v1134, 2
      %v1136 = vmax.f32 %v1134, %v1135
      %v1137 = vrot.slane %v1136, 1
      %v1138 = vmax.f32 %v1136, %v1137
      %v1139 = vsel %vm893, %v727, -inf
      %v1140 = vrot.slane %v1139, 4
      %v1141 = vmax.f32 %v1139, %v1140
      %v1142 = vrot.slane %v1141, 2
      %v1143 = vmax.f32 %v1141, %v1142
      %v1144 = vrot.slane %v1143, 1
      %v1145 = vmax.f32 %v1143, %v1144
      %v1146 = vsel %vm893, %v646, -inf
      %v1147 = vrot.slane %v1146, 4
      %v1148 = vmax.f32 %v1146, %v1147
      %v1149 = vrot.slane %v1148, 2
      %v1150 = vmax.f32 %v1148, %v1149
      %v1151 = vrot.slane %v1150, 1
      %v1152 = vmax.f32 %v1150, %v1151
      %v1153 = vsel %vm893, %v728, -inf
      %v1154 = vrot.slane %v1153, 4
      %v1155 = vmax.f32 %v1153, %v1154
      %v1156 = vrot.slane %v1155, 2
      %v1157 = vmax.f32 %v1155, %v1156
      %v1158 = vrot.slane %v1157, 1
      %v1159 = vmax.f32 %v1157, %v1158
      %v1160 = vsel %vm893, %v729, -inf
      %v1161 = vrot.slane %v1160, 4
      %v1162 = vmax.f32 %v1160, %v1161
      %v1163 = vrot.slane %v1162, 2
      %v1164 = vmax.f32 %v1162, %v1163
      %v1165 = vrot.slane %v1164, 1
      %v1166 = vmax.f32 %v1164, %v1165
      %v1167 = vsel %vm893, %v730, -inf
      %v1168 = vrot.slane %v1167, 4
      %v1169 = vmax.f32 %v1167, %v1168
      %v1170 = vrot.slane %v1169, 2
      %v1171 = vmax.f32 %v1169, %v1170
      %v1172 = vrot.slane %v1171, 1
      %v1173 = vmax.f32 %v1171, %v1172
      %v1174 = vsel %vm893, %v647, -inf
      %v1175 = vrot.slane %v1174, 4
      %v1176 = vmax.f32 %v1174, %v1175
      %v1177 = vrot.slane %v1176, 2
      %v1178 = vmax.f32 %v1176, %v1177
      %v1179 = vrot.slane %v1178, 1
      %v1180 = vmax.f32 %v1178, %v1179
      %v1181 = vsel %vm893, %v731, -inf
      %v1182 = vrot.slane %v1181, 4
      %v1183 = vmax.f32 %v1181, %v1182
      %v1184 = vrot.slane %v1183, 2
      %v1185 = vmax.f32 %v1183, %v1184
      %v1186 = vrot.slane %v1185, 1
      %v1187 = vmax.f32 %v1185, %v1186
      %v1188 = vsel %vm893, %v732, -inf
      %v1189 = vrot.slane %v1188, 4
      %v1190 = vmax.f32 %v1188, %v1189
      %v1191 = vrot.slane %v1190, 2
      %v1192 = vmax.f32 %v1190, %v1191
      %v1193 = vrot.slane %v1192, 1
      %v1194 = vmax.f32 %v1192, %v1193
      %v1195 = vsel %vm893, %v733, -inf
      %v1196 = vrot.slane %v1195, 4
      %v1197 = vmax.f32 %v1195, %v1196
      %v1198 = vrot.slane %v1197, 2
      %v1199 = vmax.f32 %v1197, %v1198
      %v1200 = vrot.slane %v1199, 1
      %v1201 = vmax.f32 %v1199, %v1200
      %v1202 = vsel %vm893, %v648, -inf
      %v1203 = vrot.slane %v1202, 4
      %v1204 = vmax.f32 %v1202, %v1203
      %v1205 = vrot.slane %v1204, 2
      %v1206 = vmax.f32 %v1204, %v1205
      %v1207 = vrot.slane %v1206, 1
      %v1208 = vmax.f32 %v1206, %v1207
      %v1209 = vsel %vm893, %v734, -inf
      %v1210 = vrot.slane %v1209, 4
      %v1211 = vmax.f32 %v1209, %v1210
      %v1212 = vrot.slane %v1211, 2
      %v1213 = vmax.f32 %v1211, %v1212
      %v1214 = vrot.slane %v1213, 1
      %v1215 = vmax.f32 %v1213, %v1214
      %v1216 = vsel %vm893, %v735, -inf
      %v1217 = vrot.slane %v1216, 4
      %v1218 = vmax.f32 %v1216, %v1217
      %v1219 = vrot.slane %v1218, 2
      %v1220 = vmax.f32 %v1218, %v1219
      %v1221 = vrot.slane %v1220, 1
      %v1222 = vmax.f32 %v1220, %v1221
      %v1223 = vsel %vm893, %v736, -inf
      %v1224 = vrot.slane %v1223, 4
      %v1225 = vmax.f32 %v1223, %v1224
      %v1226 = vrot.slane %v1225, 2
      %v1227 = vmax.f32 %v1225, %v1226
      %v1228 = vrot.slane %v1227, 1
      %v1229 = vmax.f32 %v1227, %v1228
      %v1230 = vsel %vm893, %v649, -inf
      %v1231 = vrot.slane %v1230, 4
      %v1232 = vmax.f32 %v1230, %v1231
      %v1233 = vrot.slane %v1232, 2
      %v1234 = vmax.f32 %v1232, %v1233
      %v1235 = vrot.slane %v1234, 1
      %v1236 = vmax.f32 %v1234, %v1235
      %v1237 = vsel %vm893, %v737, -inf
      %v1238 = vrot.slane %v1237, 4
      %v1239 = vmax.f32 %v1237, %v1238
      %v1240 = vrot.slane %v1239, 2
      %v1241 = vmax.f32 %v1239, %v1240
      %v1242 = vrot.slane %v1241, 1
      %v1243 = vmax.f32 %v1241, %v1242
      %v1244 = vsel %vm893, %v738, -inf
      %v1245 = vrot.slane %v1244, 4
      %v1246 = vmax.f32 %v1244, %v1245
      %v1247 = vrot.slane %v1246, 2
      %v1248 = vmax.f32 %v1246, %v1247
      %v1249 = vrot.slane %v1248, 1
      %v1250 = vmax.f32 %v1248, %v1249
      %v1251 = vsel %vm893, %v739, -inf
      %v1252 = vrot.slane %v1251, 4
      %v1253 = vmax.f32 %v1251, %v1252
      %v1254 = vrot.slane %v1253, 2
      %v1255 = vmax.f32 %v1253, %v1254
      %v1256 = vrot.slane %v1255, 1
      %v1257 = vmax.f32 %v1255, %v1256
      %v1258 = vsel %vm893, %v650, -inf
      %v1259 = vrot.slane %v1258, 4
      %v1260 = vmax.f32 %v1258, %v1259
      %v1261 = vrot.slane %v1260, 2
      %v1262 = vmax.f32 %v1260, %v1261
      %v1263 = vrot.slane %v1262, 1
      %v1264 = vmax.f32 %v1262, %v1263
      %v1265 = vsel %vm893, %v740, -inf
      %v1266 = vrot.slane %v1265, 4
      %v1267 = vmax.f32 %v1265, %v1266
      %v1268 = vrot.slane %v1267, 2
      %v1269 = vmax.f32 %v1267, %v1268
      %v1270 = vrot.slane %v1269, 1
      %v1271 = vmax.f32 %v1269, %v1270
      %v1272 = vsel %vm893, %v741, -inf
      %v1273 = vrot.slane %v1272, 4
      %v1274 = vmax.f32 %v1272, %v1273
      %v1275 = vrot.slane %v1274, 2
      %v1276 = vmax.f32 %v1274, %v1275
      %v1277 = vrot.slane %v1276, 1
      %v1278 = vmax.f32 %v1276, %v1277
      %v1279 = vsel %vm893, %v742, -inf
      %v1280 = vrot.slane %v1279, 4
      %v1281 = vmax.f32 %v1279, %v1280
      %v1282 = vrot.slane %v1281, 2
      %v1283 = vmax.f32 %v1281, %v1282
      %v1284 = vrot.slane %v1283, 1
      %v1285 = vmax.f32 %v1283, %v1284
      %v1286 = vsel %vm893, %v651, -inf
      %v1287 = vrot.slane %v1286, 4
      %v1288 = vmax.f32 %v1286, %v1287
      %v1289 = vrot.slane %v1288, 2
      %v1290 = vmax.f32 %v1288, %v1289
      %v1291 = vrot.slane %v1290, 1
      %v1292 = vmax.f32 %v1290, %v1291
      %v1293 = vsel %vm893, %v743, -inf
      %v1294 = vrot.slane %v1293, 4
      %v1295 = vmax.f32 %v1293, %v1294
      %v1296 = vrot.slane %v1295, 2
      %v1297 = vmax.f32 %v1295, %v1296
      %v1298 = vrot.slane %v1297, 1
      %v1299 = vmax.f32 %v1297, %v1298
      %v1300 = vsel %vm893, %v744, -inf
      %v1301 = vrot.slane %v1300, 4
      %v1302 = vmax.f32 %v1300, %v1301
      %v1303 = vrot.slane %v1302, 2
      %v1304 = vmax.f32 %v1302, %v1303
      %v1305 = vrot.slane %v1304, 1
      %v1306 = vmax.f32 %v1304, %v1305
      %v1307 = vsel %vm893, %v745, -inf
      %v1308 = vrot.slane %v1307, 4
      %v1309 = vmax.f32 %v1307, %v1308
      %v1310 = vrot.slane %v1309, 2
      %v1311 = vmax.f32 %v1309, %v1310
      %v1312 = vrot.slane %v1311, 1
      %v1313 = vmax.f32 %v1311, %v1312
      %v1314 = vsel %vm893, %v652, -inf
      %v1315 = vrot.slane %v1314, 4
      %v1316 = vmax.f32 %v1314, %v1315
      %v1317 = vrot.slane %v1316, 2
      %v1318 = vmax.f32 %v1316, %v1317
      %v1319 = vrot.slane %v1318, 1
      %v1320 = vmax.f32 %v1318, %v1319
      %v1321 = vsel %vm893, %v746, -inf
      %v1322 = vrot.slane %v1321, 4
      %v1323 = vmax.f32 %v1321, %v1322
      %v1324 = vrot.slane %v1323, 2
      %v1325 = vmax.f32 %v1323, %v1324
      %v1326 = vrot.slane %v1325, 1
      %v1327 = vmax.f32 %v1325, %v1326
      %v1328 = vsel %vm893, %v747, -inf
      %v1329 = vrot.slane %v1328, 4
      %v1330 = vmax.f32 %v1328, %v1329
      %v1331 = vrot.slane %v1330, 2
      %v1332 = vmax.f32 %v1330, %v1331
      %v1333 = vrot.slane %v1332, 1
      %v1334 = vmax.f32 %v1332, %v1333
      %v1335 = vsel %vm893, %v748, -inf
      %v1336 = vrot.slane %v1335, 4
      %v1337 = vmax.f32 %v1335, %v1336
      %v1338 = vrot.slane %v1337, 2
      %v1339 = vmax.f32 %v1337, %v1338
      %v1340 = vrot.slane %v1339, 1
      %v1341 = vmax.f32 %v1339, %v1340
      %v1342 = vsel %vm893, %v653, -inf
      %v1343 = vrot.slane %v1342, 4
      %v1344 = vmax.f32 %v1342, %v1343
      %v1345 = vrot.slane %v1344, 2
      %v1346 = vmax.f32 %v1344, %v1345
      %v1347 = vrot.slane %v1346, 1
      %v1348 = vmax.f32 %v1346, %v1347
      %v1349 = vsel %vm893, %v749, -inf
      %v1350 = vrot.slane %v1349, 4
      %v1351 = vmax.f32 %v1349, %v1350
      %v1352 = vrot.slane %v1351, 2
      %v1353 = vmax.f32 %v1351, %v1352
      %v1354 = vrot.slane %v1353, 1
      %v1355 = vmax.f32 %v1353, %v1354
      %v1356 = vsel %vm893, %v750, -inf
      %v1357 = vrot.slane %v1356, 4
      %v1358 = vmax.f32 %v1356, %v1357
      %v1359 = vrot.slane %v1358, 2
      %v1360 = vmax.f32 %v1358, %v1359
      %v1361 = vrot.slane %v1360, 1
      %v1362 = vmax.f32 %v1360, %v1361
      %v1363 = vsel %vm893, %v751, -inf
      %v1364 = vrot.slane %v1363, 4
      %v1365 = vmax.f32 %v1363, %v1364
      %v1366 = vrot.slane %v1365, 2
      %v1367 = vmax.f32 %v1365, %v1366
      %v1368 = vrot.slane %v1367, 1
      %v1369 = vmax.f32 %v1367, %v1368
      %v1370 = vsel %vm893, %v654, -inf
      %v1371 = vrot.slane %v1370, 4
      %v1372 = vmax.f32 %v1370, %v1371
      %v1373 = vrot.slane %v1372, 2
      %v1374 = vmax.f32 %v1372, %v1373
      %v1375 = vrot.slane %v1374, 1
      %v1376 = vmax.f32 %v1374, %v1375
      %v1377 = vsel %vm893, %v752, -inf
      %v1378 = vrot.slane %v1377, 4
      %v1379 = vmax.f32 %v1377, %v1378
      %v1380 = vrot.slane %v1379, 2
      %v1381 = vmax.f32 %v1379, %v1380
      %v1382 = vrot.slane %v1381, 1
      %v1383 = vmax.f32 %v1381, %v1382
      %v1384 = vsel %vm893, %v753, -inf
      %v1385 = vrot.slane %v1384, 4
      %v1386 = vmax.f32 %v1384, %v1385
      %v1387 = vrot.slane %v1386, 2
      %v1388 = vmax.f32 %v1386, %v1387
      %v1389 = vrot.slane %v1388, 1
      %v1390 = vmax.f32 %v1388, %v1389
      %v1391 = vsel %vm893, %v754, -inf
      %v1392 = vrot.slane %v1391, 4
      %v1393 = vmax.f32 %v1391, %v1392
      %v1394 = vrot.slane %v1393, 2
      %v1395 = vmax.f32 %v1393, %v1394
      %v1396 = vrot.slane %v1395, 1
      %v1397 = vmax.f32 %v1395, %v1396
      %v1398 = vsel %vm893, %v655, -inf
      %v1399 = vrot.slane %v1398, 4
      %v1400 = vmax.f32 %v1398, %v1399
      %v1401 = vrot.slane %v1400, 2
      %v1402 = vmax.f32 %v1400, %v1401
      %v1403 = vrot.slane %v1402, 1
      %v1404 = vmax.f32 %v1402, %v1403
      %v1405 = vsel %vm893, %v755, -inf
      %v1406 = vrot.slane %v1405, 4
      %v1407 = vmax.f32 %v1405, %v1406
      %v1408 = vrot.slane %v1407, 2
      %v1409 = vmax.f32 %v1407, %v1408
      %v1410 = vrot.slane %v1409, 1
      %v1411 = vmax.f32 %v1409, %v1410
      %v1412 = vsel %vm893, %v756, -inf
      %v1413 = vrot.slane %v1412, 4
      %v1414 = vmax.f32 %v1412, %v1413
      %v1415 = vrot.slane %v1414, 2
      %v1416 = vmax.f32 %v1414, %v1415
      %v1417 = vrot.slane %v1416, 1
      %v1418 = vmax.f32 %v1416, %v1417
      %v1419 = vsel %vm893, %v757, -inf
      %v1420 = vrot.slane %v1419, 4
      %v1421 = vmax.f32 %v1419, %v1420
      %v1422 = vrot.slane %v1421, 2
      %v1423 = vmax.f32 %v1421, %v1422
      %v1424 = vrot.slane %v1423, 1
      %v1425 = vmax.f32 %v1423, %v1424
      %v1426 = vsel %vm893, %v656, -inf
      %v1427 = vrot.slane %v1426, 4
      %v1428 = vmax.f32 %v1426, %v1427
      %v1429 = vrot.slane %v1428, 2
      %v1430 = vmax.f32 %v1428, %v1429
      %v1431 = vrot.slane %v1430, 1
      %v1432 = vmax.f32 %v1430, %v1431
      %v1433 = vsel %vm893, %v758, -inf
      %v1434 = vrot.slane %v1433, 4
      %v1435 = vmax.f32 %v1433, %v1434
      %v1436 = vrot.slane %v1435, 2
      %v1437 = vmax.f32 %v1435, %v1436
      %v1438 = vrot.slane %v1437, 1
      %v1439 = vmax.f32 %v1437, %v1438
      %v1440 = vsel %vm893, %v759, -inf
      %v1441 = vrot.slane %v1440, 4
      %v1442 = vmax.f32 %v1440, %v1441
      %v1443 = vrot.slane %v1442, 2
      %v1444 = vmax.f32 %v1442, %v1443
      %v1445 = vrot.slane %v1444, 1
      %v1446 = vmax.f32 %v1444, %v1445
      %v1447 = vsel %vm893, %v760, -inf
      %v1448 = vrot.slane %v1447, 4
      %v1449 = vmax.f32 %v1447, %v1448
      %v1450 = vrot.slane %v1449, 2
      %v1451 = vmax.f32 %v1449, %v1450
      %v1452 = vrot.slane %v1451, 1
      %v1453 = vmax.f32 %v1451, %v1452
      %v1454 = vsel %vm893, %v657, -inf
      %v1455 = vrot.slane %v1454, 4
      %v1456 = vmax.f32 %v1454, %v1455
      %v1457 = vrot.slane %v1456, 2
      %v1458 = vmax.f32 %v1456, %v1457
      %v1459 = vrot.slane %v1458, 1
      %v1460 = vmax.f32 %v1458, %v1459
      %v1461 = vsel %vm893, %v761, -inf
      %v1462 = vrot.slane %v1461, 4
      %v1463 = vmax.f32 %v1461, %v1462
      %v1464 = vrot.slane %v1463, 2
      %v1465 = vmax.f32 %v1463, %v1464
      %v1466 = vrot.slane %v1465, 1
      %v1467 = vmax.f32 %v1465, %v1466
      %v1468 = vsel %vm893, %v762, -inf
      %v1469 = vrot.slane %v1468, 4
      %v1470 = vmax.f32 %v1468, %v1469
      %v1471 = vrot.slane %v1470, 2
      %v1472 = vmax.f32 %v1470, %v1471
      %v1473 = vrot.slane %v1472, 1
      %v1474 = vmax.f32 %v1472, %v1473
      %v1475 = vsel %vm893, %v763, -inf
      %v1476 = vrot.slane %v1475, 4
      %v1477 = vmax.f32 %v1475, %v1476
      %v1478 = vrot.slane %v1477, 2
      %v1479 = vmax.f32 %v1477, %v1478
      %v1480 = vrot.slane %v1479, 1
      %v1481 = vmax.f32 %v1479, %v1480
      %v1482 = vsel %vm893, %v658, -inf
      %v1483 = vrot.slane %v1482, 4
      %v1484 = vmax.f32 %v1482, %v1483
      %v1485 = vrot.slane %v1484, 2
      %v1486 = vmax.f32 %v1484, %v1485
      %v1487 = vrot.slane %v1486, 1
      %v1488 = vmax.f32 %v1486, %v1487
      %v1489 = vsel %vm893, %v764, -inf
      %v1490 = vrot.slane %v1489, 4
      %v1491 = vmax.f32 %v1489, %v1490
      %v1492 = vrot.slane %v1491, 2
      %v1493 = vmax.f32 %v1491, %v1492
      %v1494 = vrot.slane %v1493, 1
      %v1495 = vmax.f32 %v1493, %v1494
      %v1496 = vsel %vm893, %v765, -inf
      %v1497 = vrot.slane %v1496, 4
      %v1498 = vmax.f32 %v1496, %v1497
      %v1499 = vrot.slane %v1498, 2
      %v1500 = vmax.f32 %v1498, %v1499
      %v1501 = vrot.slane %v1500, 1
      %v1502 = vmax.f32 %v1500, %v1501
      %v1503 = vsel %vm893, %v766, -inf
      %v1504 = vrot.slane %v1503, 4
      %v1505 = vmax.f32 %v1503, %v1504
      %v1506 = vrot.slane %v1505, 2
      %v1507 = vmax.f32 %v1505, %v1506
      %v1508 = vrot.slane %v1507, 1
      %v1509 = vmax.f32 %v1507, %v1508
      %v1510 = vsel %vm893, %v659, -inf
      %v1511 = vrot.slane %v1510, 4
      %v1512 = vmax.f32 %v1510, %v1511
      %v1513 = vrot.slane %v1512, 2
      %v1514 = vmax.f32 %v1512, %v1513
      %v1515 = vrot.slane %v1514, 1
      %v1516 = vmax.f32 %v1514, %v1515
      %v1517 = vsel %vm893, %v767, -inf
      %v1518 = vrot.slane %v1517, 4
      %v1519 = vmax.f32 %v1517, %v1518
      %v1520 = vrot.slane %v1519, 2
      %v1521 = vmax.f32 %v1519, %v1520
      %v1522 = vrot.slane %v1521, 1
      %v1523 = vmax.f32 %v1521, %v1522
      %v1524 = vsel %vm893, %v768, -inf
      %v1525 = vrot.slane %v1524, 4
      %v1526 = vmax.f32 %v1524, %v1525
      %v1527 = vrot.slane %v1526, 2
      %v1528 = vmax.f32 %v1526, %v1527
      %v1529 = vrot.slane %v1528, 1
      %v1530 = vmax.f32 %v1528, %v1529
      %v1531 = vsel %vm893, %v769, -inf
      %v1532 = vrot.slane %v1531, 4
      %v1533 = vmax.f32 %v1531, %v1532
      %v1534 = vrot.slane %v1533, 2
      %v1535 = vmax.f32 %v1533, %v1534
      %v1536 = vrot.slane %v1535, 1
      %v1537 = vmax.f32 %v1535, %v1536
      %v1538 = vsel %vm893, %v660, -inf
      %v1539 = vrot.slane %v1538, 4
      %v1540 = vmax.f32 %v1538, %v1539
      %v1541 = vrot.slane %v1540, 2
      %v1542 = vmax.f32 %v1540, %v1541
      %v1543 = vrot.slane %v1542, 1
      %v1544 = vmax.f32 %v1542, %v1543
      %v1545 = vsel %vm893, %v770, -inf
      %v1546 = vrot.slane %v1545, 4
      %v1547 = vmax.f32 %v1545, %v1546
      %v1548 = vrot.slane %v1547, 2
      %v1549 = vmax.f32 %v1547, %v1548
      %v1550 = vrot.slane %v1549, 1
      %v1551 = vmax.f32 %v1549, %v1550
      %v1552 = vsel %vm893, %v771, -inf
      %v1553 = vrot.slane %v1552, 4
      %v1554 = vmax.f32 %v1552, %v1553
      %v1555 = vrot.slane %v1554, 2
      %v1556 = vmax.f32 %v1554, %v1555
      %v1557 = vrot.slane %v1556, 1
      %v1558 = vmax.f32 %v1556, %v1557
      %v1559 = vsel %vm893, %v772, -inf
      %v1560 = vrot.slane %v1559, 4
      %v1561 = vmax.f32 %v1559, %v1560
      %v1562 = vrot.slane %v1561, 2
      %v1563 = vmax.f32 %v1561, %v1562
      %v1564 = vrot.slane %v1563, 1
      %v1565 = vmax.f32 %v1563, %v1564
      %v1566 = vsel %vm893, %v661, -inf
      %v1567 = vrot.slane %v1566, 4
      %v1568 = vmax.f32 %v1566, %v1567
      %v1569 = vrot.slane %v1568, 2
      %v1570 = vmax.f32 %v1568, %v1569
      %v1571 = vrot.slane %v1570, 1
      %v1572 = vmax.f32 %v1570, %v1571
      %v1573 = vsel %vm893, %v773, -inf
      %v1574 = vrot.slane %v1573, 4
      %v1575 = vmax.f32 %v1573, %v1574
      %v1576 = vrot.slane %v1575, 2
      %v1577 = vmax.f32 %v1575, %v1576
      %v1578 = vrot.slane %v1577, 1
      %v1579 = vmax.f32 %v1577, %v1578
      %v1580 = vsel %vm893, %v774, -inf
      %v1581 = vrot.slane %v1580, 4
      %v1582 = vmax.f32 %v1580, %v1581
      %v1583 = vrot.slane %v1582, 2
      %v1584 = vmax.f32 %v1582, %v1583
      %v1585 = vrot.slane %v1584, 1
      %v1586 = vmax.f32 %v1584, %v1585
      %v1587 = vsel %vm893, %v775, -inf
      %v1588 = vrot.slane %v1587, 4
      %v1589 = vmax.f32 %v1587, %v1588
      %v1590 = vrot.slane %v1589, 2
      %v1591 = vmax.f32 %v1589, %v1590
      %v1592 = vrot.slane %v1591, 1
      %v1593 = vmax.f32 %v1591, %v1592
      %v1594 = vsel %vm893, %v662, -inf
      %v1595 = vrot.slane %v1594, 4
      %v1596 = vmax.f32 %v1594, %v1595
      %v1597 = vrot.slane %v1596, 2
      %v1598 = vmax.f32 %v1596, %v1597
      %v1599 = vrot.slane %v1598, 1
      %v1600 = vmax.f32 %v1598, %v1599
      %v1601 = vsel %vm893, %v776, -inf
      %v1602 = vrot.slane %v1601, 4
      %v1603 = vmax.f32 %v1601, %v1602
      %v1604 = vrot.slane %v1603, 2
      %v1605 = vmax.f32 %v1603, %v1604
      %v1606 = vrot.slane %v1605, 1
      %v1607 = vmax.f32 %v1605, %v1606
      %v1608 = vsel %vm893, %v777, -inf
      %v1609 = vrot.slane %v1608, 4
      %v1610 = vmax.f32 %v1608, %v1609
      %v1611 = vrot.slane %v1610, 2
      %v1612 = vmax.f32 %v1610, %v1611
      %v1613 = vrot.slane %v1612, 1
      %v1614 = vmax.f32 %v1612, %v1613
      %v1615 = vsel %vm893, %v778, -inf
      %v1616 = vrot.slane %v1615, 4
      %v1617 = vmax.f32 %v1615, %v1616
      %v1618 = vrot.slane %v1617, 2
      %v1619 = vmax.f32 %v1617, %v1618
      %v1620 = vrot.slane %v1619, 1
      %v1621 = vmax.f32 %v1619, %v1620
      %v1622 = vsel %vm893, %v663, -inf
      %v1623 = vrot.slane %v1622, 4
      %v1624 = vmax.f32 %v1622, %v1623
      %v1625 = vrot.slane %v1624, 2
      %v1626 = vmax.f32 %v1624, %v1625
      %v1627 = vrot.slane %v1626, 1
      %v1628 = vmax.f32 %v1626, %v1627
      %v1629 = vsel %vm893, %v779, -inf
      %v1630 = vrot.slane %v1629, 4
      %v1631 = vmax.f32 %v1629, %v1630
      %v1632 = vrot.slane %v1631, 2
      %v1633 = vmax.f32 %v1631, %v1632
      %v1634 = vrot.slane %v1633, 1
      %v1635 = vmax.f32 %v1633, %v1634
      %v1636 = vsel %vm893, %v780, -inf
      %v1637 = vrot.slane %v1636, 4
      %v1638 = vmax.f32 %v1636, %v1637
      %v1639 = vrot.slane %v1638, 2
      %v1640 = vmax.f32 %v1638, %v1639
      %v1641 = vrot.slane %v1640, 1
      %v1642 = vmax.f32 %v1640, %v1641
      %v1643 = vsel %vm893, %v781, -inf
      %v1644 = vrot.slane %v1643, 4
      %v1645 = vmax.f32 %v1643, %v1644
      %v1646 = vrot.slane %v1645, 2
      %v1647 = vmax.f32 %v1645, %v1646
      %v1648 = vrot.slane %v1647, 1
      %v1649 = vmax.f32 %v1647, %v1648
      %v1650 = vsel %vm893, %v664, -inf
      %v1651 = vrot.slane %v1650, 4
      %v1652 = vmax.f32 %v1650, %v1651
      %v1653 = vrot.slane %v1652, 2
      %v1654 = vmax.f32 %v1652, %v1653
      %v1655 = vrot.slane %v1654, 1
      %v1656 = vmax.f32 %v1654, %v1655
      %v1657 = vsel %vm893, %v782, -inf
      %v1658 = vrot.slane %v1657, 4
      %v1659 = vmax.f32 %v1657, %v1658
      %v1660 = vrot.slane %v1659, 2
      %v1661 = vmax.f32 %v1659, %v1660
      %v1662 = vrot.slane %v1661, 1
      %v1663 = vmax.f32 %v1661, %v1662
      %v1664 = vsel %vm893, %v783, -inf
      %v1665 = vrot.slane %v1664, 4
      %v1666 = vmax.f32 %v1664, %v1665
      %v1667 = vrot.slane %v1666, 2
      %v1668 = vmax.f32 %v1666, %v1667
      %v1669 = vrot.slane %v1668, 1
      %v1670 = vmax.f32 %v1668, %v1669
      %v1671 = vsel %vm893, %v784, -inf
      %v1672 = vrot.slane %v1671, 4
      %v1673 = vmax.f32 %v1671, %v1672
      %v1674 = vrot.slane %v1673, 2
      %v1675 = vmax.f32 %v1673, %v1674
      %v1676 = vrot.slane %v1675, 1
      %v1677 = vmax.f32 %v1675, %v1676
      %v1678 = vsel %vm893, %v665, -inf
      %v1679 = vrot.slane %v1678, 4
      %v1680 = vmax.f32 %v1678, %v1679
      %v1681 = vrot.slane %v1680, 2
      %v1682 = vmax.f32 %v1680, %v1681
      %v1683 = vrot.slane %v1682, 1
      %v1684 = vmax.f32 %v1682, %v1683
      %v1685 = vsel %vm893, %v785, -inf
      %v1686 = vrot.slane %v1685, 4
      %v1687 = vmax.f32 %v1685, %v1686
      %v1688 = vrot.slane %v1687, 2
      %v1689 = vmax.f32 %v1687, %v1688
      %v1690 = vrot.slane %v1689, 1
      %v1691 = vmax.f32 %v1689, %v1690
      %v1692 = vsel %vm893, %v786, -inf
      %v1693 = vrot.slane %v1692, 4
      %v1694 = vmax.f32 %v1692, %v1693
      %v1695 = vrot.slane %v1694, 2
      %v1696 = vmax.f32 %v1694, %v1695
      %v1697 = vrot.slane %v1696, 1
      %v1698 = vmax.f32 %v1696, %v1697
      %v1699 = vsel %vm893, %v787, -inf
      %v1700 = vrot.slane %v1699, 4
      %v1701 = vmax.f32 %v1699, %v1700
      %v1702 = vrot.slane %v1701, 2
      %v1703 = vmax.f32 %v1701, %v1702
      %v1704 = vrot.slane %v1703, 1
      %v1705 = vmax.f32 %v1703, %v1704
      %v1706 = vsel %vm893, %v666, -inf
      %v1707 = vrot.slane %v1706, 4
      %v1708 = vmax.f32 %v1706, %v1707
      %v1709 = vrot.slane %v1708, 2
      %v1710 = vmax.f32 %v1708, %v1709
      %v1711 = vrot.slane %v1710, 1
      %v1712 = vmax.f32 %v1710, %v1711
      %v1713 = vsel %vm893, %v788, -inf
      %v1714 = vrot.slane %v1713, 4
      %v1715 = vmax.f32 %v1713, %v1714
      %v1716 = vrot.slane %v1715, 2
      %v1717 = vmax.f32 %v1715, %v1716
      %v1718 = vrot.slane %v1717, 1
      %v1719 = vmax.f32 %v1717, %v1718
      %v1720 = vsel %vm893, %v789, -inf
      %v1721 = vrot.slane %v1720, 4
      %v1722 = vmax.f32 %v1720, %v1721
      %v1723 = vrot.slane %v1722, 2
      %v1724 = vmax.f32 %v1722, %v1723
      %v1725 = vrot.slane %v1724, 1
      %v1726 = vmax.f32 %v1724, %v1725
      %v1727 = vsel %vm893, %v790, -inf
      %v1728 = vrot.slane %v1727, 4
      %v1729 = vmax.f32 %v1727, %v1728
      %v1730 = vrot.slane %v1729, 2
      %v1731 = vmax.f32 %v1729, %v1730
      %v1732 = vrot.slane %v1731, 1
      %v1733 = vmax.f32 %v1731, %v1732
      %v1734 = vsel %vm893, %v667, -inf
      %v1735 = vrot.slane %v1734, 4
      %v1736 = vmax.f32 %v1734, %v1735
      %v1737 = vrot.slane %v1736, 2
      %v1738 = vmax.f32 %v1736, %v1737
      %v1739 = vrot.slane %v1738, 1
      %v1740 = vmax.f32 %v1738, %v1739
      %v1741 = vsel %vm893, %v791, -inf
      %v1742 = vrot.slane %v1741, 4
      %v1743 = vmax.f32 %v1741, %v1742
      %v1744 = vrot.slane %v1743, 2
      %v1745 = vmax.f32 %v1743, %v1744
      %v1746 = vrot.slane %v1745, 1
      %v1747 = vmax.f32 %v1745, %v1746
      %v1748 = vsel %vm893, %v792, -inf
      %v1749 = vrot.slane %v1748, 4
      %v1750 = vmax.f32 %v1748, %v1749
      %v1751 = vrot.slane %v1750, 2
      %v1752 = vmax.f32 %v1750, %v1751
      %v1753 = vrot.slane %v1752, 1
      %v1754 = vmax.f32 %v1752, %v1753
      %v1755 = vsel %vm893, %v793, -inf
      %v1756 = vrot.slane %v1755, 4
      %v1757 = vmax.f32 %v1755, %v1756
      %v1758 = vrot.slane %v1757, 2
      %v1759 = vmax.f32 %v1757, %v1758
      %v1760 = vrot.slane %v1759, 1
      %v1761 = vmax.f32 %v1759, %v1760
      %v1762 = vsel %vm893, %v668, -inf
      %v1763 = vrot.slane %v1762, 4
      %v1764 = vmax.f32 %v1762, %v1763
      %v1765 = vrot.slane %v1764, 2
      %v1766 = vmax.f32 %v1764, %v1765
      %v1767 = vrot.slane %v1766, 1
      %v1768 = vmax.f32 %v1766, %v1767
      %v1769 = vsel %vm893, %v794, -inf
      %v1770 = vrot.slane %v1769, 4
      %v1771 = vmax.f32 %v1769, %v1770
      %v1772 = vrot.slane %v1771, 2
      %v1773 = vmax.f32 %v1771, %v1772
      %v1774 = vrot.slane %v1773, 1
      %v1775 = vmax.f32 %v1773, %v1774
      %v1776 = vsel %vm893, %v795, -inf
      %v1777 = vrot.slane %v1776, 4
      %v1778 = vmax.f32 %v1776, %v1777
      %v1779 = vrot.slane %v1778, 2
      %v1780 = vmax.f32 %v1778, %v1779
      %v1781 = vrot.slane %v1780, 1
      %v1782 = vmax.f32 %v1780, %v1781
      %v1783 = vsel %vm893, %v796, -inf
      %v1784 = vrot.slane %v1783, 4
      %v1785 = vmax.f32 %v1783, %v1784
      %v1786 = vrot.slane %v1785, 2
      %v1787 = vmax.f32 %v1785, %v1786
      %v1788 = vrot.slane %v1787, 1
      %v1789 = vmax.f32 %v1787, %v1788
      %vm1790 = vcmask 261120
      %v1791 = vsel %vm1790, %v900, -inf
      %v1792 = vsel %vm1790, %v956, -inf
      %v1793 = vmax.f32 %v1791, %v1792
      %v1794 = vsel %vm1790, %v907, -inf
      %v1795 = vsel %vm1790, %v963, -inf
      %v1796 = vmax.f32 %v1794, %v1795
      %v1797 = vsel %vm1790, %v914, -inf
      %v1798 = vsel %vm1790, %v970, -inf
      %v1799 = vmax.f32 %v1797, %v1798
      %v1800 = vsel %vm1790, %v921, -inf
      %v1801 = vsel %vm1790, %v977, -inf
      %v1802 = vmax.f32 %v1800, %v1801
      %v1803 = vsel %vm1790, %v928, -inf
      %v1804 = vsel %vm1790, %v984, -inf
      %v1805 = vmax.f32 %v1803, %v1804
      %v1806 = vsel %vm1790, %v935, -inf
      %v1807 = vsel %vm1790, %v991, -inf
      %v1808 = vmax.f32 %v1806, %v1807
      %v1809 = vsel %vm1790, %v942, -inf
      %v1810 = vsel %vm1790, %v998, -inf
      %v1811 = vmax.f32 %v1809, %v1810
      %v1812 = vsel %vm1790, %v949, -inf
      %v1813 = vsel %vm1790, %v1005, -inf
      %v1814 = vmax.f32 %v1812, %v1813
      %v1815 = vsel %vm1790, %v1012, -inf
      %v1816 = vsel %vm1790, %v1068, -inf
      %v1817 = vmax.f32 %v1815, %v1816
      %v1818 = vsel %vm1790, %v1019, -inf
      %v1819 = vsel %vm1790, %v1075, -inf
      %v1820 = vmax.f32 %v1818, %v1819
      %v1821 = vsel %vm1790, %v1026, -inf
      %v1822 = vsel %vm1790, %v1082, -inf
      %v1823 = vmax.f32 %v1821, %v1822
      %v1824 = vsel %vm1790, %v1033, -inf
      %v1825 = vsel %vm1790, %v1089, -inf
      %v1826 = vmax.f32 %v1824, %v1825
      %v1827 = vsel %vm1790, %v1040, -inf
      %v1828 = vsel %vm1790, %v1096, -inf
      %v1829 = vmax.f32 %v1827, %v1828
      %v1830 = vsel %vm1790, %v1047, -inf
      %v1831 = vsel %vm1790, %v1103, -inf
      %v1832 = vmax.f32 %v1830, %v1831
      %v1833 = vsel %vm1790, %v1054, -inf
      %v1834 = vsel %vm1790, %v1110, -inf
      %v1835 = vmax.f32 %v1833, %v1834
      %v1836 = vsel %vm1790, %v1061, -inf
      %v1837 = vsel %vm1790, %v1117, -inf
      %v1838 = vmax.f32 %v1836, %v1837
      %v1839 = vsel %vm1790, %v1124, -inf
      %v1840 = vsel %vm1790, %v1180, -inf
      %v1841 = vmax.f32 %v1839, %v1840
      %v1842 = vsel %vm1790, %v1131, -inf
      %v1843 = vsel %vm1790, %v1187, -inf
      %v1844 = vmax.f32 %v1842, %v1843
      %v1845 = vsel %vm1790, %v1138, -inf
      %v1846 = vsel %vm1790, %v1194, -inf
      %v1847 = vmax.f32 %v1845, %v1846
      %v1848 = vsel %vm1790, %v1145, -inf
      %v1849 = vsel %vm1790, %v1201, -inf
      %v1850 = vmax.f32 %v1848, %v1849
      %v1851 = vsel %vm1790, %v1152, -inf
      %v1852 = vsel %vm1790, %v1208, -inf
      %v1853 = vmax.f32 %v1851, %v1852
      %v1854 = vsel %vm1790, %v1159, -inf
      %v1855 = vsel %vm1790, %v1215, -inf
      %v1856 = vmax.f32 %v1854, %v1855
      %v1857 = vsel %vm1790, %v1166, -inf
      %v1858 = vsel %vm1790, %v1222, -inf
      %v1859 = vmax.f32 %v1857, %v1858
      %v1860 = vsel %vm1790, %v1173, -inf
      %v1861 = vsel %vm1790, %v1229, -inf
      %v1862 = vmax.f32 %v1860, %v1861
      %v1863 = vsel %vm1790, %v1236, -inf
      %v1864 = vsel %vm1790, %v1292, -inf
      %v1865 = vmax.f32 %v1863, %v1864
      %v1866 = vsel %vm1790, %v1243, -inf
      %v1867 = vsel %vm1790, %v1299, -inf
      %v1868 = vmax.f32 %v1866, %v1867
      %v1869 = vsel %vm1790, %v1250, -inf
      %v1870 = vsel %vm1790, %v1306, -inf
      %v1871 = vmax.f32 %v1869, %v1870
      %v1872 = vsel %vm1790, %v1257, -inf
      %v1873 = vsel %vm1790, %v1313, -inf
      %v1874 = vmax.f32 %v1872, %v1873
      %v1875 = vsel %vm1790, %v1264, -inf
      %v1876 = vsel %vm1790, %v1320, -inf
      %v1877 = vmax.f32 %v1875, %v1876
      %v1878 = vsel %vm1790, %v1271, -inf
      %v1879 = vsel %vm1790, %v1327, -inf
      %v1880 = vmax.f32 %v1878, %v1879
      %v1881 = vsel %vm1790, %v1278, -inf
      %v1882 = vsel %vm1790, %v1334, -inf
      %v1883 = vmax.f32 %v1881, %v1882
      %v1884 = vsel %vm1790, %v1285, -inf
      %v1885 = vsel %vm1790, %v1341, -inf
      %v1886 = vmax.f32 %v1884, %v1885
      %v1887 = vsel %vm1790, %v1348, -inf
      %v1888 = vsel %vm1790, %v1404, -inf
      %v1889 = vmax.f32 %v1887, %v1888
      %v1890 = vsel %vm1790, %v1355, -inf
      %v1891 = vsel %vm1790, %v1411, -inf
      %v1892 = vmax.f32 %v1890, %v1891
      %v1893 = vsel %vm1790, %v1362, -inf
      %v1894 = vsel %vm1790, %v1418, -inf
      %v1895 = vmax.f32 %v1893, %v1894
      %v1896 = vsel %vm1790, %v1369, -inf
      %v1897 = vsel %vm1790, %v1425, -inf
      %v1898 = vmax.f32 %v1896, %v1897
      %v1899 = vsel %vm1790, %v1376, -inf
      %v1900 = vsel %vm1790, %v1432, -inf
      %v1901 = vmax.f32 %v1899, %v1900
      %v1902 = vsel %vm1790, %v1383, -inf
      %v1903 = vsel %vm1790, %v1439, -inf
      %v1904 = vmax.f32 %v1902, %v1903
      %v1905 = vsel %vm1790, %v1390, -inf
      %v1906 = vsel %vm1790, %v1446, -inf
      %v1907 = vmax.f32 %v1905, %v1906
      %v1908 = vsel %vm1790, %v1397, -inf
      %v1909 = vsel %vm1790, %v1453, -inf
      %v1910 = vmax.f32 %v1908, %v1909
      %v1911 = vsel %vm1790, %v1460, -inf
      %v1912 = vsel %vm1790, %v1516, -inf
      %v1913 = vmax.f32 %v1911, %v1912
      %v1914 = vsel %vm1790, %v1467, -inf
      %v1915 = vsel %vm1790, %v1523, -inf
      %v1916 = vmax.f32 %v1914, %v1915
      %v1917 = vsel %vm1790, %v1474, -inf
      %v1918 = vsel %vm1790, %v1530, -inf
      %v1919 = vmax.f32 %v1917, %v1918
      %v1920 = vsel %vm1790, %v1481, -inf
      %v1921 = vsel %vm1790, %v1537, -inf
      %v1922 = vmax.f32 %v1920, %v1921
      %v1923 = vsel %vm1790, %v1488, -inf
      %v1924 = vsel %vm1790, %v1544, -inf
      %v1925 = vmax.f32 %v1923, %v1924
      %v1926 = vsel %vm1790, %v1495, -inf
      %v1927 = vsel %vm1790, %v1551, -inf
      %v1928 = vmax.f32 %v1926, %v1927
      %v1929 = vsel %vm1790, %v1502, -inf
      %v1930 = vsel %vm1790, %v1558, -inf
      %v1931 = vmax.f32 %v1929, %v1930
      %v1932 = vsel %vm1790, %v1509, -inf
      %v1933 = vsel %vm1790, %v1565, -inf
      %v1934 = vmax.f32 %v1932, %v1933
      %v1935 = vsel %vm1790, %v1572, -inf
      %v1936 = vsel %vm1790, %v1628, -inf
      %v1937 = vmax.f32 %v1935, %v1936
      %v1938 = vsel %vm1790, %v1579, -inf
      %v1939 = vsel %vm1790, %v1635, -inf
      %v1940 = vmax.f32 %v1938, %v1939
      %v1941 = vsel %vm1790, %v1586, -inf
      %v1942 = vsel %vm1790, %v1642, -inf
      %v1943 = vmax.f32 %v1941, %v1942
      %v1944 = vsel %vm1790, %v1593, -inf
      %v1945 = vsel %vm1790, %v1649, -inf
      %v1946 = vmax.f32 %v1944, %v1945
      %v1947 = vsel %vm1790, %v1600, -inf
      %v1948 = vsel %vm1790, %v1656, -inf
      %v1949 = vmax.f32 %v1947, %v1948
      %v1950 = vsel %vm1790, %v1607, -inf
      %v1951 = vsel %vm1790, %v1663, -inf
      %v1952 = vmax.f32 %v1950, %v1951
      %v1953 = vsel %vm1790, %v1614, -inf
      %v1954 = vsel %vm1790, %v1670, -inf
      %v1955 = vmax.f32 %v1953, %v1954
      %v1956 = vsel %vm1790, %v1621, -inf
      %v1957 = vsel %vm1790, %v1677, -inf
      %v1958 = vmax.f32 %v1956, %v1957
      %v1959 = vsel %vm1790, %v1684, -inf
      %v1960 = vsel %vm1790, %v1740, -inf
      %v1961 = vmax.f32 %v1959, %v1960
      %v1962 = vsel %vm1790, %v1691, -inf
      %v1963 = vsel %vm1790, %v1747, -inf
      %v1964 = vmax.f32 %v1962, %v1963
      %v1965 = vsel %vm1790, %v1698, -inf
      %v1966 = vsel %vm1790, %v1754, -inf
      %v1967 = vmax.f32 %v1965, %v1966
      %v1968 = vsel %vm1790, %v1705, -inf
      %v1969 = vsel %vm1790, %v1761, -inf
      %v1970 = vmax.f32 %v1968, %v1969
      %v1971 = vsel %vm1790, %v1712, -inf
      %v1972 = vsel %vm1790, %v1768, -inf
      %v1973 = vmax.f32 %v1971, %v1972
      %v1974 = vsel %vm1790, %v1719, -inf
      %v1975 = vsel %vm1790, %v1775, -inf
      %v1976 = vmax.f32 %v1974, %v1975
      %v1977 = vsel %vm1790, %v1726, -inf
      %v1978 = vsel %vm1790, %v1782, -inf
      %v1979 = vmax.f32 %v1977, %v1978
      %v1980 = vsel %vm1790, %v1733, -inf
      %v1981 = vsel %vm1790, %v1789, -inf
      %v1982 = vmax.f32 %v1980, %v1981
      %1983 = vst.msk [vmem:[#allocation2] sm:$0xff] %vm1790, 0.0
      %1984 = vst.msk [vmem:[#allocation2 + $0x8] sm:$0x3] %vm893, 0.0
      %1985 = vst.msk [vmem:[#allocation2 + $0x10] sm:$0xff] %vm1790, 0.0
      %1986 = vst.msk [vmem:[#allocation2 + $0x18] sm:$0x3] %vm893, 0.0
      %1987 = vst.msk [vmem:[#allocation2 + $0x20] sm:$0xff] %vm1790, 0.0
      %1988 = vst.msk [vmem:[#allocation2 + $0x28] sm:$0x3] %vm893, 0.0
      %1989 = vst.msk [vmem:[#allocation2 + $0x30] sm:$0xff] %vm1790, 0.0
      %1990 = vst.msk [vmem:[#allocation2 + $0x38] sm:$0x3] %vm893, 0.0
      %1991 = vst.msk [vmem:[#allocation2 + $0x40] sm:$0xff] %vm1790, 0.0
      %1992 = vst.msk [vmem:[#allocation2 + $0x48] sm:$0x3] %vm893, 0.0
      %1993 = vst.msk [vmem:[#allocation2 + $0x50] sm:$0xff] %vm1790, 0.0
      %1994 = vst.msk [vmem:[#allocation2 + $0x58] sm:$0x3] %vm893, 0.0
      %1995 = vst.msk [vmem:[#allocation2 + $0x60] sm:$0xff] %vm1790, 0.0
      %1996 = vst.msk [vmem:[#allocation2 + $0x68] sm:$0x3] %vm893, 0.0
      %1997 = vst.msk [vmem:[#allocation2 + $0x70] sm:$0xff] %vm1790, 0.0
      %1998 = vst.msk [vmem:[#allocation2 + $0x78] sm:$0x3] %vm893, 0.0
      %1999 = vst.msk [vmem:[#allocation2 + $0x80] sm:$0xff] %vm1790, 0.0
      %2000 = vst.msk [vmem:[#allocation2 + $0x88] sm:$0x3] %vm893, 0.0
      %2001 = vst.msk [vmem:[#allocation2 + $0x90] sm:$0xff] %vm1790, 0.0
      %2002 = vst.msk [vmem:[#allocation2 + $0x98] sm:$0x3] %vm893, 0.0
      %vm2067 = vcmask 1041409
      %v2068 = vsel %vm2067, %v1796, %v1793
      %vm2069 = vcmask 1042434
      %v2070 = vsel %vm2069, %v1799, %v2068
      %vm2071 = vcmask 1043459
      %v2072 = vsel %vm2071, %v1802, %v2070
      %vm2073 = vcmask 1044484
      %v2074 = vsel %vm2073, %v1805, %v2072
      %vm2075 = vcmask 1045509
      %v2076 = vsel %vm2075, %v1808, %v2074
      %vm2077 = vcmask 1046534
      %v2078 = vsel %vm2077, %v1811, %v2076
      %vm2079 = vcmask 1047559
      %v2080 = vsel %vm2079, %v1814, %v2078
      %v2081 = vsel %vm2067, %v1820, %v1817
      %v2082 = vsel %vm2069, %v1823, %v2081
      %v2083 = vsel %vm2071, %v1826, %v2082
      %v2084 = vsel %vm2073, %v1829, %v2083
      %v2085 = vsel %vm2075, %v1832, %v2084
      %v2086 = vsel %vm2077, %v1835, %v2085
      %v2087 = vsel %vm2079, %v1838, %v2086
      %v2088 = vsel %vm2067, %v1844, %v1841
      %v2089 = vsel %vm2069, %v1847, %v2088
      %v2090 = vsel %vm2071, %v1850, %v2089
      %v2091 = vsel %vm2073, %v1853, %v2090
      %v2092 = vsel %vm2075, %v1856, %v2091
      %v2093 = vsel %vm2077, %v1859, %v2092
      %v2094 = vsel %vm2079, %v1862, %v2093
      %v2095 = vsel %vm2067, %v1868, %v1865
      %v2096 = vsel %vm2069, %v1871, %v2095
      %v2097 = vsel %vm2071, %v1874, %v2096
      %v2098 = vsel %vm2073, %v1877, %v2097
      %v2099 = vsel %vm2075, %v1880, %v2098
      %v2100 = vsel %vm2077, %v1883, %v2099
      %v2101 = vsel %vm2079, %v1886, %v2100
      %v2102 = vsel %vm2067, %v1892, %v1889
      %v2103 = vsel %vm2069, %v1895, %v2102
      %v2104 = vsel %vm2071, %v1898, %v2103
      %v2105 = vsel %vm2073, %v1901, %v2104
      %v2106 = vsel %vm2075, %v1904, %v2105
      %v2107 = vsel %vm2077, %v1907, %v2106
      %v2108 = vsel %vm2079, %v1910, %v2107
      %v2109 = vsel %vm2067, %v1916, %v1913
      %v2110 = vsel %vm2069, %v1919, %v2109
      %v2111 = vsel %vm2071, %v1922, %v2110
      %v2112 = vsel %vm2073, %v1925, %v2111
      %v2113 = vsel %vm2075, %v1928, %v2112
      %v2114 = vsel %vm2077, %v1931, %v2113
      %v2115 = vsel %vm2079, %v1934, %v2114
      %v2116 = vsel %vm2067, %v1940, %v1937
      %v2117 = vsel %vm2069, %v1943, %v2116
      %v2118 = vsel %vm2071, %v1946, %v2117
      %v2119 = vsel %vm2073, %v1949, %v2118
      %v2120 = vsel %vm2075, %v1952, %v2119
      %v2121 = vsel %vm2077, %v1955, %v2120
      %v2122 = vsel %vm2079, %v1958, %v2121
      %v2123 = vsel %vm2067, %v1964, %v1961
      %v2124 = vsel %vm2069, %v1967, %v2123
      %v2125 = vsel %vm2071, %v1970, %v2124
      %v2126 = vsel %vm2073, %v1973, %v2125
      %v2127 = vsel %vm2075, %v1976, %v2126
      %v2128 = vsel %vm2077, %v1979, %v2127
      %v2129 = vsel %vm2079, %v1982, %v2128
      %s2138 = scalar_lea.vmem [#allocation2], 16
      %2139 = vst.msk [vmem:[%s2138 + $0x1] sm:$0xff] %vm1790, %v2080
      %2140 = vst.msk [vmem:[%s2138 + $0x11] sm:$0xff] %vm1790, %v2087
      %2141 = vst.msk [vmem:[%s2138 + $0x21] sm:$0xff] %vm1790, %v2094
      %2142 = vst.msk [vmem:[%s2138 + $0x31] sm:$0xff] %vm1790, %v2101
      %2143 = vst.msk [vmem:[%s2138 + $0x41] sm:$0xff] %vm1790, %v2108
      %2144 = vst.msk [vmem:[%s2138 + $0x51] sm:$0xff] %vm1790, %v2115
      %2145 = vst.msk [vmem:[%s2138 + $0x61] sm:$0xff] %vm1790, %v2122
      %2146 = vst.msk [vmem:[%s2138 + $0x71] sm:$0xff] %vm1790, %v2129
      %v2147 = vld [vmem:[#allocation2] sm:$0xff]
      %v2148 = vld [vmem:[#allocation2 + $0x10] sm:$0xff]
      %v2149 = vld [vmem:[#allocation2 + $0x20] sm:$0xff]
      %v2150 = vld [vmem:[#allocation2 + $0x30] sm:$0xff]
      %v2151 = vld [vmem:[#allocation2 + $0x40] sm:$0xff]
      %v2152 = vld [vmem:[#allocation2 + $0x50] sm:$0xff]
      %v2153 = vld [vmem:[#allocation2 + $0x60] sm:$0xff]
      %v2154 = vld [vmem:[#allocation2 + $0x70] sm:$0xff]
      %v2155 = vld [vmem:[%s3] sm:$0xff]
      %v2156 = vld [vmem:[%s3 + $0x8] sm:$0xff]
      %v2157 = vld [vmem:[%s3 + $0x10] sm:$0xff]
      %v2158 = vld [vmem:[%s3 + $0x18] sm:$0xff]
      %v2159 = vld [vmem:[#allocation2 + $0x1] sm:$0xff]
      %v2160 = vld [vmem:[#allocation2 + $0x11] sm:$0xff]
      %v2161 = vld [vmem:[#allocation2 + $0x21] sm:$0xff]
      %v2162 = vld [vmem:[#allocation2 + $0x31] sm:$0xff]
      %v2163 = vld [vmem:[#allocation2 + $0x41] sm:$0xff]
      %v2164 = vld [vmem:[#allocation2 + $0x51] sm:$0xff]
      %v2165 = vld [vmem:[#allocation2 + $0x61] sm:$0xff]
      %v2166 = vld [vmem:[#allocation2 + $0x71] sm:$0xff]
      %s2167 = scalar_lea.vmem %s3, 32
      %v2168 = vld [vmem:[%s2167] sm:$0xff]
      %v2169 = vld [vmem:[%s2167 + $0x8] sm:$0xff]
      %v2170 = vld [vmem:[%s2167 + $0x10] sm:$0xff]
      %v2171 = vld [vmem:[%s2167 + $0x18] sm:$0xff]
      %v2173 = vsel %vm1790, %v2159, 0
      %v2176 = vsel %vm1790, %v2160, 0
      %v2179 = vsel %vm1790, %v2161, 0
      %v2182 = vsel %vm1790, %v2162, 0
      %v2185 = vsel %vm1790, %v2163, 0
      %v2188 = vsel %vm1790, %v2164, 0
      %v2191 = vsel %vm1790, %v2165, 0
      %v2194 = vsel %vm1790, %v2166, 0
      %2196 = vmatpush.msra.mxu0 0.0
      %2197 = vmatpush.msra.mxu0 0.0
      %2198 = vmatpush.msra.mxu0 0.0
      %2199 = vmatpush.msra.mxu0 0.0
      %2200 = vmatpush.msra.mxu0 0.0
      %2201 = vmatpush.msra.mxu0 0.0
      %2202 = vmatpush.msra.mxu0 0.0
      %2203 = vmatpush.msra.mxu0 0.0
      %2204 = vmatpush.msra.mxu0 0.0
      %2205 = vmatpush.msra.mxu0 0.0
      %2206 = vmatpush.msra.mxu0 0.0
      %2207 = vmatpush.msra.mxu0 0.0
      %2208 = vmatpush.msra.mxu0 %v2171
      %2209 = vmatpush.msra.mxu0 %v2170
      %2210 = vmatpush.msra.mxu0 %v2169
      %2211 = vmatpush.msra.mxu0 %v2168
      %2212 = vmatmul.f32.gmra.mxu0 %v2173
      %v2213 = vpop.f32.mrf.mxu0
      %v2214 = vadd.f32 0.0, %v2213
      %2215 = vmatmul.f32.gmra.mxu0 %v2176
      %v2216 = vpop.f32.mrf.mxu0
      %v2217 = vadd.f32 0.0, %v2216
      %2218 = vmatmul.f32.gmra.mxu0 %v2179
      %v2219 = vpop.f32.mrf.mxu0
      %v2220 = vadd.f32 0.0, %v2219
      %2221 = vmatmul.f32.gmra.mxu0 %v2182
      %v2222 = vpop.f32.mrf.mxu0
      %v2223 = vadd.f32 0.0, %v2222
      %2224 = vmatmul.f32.gmra.mxu0 %v2185
      %v2225 = vpop.f32.mrf.mxu0
      %v2226 = vadd.f32 0.0, %v2225
      %2227 = vmatmul.f32.gmra.mxu0 %v2188
      %v2228 = vpop.f32.mrf.mxu0
      %v2229 = vadd.f32 0.0, %v2228
      %2230 = vmatmul.f32.gmra.mxu0 %v2191
      %v2231 = vpop.f32.mrf.mxu0
      %v2232 = vadd.f32 0.0, %v2231
      %2233 = vmatmul.f32.gmra.mxu0 %v2194
      %v2234 = vpop.f32.mrf.mxu0
      %v2235 = vadd.f32 0.0, %v2234
      %2236 = vdwg.mxu0
      %v2238 = vsel %vm1790, %v2147, 0
      %v2241 = vsel %vm1790, %v2148, 0
      %v2244 = vsel %vm1790, %v2149, 0
      %v2247 = vsel %vm1790, %v2150, 0
      %v2250 = vsel %vm1790, %v2151, 0
      %v2253 = vsel %vm1790, %v2152, 0
      %v2256 = vsel %vm1790, %v2153, 0
      %v2259 = vsel %vm1790, %v2154, 0
      %2261 = vmatpush.msra.mxu0 0.0
      %2262 = vmatpush.msra.mxu0 0.0
      %2263 = vmatpush.msra.mxu0 0.0
      %2264 = vmatpush.msra.mxu0 0.0
      %2265 = vmatpush.msra.mxu0 0.0
      %2266 = vmatpush.msra.mxu0 0.0
      %2267 = vmatpush.msra.mxu0 0.0
      %2268 = vmatpush.msra.mxu0 0.0
      %2269 = vmatpush.msra.mxu0 0.0
      %2270 = vmatpush.msra.mxu0 0.0
      %2271 = vmatpush.msra.mxu0 0.0
      %2272 = vmatpush.msra.mxu0 0.0
      %2273 = vmatpush.msra.mxu0 %v2158
      %2274 = vmatpush.msra.mxu0 %v2157
      %2275 = vmatpush.msra.mxu0 %v2156
      %2276 = vmatpush.msra.mxu0 %v2155
      %2277 = vmatmul.f32.gmra.mxu0 %v2238
      %v2278 = vpop.f32.mrf.mxu0
      %v2279 = vadd.f32 %v2214, %v2278
      %2280 = vmatmul.f32.gmra.mxu0 %v2241
      %v2281 = vpop.f32.mrf.mxu0
      %v2282 = vadd.f32 %v2217, %v2281
      %2283 = vmatmul.f32.gmra.mxu0 %v2244
      %v2284 = vpop.f32.mrf.mxu0
      %v2285 = vadd.f32 %v2220, %v2284
      %2286 = vmatmul.f32.gmra.mxu0 %v2247
      %v2287 = vpop.f32.mrf.mxu0
      %v2288 = vadd.f32 %v2223, %v2287
      %2289 = vmatmul.f32.gmra.mxu0 %v2250
      %v2290 = vpop.f32.mrf.mxu0
      %v2291 = vadd.f32 %v2226, %v2290
      %2292 = vmatmul.f32.gmra.mxu0 %v2253
      %v2293 = vpop.f32.mrf.mxu0
      %v2294 = vadd.f32 %v2229, %v2293
      %2295 = vmatmul.f32.gmra.mxu0 %v2256
      %v2296 = vpop.f32.mrf.mxu0
      %v2297 = vadd.f32 %v2232, %v2296
      %2298 = vmatmul.f32.gmra.mxu0 %v2259
      %v2299 = vpop.f32.mrf.mxu0
      %v2300 = vadd.f32 %v2235, %v2299
      %2301 = vdwg.mxu0
      %v2302 = vld [vmem:[#allocation2 + $0x2] sm:$0xff]
      %v2303 = vld [vmem:[#allocation2 + $0x12] sm:$0xff]
      %v2304 = vld [vmem:[#allocation2 + $0x22] sm:$0xff]
      %v2305 = vld [vmem:[#allocation2 + $0x32] sm:$0xff]
      %v2306 = vld [vmem:[#allocation2 + $0x42] sm:$0xff]
      %v2307 = vld [vmem:[#allocation2 + $0x52] sm:$0xff]
      %v2308 = vld [vmem:[#allocation2 + $0x62] sm:$0xff]
      %v2309 = vld [vmem:[#allocation2 + $0x72] sm:$0xff]
      %s2310 = scalar_lea.vmem %s3, 64
      %v2311 = vld [vmem:[%s2310] sm:$0xff]
      %v2312 = vld [vmem:[%s2310 + $0x8] sm:$0xff]
      %v2313 = vld [vmem:[%s2310 + $0x10] sm:$0xff]
      %v2314 = vld [vmem:[%s2310 + $0x18] sm:$0xff]
      %v2316 = vsel %vm1790, %v2302, 0
      %v2319 = vsel %vm1790, %v2303, 0
      %v2322 = vsel %vm1790, %v2304, 0
      %v2325 = vsel %vm1790, %v2305, 0
      %v2328 = vsel %vm1790, %v2306, 0
      %v2331 = vsel %vm1790, %v2307, 0
      %v2334 = vsel %vm1790, %v2308, 0
      %v2337 = vsel %vm1790, %v2309, 0
      %2339 = vmatpush.msra.mxu0 0.0
      %2340 = vmatpush.msra.mxu0 0.0
      %2341 = vmatpush.msra.mxu0 0.0
      %2342 = vmatpush.msra.mxu0 0.0
      %2343 = vmatpush.msra.mxu0 0.0
      %2344 = vmatpush.msra.mxu0 0.0
      %2345 = vmatpush.msra.mxu0 0.0
      %2346 = vmatpush.msra.mxu0 0.0
      %2347 = vmatpush.msra.mxu0 0.0
      %2348 = vmatpush.msra.mxu0 0.0
      %2349 = vmatpush.msra.mxu0 0.0
      %2350 = vmatpush.msra.mxu0 0.0
      %2351 = vmatpush.msra.mxu0 %v2314
      %2352 = vmatpush.msra.mxu0 %v2313
      %2353 = vmatpush.msra.mxu0 %v2312
      %2354 = vmatpush.msra.mxu0 %v2311
      %2355 = vmatmul.f32.gmra.mxu0 %v2316
      %v2356 = vpop.f32.mrf.mxu0
      %v2357 = vadd.f32 0.0, %v2356
      %2358 = vmatmul.f32.gmra.mxu0 %v2319
      %v2359 = vpop.f32.mrf.mxu0
      %v2360 = vadd.f32 0.0, %v2359
      %2361 = vmatmul.f32.gmra.mxu0 %v2322
      %v2362 = vpop.f32.mrf.mxu0
      %v2363 = vadd.f32 0.0, %v2362
      %2364 = vmatmul.f32.gmra.mxu0 %v2325
      %v2365 = vpop.f32.mrf.mxu0
      %v2366 = vadd.f32 0.0, %v2365
      %2367 = vmatmul.f32.gmra.mxu0 %v2328
      %v2368 = vpop.f32.mrf.mxu0
      %v2369 = vadd.f32 0.0, %v2368
      %2370 = vmatmul.f32.gmra.mxu0 %v2331
      %v2371 = vpop.f32.mrf.mxu0
      %v2372 = vadd.f32 0.0, %v2371
      %2373 = vmatmul.f32.gmra.mxu0 %v2334
      %v2374 = vpop.f32.mrf.mxu0
      %v2375 = vadd.f32 0.0, %v2374
      %2376 = vmatmul.f32.gmra.mxu0 %v2337
      %v2377 = vpop.f32.mrf.mxu0
      %v2378 = vadd.f32 0.0, %v2377
      %2379 = vdwg.mxu0
      %v2380 = vadd.f32 %v2279, %v2357
      %v2381 = vadd.f32 %v2282, %v2360
      %v2382 = vadd.f32 %v2285, %v2363
      %v2383 = vadd.f32 %v2288, %v2366
      %v2384 = vadd.f32 %v2291, %v2369
      %v2385 = vadd.f32 %v2294, %v2372
      %v2386 = vadd.f32 %v2297, %v2375
      %v2387 = vadd.f32 %v2300, %v2378
      %v2388 = vld [vmem:[%s2138] sm:$0xff]
      %v2389 = vld [vmem:[%s2138 + $0x10] sm:$0xff]
      %v2390 = vld [vmem:[%s2138 + $0x20] sm:$0xff]
      %v2391 = vld [vmem:[%s2138 + $0x30] sm:$0xff]
      %v2392 = vld [vmem:[%s2138 + $0x40] sm:$0xff]
      %v2393 = vld [vmem:[%s2138 + $0x50] sm:$0xff]
      %v2394 = vld [vmem:[%s2138 + $0x60] sm:$0xff]
      %v2395 = vld [vmem:[%s2138 + $0x70] sm:$0xff]
      %s2396 = scalar_lea.vmem %s3, 96
      %v2397 = vld [vmem:[%s2396] sm:$0xff]
      %v2398 = vld [vmem:[%s2396 + $0x8] sm:$0xff]
      %v2399 = vld [vmem:[%s2396 + $0x10] sm:$0xff]
      %v2400 = vld [vmem:[%s2396 + $0x18] sm:$0xff]
      %v2402 = vsel %vm1790, %v2388, 0
      %v2405 = vsel %vm1790, %v2389, 0
      %v2408 = vsel %vm1790, %v2390, 0
      %v2411 = vsel %vm1790, %v2391, 0
      %v2414 = vsel %vm1790, %v2392, 0
      %v2417 = vsel %vm1790, %v2393, 0
      %v2420 = vsel %vm1790, %v2394, 0
      %v2423 = vsel %vm1790, %v2395, 0
      %2425 = vmatpush.msra.mxu0 0.0
      %2426 = vmatpush.msra.mxu0 0.0
      %2427 = vmatpush.msra.mxu0 0.0
      %2428 = vmatpush.msra.mxu0 0.0
      %2429 = vmatpush.msra.mxu0 0.0
      %2430 = vmatpush.msra.mxu0 0.0
      %2431 = vmatpush.msra.mxu0 0.0
      %2432 = vmatpush.msra.mxu0 0.0
      %2433 = vmatpush.msra.mxu0 0.0
      %2434 = vmatpush.msra.mxu0 0.0
      %2435 = vmatpush.msra.mxu0 0.0
      %2436 = vmatpush.msra.mxu0 0.0
      %2437 = vmatpush.msra.mxu0 %v2400
      %2438 = vmatpush.msra.mxu0 %v2399
      %2439 = vmatpush.msra.mxu0 %v2398
      %2440 = vmatpush.msra.mxu0 %v2397
      %2441 = vmatmul.f32.gmra.mxu0 %v2402
      %v2442 = vpop.f32.mrf.mxu0
      %v2443 = vadd.f32 0.0, %v2442
      %2444 = vmatmul.f32.gmra.mxu0 %v2405
      %v2445 = vpop.f32.mrf.mxu0
      %v2446 = vadd.f32 0.0, %v2445
      %2447 = vmatmul.f32.gmra.mxu0 %v2408
      %v2448 = vpop.f32.mrf.mxu0
      %v2449 = vadd.f32 0.0, %v2448
      %2450 = vmatmul.f32.gmra.mxu0 %v2411
      %v2451 = vpop.f32.mrf.mxu0
      %v2452 = vadd.f32 0.0, %v2451
      %2453 = vmatmul.f32.gmra.mxu0 %v2414
      %v2454 = vpop.f32.mrf.mxu0
      %v2455 = vadd.f32 0.0, %v2454
      %2456 = vmatmul.f32.gmra.mxu0 %v2417
      %v2457 = vpop.f32.mrf.mxu0
      %v2458 = vadd.f32 0.0, %v2457
      %2459 = vmatmul.f32.gmra.mxu0 %v2420
      %v2460 = vpop.f32.mrf.mxu0
      %v2461 = vadd.f32 0.0, %v2460
      %2462 = vmatmul.f32.gmra.mxu0 %v2423
      %v2463 = vpop.f32.mrf.mxu0
      %v2464 = vadd.f32 0.0, %v2463
      %2465 = vdwg.mxu0
      %v2466 = vadd.f32 %v2380, %v2443
      %v2467 = vadd.f32 %v2381, %v2446
      %v2468 = vadd.f32 %v2382, %v2449
      %v2469 = vadd.f32 %v2383, %v2452
      %v2470 = vadd.f32 %v2384, %v2455
      %v2471 = vadd.f32 %v2385, %v2458
      %v2472 = vadd.f32 %v2386, %v2461
      %v2473 = vadd.f32 %v2387, %v2464
      %v2474 = vld [vmem:[%s2138 + $0x1] sm:$0xff]
      %v2475 = vld [vmem:[%s2138 + $0x11] sm:$0xff]
      %v2476 = vld [vmem:[%s2138 + $0x21] sm:$0xff]
      %v2477 = vld [vmem:[%s2138 + $0x31] sm:$0xff]
      %v2478 = vld [vmem:[%s2138 + $0x41] sm:$0xff]
      %v2479 = vld [vmem:[%s2138 + $0x51] sm:$0xff]
      %v2480 = vld [vmem:[%s2138 + $0x61] sm:$0xff]
      %v2481 = vld [vmem:[%s2138 + $0x71] sm:$0xff]
      %s2482 = scalar_lea.vmem %s3, 128
      %v2483 = vld [vmem:[%s2482] sm:$0xff]
      %v2484 = vld [vmem:[%s2482 + $0x8] sm:$0xff]
      %v2485 = vld [vmem:[%s2482 + $0x10] sm:$0xff]
      %v2486 = vld [vmem:[%s2482 + $0x18] sm:$0xff]
      %v2488 = vsel %vm1790, %v2474, 0
      %v2491 = vsel %vm1790, %v2475, 0
      %v2494 = vsel %vm1790, %v2476, 0
      %v2497 = vsel %vm1790, %v2477, 0
      %v2500 = vsel %vm1790, %v2478, 0
      %v2503 = vsel %vm1790, %v2479, 0
      %v2506 = vsel %vm1790, %v2480, 0
      %v2509 = vsel %vm1790, %v2481, 0
      %2511 = vmatpush.msra.mxu0 0.0
      %2512 = vmatpush.msra.mxu0 0.0
      %2513 = vmatpush.msra.mxu0 0.0
      %2514 = vmatpush.msra.mxu0 0.0
      %2515 = vmatpush.msra.mxu0 0.0
      %2516 = vmatpush.msra.mxu0 0.0
      %2517 = vmatpush.msra.mxu0 0.0
      %2518 = vmatpush.msra.mxu0 0.0
      %2519 = vmatpush.msra.mxu0 0.0
      %2520 = vmatpush.msra.mxu0 0.0
      %2521 = vmatpush.msra.mxu0 0.0
      %2522 = vmatpush.msra.mxu0 0.0
      %2523 = vmatpush.msra.mxu0 %v2486
      %2524 = vmatpush.msra.mxu0 %v2485
      %2525 = vmatpush.msra.mxu0 %v2484
      %2526 = vmatpush.msra.mxu0 %v2483
      %2527 = vmatmul.f32.gmra.mxu0 %v2488
      %v2528 = vpop.f32.mrf.mxu0
      %v2529 = vadd.f32 0.0, %v2528
      %2530 = vmatmul.f32.gmra.mxu0 %v2491
      %v2531 = vpop.f32.mrf.mxu0
      %v2532 = vadd.f32 0.0, %v2531
      %2533 = vmatmul.f32.gmra.mxu0 %v2494
      %v2534 = vpop.f32.mrf.mxu0
      %v2535 = vadd.f32 0.0, %v2534
      %2536 = vmatmul.f32.gmra.mxu0 %v2497
      %v2537 = vpop.f32.mrf.mxu0
      %v2538 = vadd.f32 0.0, %v2537
      %2539 = vmatmul.f32.gmra.mxu0 %v2500
      %v2540 = vpop.f32.mrf.mxu0
      %v2541 = vadd.f32 0.0, %v2540
      %2542 = vmatmul.f32.gmra.mxu0 %v2503
      %v2543 = vpop.f32.mrf.mxu0
      %v2544 = vadd.f32 0.0, %v2543
      %2545 = vmatmul.f32.gmra.mxu0 %v2506
      %v2546 = vpop.f32.mrf.mxu0
      %v2547 = vadd.f32 0.0, %v2546
      %2548 = vmatmul.f32.gmra.mxu0 %v2509
      %v2549 = vpop.f32.mrf.mxu0
      %v2550 = vadd.f32 0.0, %v2549
      %2551 = vdwg.mxu0
      %v2552 = vadd.f32 %v2466, %v2529
      %v2553 = vadd.f32 %v2467, %v2532
      %v2554 = vadd.f32 %v2468, %v2535
      %v2555 = vadd.f32 %v2469, %v2538
      %v2556 = vadd.f32 %v2470, %v2541
      %v2557 = vadd.f32 %v2471, %v2544
      %v2558 = vadd.f32 %v2472, %v2547
      %v2559 = vadd.f32 %v2473, %v2550
      %v2560 = vld [vmem:[%s2138 + $0x2] sm:$0xff]
      %v2561 = vld [vmem:[%s2138 + $0x12] sm:$0xff]
      %v2562 = vld [vmem:[%s2138 + $0x22] sm:$0xff]
      %v2563 = vld [vmem:[%s2138 + $0x32] sm:$0xff]
      %v2564 = vld [vmem:[%s2138 + $0x42] sm:$0xff]
      %v2565 = vld [vmem:[%s2138 + $0x52] sm:$0xff]
      %v2566 = vld [vmem:[%s2138 + $0x62] sm:$0xff]
      %v2567 = vld [vmem:[%s2138 + $0x72] sm:$0xff]
      %s2568 = scalar_lea.vmem %s3, 160
      %v2569 = vld [vmem:[%s2568] sm:$0xff]
      %v2570 = vld [vmem:[%s2568 + $0x8] sm:$0xff]
      %v2571 = vld [vmem:[%s2568 + $0x10] sm:$0xff]
      %v2572 = vld [vmem:[%s2568 + $0x18] sm:$0xff]
      %v2574 = vsel %vm1790, %v2560, 0
      %v2577 = vsel %vm1790, %v2561, 0
      %v2580 = vsel %vm1790, %v2562, 0
      %v2583 = vsel %vm1790, %v2563, 0
      %v2586 = vsel %vm1790, %v2564, 0
      %v2589 = vsel %vm1790, %v2565, 0
      %v2592 = vsel %vm1790, %v2566, 0
      %v2595 = vsel %vm1790, %v2567, 0
      %2597 = vmatpush.msra.mxu0 0.0
      %2598 = vmatpush.msra.mxu0 0.0
      %2599 = vmatpush.msra.mxu0 0.0
      %2600 = vmatpush.msra.mxu0 0.0
      %2601 = vmatpush.msra.mxu0 0.0
      %2602 = vmatpush.msra.mxu0 0.0
      %2603 = vmatpush.msra.mxu0 0.0
      %2604 = vmatpush.msra.mxu0 0.0
      %2605 = vmatpush.msra.mxu0 0.0
      %2606 = vmatpush.msra.mxu0 0.0
      %2607 = vmatpush.msra.mxu0 0.0
      %2608 = vmatpush.msra.mxu0 0.0
      %2609 = vmatpush.msra.mxu0 %v2572
      %2610 = vmatpush.msra.mxu0 %v2571
      %2611 = vmatpush.msra.mxu0 %v2570
      %2612 = vmatpush.msra.mxu0 %v2569
      %2613 = vmatmul.f32.gmra.mxu0 %v2574
      %v2614 = vpop.f32.mrf.mxu0
      %v2615 = vadd.f32 0.0, %v2614
      %2616 = vmatmul.f32.gmra.mxu0 %v2577
      %v2617 = vpop.f32.mrf.mxu0
      %v2618 = vadd.f32 0.0, %v2617
      %2619 = vmatmul.f32.gmra.mxu0 %v2580
      %v2620 = vpop.f32.mrf.mxu0
      %v2621 = vadd.f32 0.0, %v2620
      %2622 = vmatmul.f32.gmra.mxu0 %v2583
      %v2623 = vpop.f32.mrf.mxu0
      %v2624 = vadd.f32 0.0, %v2623
      %2625 = vmatmul.f32.gmra.mxu0 %v2586
      %v2626 = vpop.f32.mrf.mxu0
      %v2627 = vadd.f32 0.0, %v2626
      %2628 = vmatmul.f32.gmra.mxu0 %v2589
      %v2629 = vpop.f32.mrf.mxu0
      %v2630 = vadd.f32 0.0, %v2629
      %2631 = vmatmul.f32.gmra.mxu0 %v2592
      %v2632 = vpop.f32.mrf.mxu0
      %v2633 = vadd.f32 0.0, %v2632
      %2634 = vmatmul.f32.gmra.mxu0 %v2595
      %v2635 = vpop.f32.mrf.mxu0
      %v2636 = vadd.f32 0.0, %v2635
      %2637 = vdwg.mxu0
      %v2638 = vadd.f32 %v2552, %v2615
      %v2639 = vadd.f32 %v2553, %v2618
      %v2640 = vadd.f32 %v2554, %v2621
      %v2641 = vadd.f32 %v2555, %v2624
      %v2642 = vadd.f32 %v2556, %v2627
      %v2643 = vadd.f32 %v2557, %v2630
      %v2644 = vadd.f32 %v2558, %v2633
      %v2645 = vadd.f32 %v2559, %v2636
      %s2646 = scalar_lea.vmem [#allocation2], 32
      %v2647 = vld [vmem:[%s2646] sm:$0xff]
      %v2648 = vld [vmem:[%s2646 + $0x10] sm:$0xff]
      %v2649 = vld [vmem:[%s2646 + $0x20] sm:$0xff]
      %v2650 = vld [vmem:[%s2646 + $0x30] sm:$0xff]
      %v2651 = vld [vmem:[%s2646 + $0x40] sm:$0xff]
      %v2652 = vld [vmem:[%s2646 + $0x50] sm:$0xff]
      %v2653 = vld [vmem:[%s2646 + $0x60] sm:$0xff]
      %v2654 = vld [vmem:[%s2646 + $0x70] sm:$0xff]
      %s2655 = scalar_lea.vmem %s3, 192
      %v2656 = vld [vmem:[%s2655] sm:$0xff]
      %v2657 = vld [vmem:[%s2655 + $0x8] sm:$0xff]
      %v2658 = vld [vmem:[%s2655 + $0x10] sm:$0xff]
      %v2659 = vld [vmem:[%s2655 + $0x18] sm:$0xff]
      %v2661 = vsel %vm1790, %v2647, 0
      %v2664 = vsel %vm1790, %v2648, 0
      %v2667 = vsel %vm1790, %v2649, 0
      %v2670 = vsel %vm1790, %v2650, 0
      %v2673 = vsel %vm1790, %v2651, 0
      %v2676 = vsel %vm1790, %v2652, 0
      %v2679 = vsel %vm1790, %v2653, 0
      %v2682 = vsel %vm1790, %v2654, 0
      %2684 = vmatpush.msra.mxu0 0.0
      %2685 = vmatpush.msra.mxu0 0.0
      %2686 = vmatpush.msra.mxu0 0.0
      %2687 = vmatpush.msra.mxu0 0.0
      %2688 = vmatpush.msra.mxu0 0.0
      %2689 = vmatpush.msra.mxu0 0.0
      %2690 = vmatpush.msra.mxu0 0.0
      %2691 = vmatpush.msra.mxu0 0.0
      %2692 = vmatpush.msra.mxu0 0.0
      %2693 = vmatpush.msra.mxu0 0.0
      %2694 = vmatpush.msra.mxu0 0.0
      %2695 = vmatpush.msra.mxu0 0.0
      %2696 = vmatpush.msra.mxu0 %v2659
      %2697 = vmatpush.msra.mxu0 %v2658
      %2698 = vmatpush.msra.mxu0 %v2657
      %2699 = vmatpush.msra.mxu0 %v2656
      %2700 = vmatmul.f32.gmra.mxu0 %v2661
      %v2701 = vpop.f32.mrf.mxu0
      %v2702 = vadd.f32 0.0, %v2701
      %2703 = vmatmul.f32.gmra.mxu0 %v2664
      %v2704 = vpop.f32.mrf.mxu0
      %v2705 = vadd.f32 0.0, %v2704
      %2706 = vmatmul.f32.gmra.mxu0 %v2667
      %v2707 = vpop.f32.mrf.mxu0
      %v2708 = vadd.f32 0.0, %v2707
      %2709 = vmatmul.f32.gmra.mxu0 %v2670
      %v2710 = vpop.f32.mrf.mxu0
      %v2711 = vadd.f32 0.0, %v2710
      %2712 = vmatmul.f32.gmra.mxu0 %v2673
      %v2713 = vpop.f32.mrf.mxu0
      %v2714 = vadd.f32 0.0, %v2713
      %2715 = vmatmul.f32.gmra.mxu0 %v2676
      %v2716 = vpop.f32.mrf.mxu0
      %v2717 = vadd.f32 0.0, %v2716
      %2718 = vmatmul.f32.gmra.mxu0 %v2679
      %v2719 = vpop.f32.mrf.mxu0
      %v2720 = vadd.f32 0.0, %v2719
      %2721 = vmatmul.f32.gmra.mxu0 %v2682
      %v2722 = vpop.f32.mrf.mxu0
      %v2723 = vadd.f32 0.0, %v2722
      %2724 = vdwg.mxu0
      %v2725 = vadd.f32 %v2638, %v2702
      %v2726 = vadd.f32 %v2639, %v2705
      %v2727 = vadd.f32 %v2640, %v2708
      %v2728 = vadd.f32 %v2641, %v2711
      %v2729 = vadd.f32 %v2642, %v2714
      %v2730 = vadd.f32 %v2643, %v2717
      %v2731 = vadd.f32 %v2644, %v2720
      %v2732 = vadd.f32 %v2645, %v2723
      %v2733 = vld [vmem:[%s2646 + $0x1] sm:$0xff]
      %v2734 = vld [vmem:[%s2646 + $0x11] sm:$0xff]
      %v2735 = vld [vmem:[%s2646 + $0x21] sm:$0xff]
      %v2736 = vld [vmem:[%s2646 + $0x31] sm:$0xff]
      %v2737 = vld [vmem:[%s2646 + $0x41] sm:$0xff]
      %v2738 = vld [vmem:[%s2646 + $0x51] sm:$0xff]
      %v2739 = vld [vmem:[%s2646 + $0x61] sm:$0xff]
      %v2740 = vld [vmem:[%s2646 + $0x71] sm:$0xff]
      %s2741 = scalar_lea.vmem %s3, 224
      %v2742 = vld [vmem:[%s2741] sm:$0xff]
      %v2743 = vld [vmem:[%s2741 + $0x8] sm:$0xff]
      %v2744 = vld [vmem:[%s2741 + $0x10] sm:$0xff]
      %v2745 = vld [vmem:[%s2741 + $0x18] sm:$0xff]
      %v2747 = vsel %vm1790, %v2733, 0
      %v2750 = vsel %vm1790, %v2734, 0
      %v2753 = vsel %vm1790, %v2735, 0
      %v2756 = vsel %vm1790, %v2736, 0
      %v2759 = vsel %vm1790, %v2737, 0
      %v2762 = vsel %vm1790, %v2738, 0
      %v2765 = vsel %vm1790, %v2739, 0
      %v2768 = vsel %vm1790, %v2740, 0
      %2770 = vmatpush.msra.mxu0 0.0
      %2771 = vmatpush.msra.mxu0 0.0
      %2772 = vmatpush.msra.mxu0 0.0
      %2773 = vmatpush.msra.mxu0 0.0
      %2774 = vmatpush.msra.mxu0 0.0
      %2775 = vmatpush.msra.mxu0 0.0
      %2776 = vmatpush.msra.mxu0 0.0
      %2777 = vmatpush.msra.mxu0 0.0
      %2778 = vmatpush.msra.mxu0 0.0
      %2779 = vmatpush.msra.mxu0 0.0
      %2780 = vmatpush.msra.mxu0 0.0
      %2781 = vmatpush.msra.mxu0 0.0
      %2782 = vmatpush.msra.mxu0 %v2745
      %2783 = vmatpush.msra.mxu0 %v2744
      %2784 = vmatpush.msra.mxu0 %v2743
      %2785 = vmatpush.msra.mxu0 %v2742
      %2786 = vmatmul.f32.gmra.mxu0 %v2747
      %v2787 = vpop.f32.mrf.mxu0
      %v2788 = vadd.f32 0.0, %v2787
      %2789 = vmatmul.f32.gmra.mxu0 %v2750
      %v2790 = vpop.f32.mrf.mxu0
      %v2791 = vadd.f32 0.0, %v2790
      %2792 = vmatmul.f32.gmra.mxu0 %v2753
      %v2793 = vpop.f32.mrf.mxu0
      %v2794 = vadd.f32 0.0, %v2793
      %2795 = vmatmul.f32.gmra.mxu0 %v2756
      %v2796 = vpop.f32.mrf.mxu0
      %v2797 = vadd.f32 0.0, %v2796
      %2798 = vmatmul.f32.gmra.mxu0 %v2759
      %v2799 = vpop.f32.mrf.mxu0
      %v2800 = vadd.f32 0.0, %v2799
      %2801 = vmatmul.f32.gmra.mxu0 %v2762
      %v2802 = vpop.f32.mrf.mxu0
      %v2803 = vadd.f32 0.0, %v2802
      %2804 = vmatmul.f32.gmra.mxu0 %v2765
      %v2805 = vpop.f32.mrf.mxu0
      %v2806 = vadd.f32 0.0, %v2805
      %2807 = vmatmul.f32.gmra.mxu0 %v2768
      %v2808 = vpop.f32.mrf.mxu0
      %v2809 = vadd.f32 0.0, %v2808
      %2810 = vdwg.mxu0
      %v2811 = vadd.f32 %v2725, %v2788
      %v2812 = vadd.f32 %v2726, %v2791
      %v2813 = vadd.f32 %v2727, %v2794
      %v2814 = vadd.f32 %v2728, %v2797
      %v2815 = vadd.f32 %v2729, %v2800
      %v2816 = vadd.f32 %v2730, %v2803
      %v2817 = vadd.f32 %v2731, %v2806
      %v2818 = vadd.f32 %v2732, %v2809
      %v2819 = vld [vmem:[%s2646 + $0x2] sm:$0xff]
      %v2820 = vld [vmem:[%s2646 + $0x12] sm:$0xff]
      %v2821 = vld [vmem:[%s2646 + $0x22] sm:$0xff]
      %v2822 = vld [vmem:[%s2646 + $0x32] sm:$0xff]
      %v2823 = vld [vmem:[%s2646 + $0x42] sm:$0xff]
      %v2824 = vld [vmem:[%s2646 + $0x52] sm:$0xff]
      %v2825 = vld [vmem:[%s2646 + $0x62] sm:$0xff]
      %v2826 = vld [vmem:[%s2646 + $0x72] sm:$0xff]
      %s2827 = scalar_lea.vmem %s3, 256
      %v2828 = vld [vmem:[%s2827] sm:$0xff]
      %v2829 = vld [vmem:[%s2827 + $0x8] sm:$0xff]
      %v2830 = vld [vmem:[%s2827 + $0x10] sm:$0xff]
      %v2831 = vld [vmem:[%s2827 + $0x18] sm:$0xff]
      %v2833 = vsel %vm1790, %v2819, 0
      %v2836 = vsel %vm1790, %v2820, 0
      %v2839 = vsel %vm1790, %v2821, 0
      %v2842 = vsel %vm1790, %v2822, 0
      %v2845 = vsel %vm1790, %v2823, 0
      %v2848 = vsel %vm1790, %v2824, 0
      %v2851 = vsel %vm1790, %v2825, 0
      %v2854 = vsel %vm1790, %v2826, 0
      %2856 = vmatpush.msra.mxu0 0.0
      %2857 = vmatpush.msra.mxu0 0.0
      %2858 = vmatpush.msra.mxu0 0.0
      %2859 = vmatpush.msra.mxu0 0.0
      %2860 = vmatpush.msra.mxu0 0.0
      %2861 = vmatpush.msra.mxu0 0.0
      %2862 = vmatpush.msra.mxu0 0.0
      %2863 = vmatpush.msra.mxu0 0.0
      %2864 = vmatpush.msra.mxu0 0.0
      %2865 = vmatpush.msra.mxu0 0.0
      %2866 = vmatpush.msra.mxu0 0.0
      %2867 = vmatpush.msra.mxu0 0.0
      %2868 = vmatpush.msra.mxu0 %v2831
      %2869 = vmatpush.msra.mxu0 %v2830
      %2870 = vmatpush.msra.mxu0 %v2829
      %2871 = vmatpush.msra.mxu0 %v2828
      %2872 = vmatmul.f32.gmra.mxu0 %v2833
      %v2873 = vpop.f32.mrf.mxu0
      %v2874 = vadd.f32 0.0, %v2873
      %2875 = vmatmul.f32.gmra.mxu0 %v2836
      %v2876 = vpop.f32.mrf.mxu0
      %v2877 = vadd.f32 0.0, %v2876
      %2878 = vmatmul.f32.gmra.mxu0 %v2839
      %v2879 = vpop.f32.mrf.mxu0
      %v2880 = vadd.f32 0.0, %v2879
      %2881 = vmatmul.f32.gmra.mxu0 %v2842
      %v2882 = vpop.f32.mrf.mxu0
      %v2883 = vadd.f32 0.0, %v2882
      %2884 = vmatmul.f32.gmra.mxu0 %v2845
      %v2885 = vpop.f32.mrf.mxu0
      %v2886 = vadd.f32 0.0, %v2885
      %2887 = vmatmul.f32.gmra.mxu0 %v2848
      %v2888 = vpop.f32.mrf.mxu0
      %v2889 = vadd.f32 0.0, %v2888
      %2890 = vmatmul.f32.gmra.mxu0 %v2851
      %v2891 = vpop.f32.mrf.mxu0
      %v2892 = vadd.f32 0.0, %v2891
      %2893 = vmatmul.f32.gmra.mxu0 %v2854
      %v2894 = vpop.f32.mrf.mxu0
      %v2895 = vadd.f32 0.0, %v2894
      %2896 = vdwg.mxu0
      %v2897 = vadd.f32 %v2811, %v2874
      %v2898 = vadd.f32 %v2812, %v2877
      %v2899 = vadd.f32 %v2813, %v2880
      %v2900 = vadd.f32 %v2814, %v2883
      %v2901 = vadd.f32 %v2815, %v2886
      %v2902 = vadd.f32 %v2816, %v2889
      %v2903 = vadd.f32 %v2817, %v2892
      %v2904 = vadd.f32 %v2818, %v2895
      %v2905 = vld [vmem:[%s4] sm:$0x1]
      %v2907 = vperm.slane %v2905, 0
      %v2909 = vadd.f32 %v2897, %v2907
      %v2910 = vadd.f32 %v2898, %v2907
      %v2911 = vadd.f32 %v2899, %v2907
      %v2912 = vadd.f32 %v2900, %v2907
      %v2913 = vadd.f32 %v2901, %v2907
      %v2914 = vadd.f32 %v2902, %v2907
      %v2915 = vadd.f32 %v2903, %v2907
      %v2916 = vadd.f32 %v2904, %v2907
      %v2917 = vmax.f32 %v2909, 0.0
      %v2918 = vmax.f32 %v2910, 0.0
      %v2919 = vmax.f32 %v2911, 0.0
      %v2920 = vmax.f32 %v2912, 0.0
      %v2921 = vmax.f32 %v2913, 0.0
      %v2922 = vmax.f32 %v2914, 0.0
      %v2923 = vmax.f32 %v2915, 0.0
      %v2924 = vmax.f32 %v2916, 0.0
      %v2933 = vrot.slane %v2917, 2
      %v2934 = vrot.slane %v2917, 4
      %v2935 = vrot.slane %v2917, 6
      %v2936 = vrot.slane %v2918, 2
      %v2937 = vrot.slane %v2918, 4
      %v2938 = vrot.slane %v2918, 6
      %v2939 = vrot.slane %v2919, 2
      %v2940 = vrot.slane %v2919, 4
      %v2941 = vrot.slane %v2919, 6
      %v2942 = vrot.slane %v2920, 2
      %v2943 = vrot.slane %v2920, 4
      %v2944 = vrot.slane %v2920, 6
      %v2945 = vrot.slane %v2921, 2
      %v2946 = vrot.slane %v2921, 4
      %v2947 = vrot.slane %v2921, 6
      %v2948 = vrot.slane %v2922, 2
      %v2949 = vrot.slane %v2922, 4
      %v2950 = vrot.slane %v2922, 6
      %v2951 = vrot.slane %v2923, 2
      %v2952 = vrot.slane %v2923, 4
      %v2953 = vrot.slane %v2923, 6
      %v2954 = vrot.slane %v2924, 2
      %v2955 = vrot.slane %v2924, 4
      %v2956 = vrot.slane %v2924, 6
      %vm2981 = vcmask 517120
      %v2982 = vsel %vm2981, %v2917, -inf
      %v2983 = vrot.slane %v2982, 4
      %v2984 = vmax.f32 %v2982, %v2983
      %v2985 = vrot.slane %v2984, 2
      %v2986 = vmax.f32 %v2984, %v2985
      %v2987 = vrot.slane %v2986, 1
      %v2988 = vmax.f32 %v2986, %v2987
      %v2989 = vsel %vm2981, %v2933, -inf
      %v2990 = vrot.slane %v2989, 4
      %v2991 = vmax.f32 %v2989, %v2990
      %v2992 = vrot.slane %v2991, 2
      %v2993 = vmax.f32 %v2991, %v2992
      %v2994 = vrot.slane %v2993, 1
      %v2995 = vmax.f32 %v2993, %v2994
      %v2996 = vsel %vm2981, %v2934, -inf
      %v2997 = vrot.slane %v2996, 4
      %v2998 = vmax.f32 %v2996, %v2997
      %v2999 = vrot.slane %v2998, 2
      %v3000 = vmax.f32 %v2998, %v2999
      %v3001 = vrot.slane %v3000, 1
      %v3002 = vmax.f32 %v3000, %v3001
      %v3003 = vsel %vm2981, %v2935, -inf
      %v3004 = vrot.slane %v3003, 4
      %v3005 = vmax.f32 %v3003, %v3004
      %v3006 = vrot.slane %v3005, 2
      %v3007 = vmax.f32 %v3005, %v3006
      %v3008 = vrot.slane %v3007, 1
      %v3009 = vmax.f32 %v3007, %v3008
      %v3010 = vsel %vm2981, %v2918, -inf
      %v3011 = vrot.slane %v3010, 4
      %v3012 = vmax.f32 %v3010, %v3011
      %v3013 = vrot.slane %v3012, 2
      %v3014 = vmax.f32 %v3012, %v3013
      %v3015 = vrot.slane %v3014, 1
      %v3016 = vmax.f32 %v3014, %v3015
      %v3017 = vsel %vm2981, %v2936, -inf
      %v3018 = vrot.slane %v3017, 4
      %v3019 = vmax.f32 %v3017, %v3018
      %v3020 = vrot.slane %v3019, 2
      %v3021 = vmax.f32 %v3019, %v3020
      %v3022 = vrot.slane %v3021, 1
      %v3023 = vmax.f32 %v3021, %v3022
      %v3024 = vsel %vm2981, %v2937, -inf
      %v3025 = vrot.slane %v3024, 4
      %v3026 = vmax.f32 %v3024, %v3025
      %v3027 = vrot.slane %v3026, 2
      %v3028 = vmax.f32 %v3026, %v3027
      %v3029 = vrot.slane %v3028, 1
      %v3030 = vmax.f32 %v3028, %v3029
      %v3031 = vsel %vm2981, %v2938, -inf
      %v3032 = vrot.slane %v3031, 4
      %v3033 = vmax.f32 %v3031, %v3032
      %v3034 = vrot.slane %v3033, 2
      %v3035 = vmax.f32 %v3033, %v3034
      %v3036 = vrot.slane %v3035, 1
      %v3037 = vmax.f32 %v3035, %v3036
      %v3038 = vsel %vm2981, %v2919, -inf
      %v3039 = vrot.slane %v3038, 4
      %v3040 = vmax.f32 %v3038, %v3039
      %v3041 = vrot.slane %v3040, 2
      %v3042 = vmax.f32 %v3040, %v3041
      %v3043 = vrot.slane %v3042, 1
      %v3044 = vmax.f32 %v3042, %v3043
      %v3045 = vsel %vm2981, %v2939, -inf
      %v3046 = vrot.slane %v3045, 4
      %v3047 = vmax.f32 %v3045, %v3046
      %v3048 = vrot.slane %v3047, 2
      %v3049 = vmax.f32 %v3047, %v3048
      %v3050 = vrot.slane %v3049, 1
      %v3051 = vmax.f32 %v3049, %v3050
      %v3052 = vsel %vm2981, %v2940, -inf
      %v3053 = vrot.slane %v3052, 4
      %v3054 = vmax.f32 %v3052, %v3053
      %v3055 = vrot.slane %v3054, 2
      %v3056 = vmax.f32 %v3054, %v3055
      %v3057 = vrot.slane %v3056, 1
      %v3058 = vmax.f32 %v3056, %v3057
      %v3059 = vsel %vm2981, %v2941, -inf
      %v3060 = vrot.slane %v3059, 4
      %v3061 = vmax.f32 %v3059, %v3060
      %v3062 = vrot.slane %v3061, 2
      %v3063 = vmax.f32 %v3061, %v3062
      %v3064 = vrot.slane %v3063, 1
      %v3065 = vmax.f32 %v3063, %v3064
      %v3066 = vsel %vm2981, %v2920, -inf
      %v3067 = vrot.slane %v3066, 4
      %v3068 = vmax.f32 %v3066, %v3067
      %v3069 = vrot.slane %v3068, 2
      %v3070 = vmax.f32 %v3068, %v3069
      %v3071 = vrot.slane %v3070, 1
      %v3072 = vmax.f32 %v3070, %v3071
      %v3073 = vsel %vm2981, %v2942, -inf
      %v3074 = vrot.slane %v3073, 4
      %v3075 = vmax.f32 %v3073, %v3074
      %v3076 = vrot.slane %v3075, 2
      %v3077 = vmax.f32 %v3075, %v3076
      %v3078 = vrot.slane %v3077, 1
      %v3079 = vmax.f32 %v3077, %v3078
      %v3080 = vsel %vm2981, %v2943, -inf
      %v3081 = vrot.slane %v3080, 4
      %v3082 = vmax.f32 %v3080, %v3081
      %v3083 = vrot.slane %v3082, 2
      %v3084 = vmax.f32 %v3082, %v3083
      %v3085 = vrot.slane %v3084, 1
      %v3086 = vmax.f32 %v3084, %v3085
      %v3087 = vsel %vm2981, %v2944, -inf
      %v3088 = vrot.slane %v3087, 4
      %v3089 = vmax.f32 %v3087, %v3088
      %v3090 = vrot.slane %v3089, 2
      %v3091 = vmax.f32 %v3089, %v3090
      %v3092 = vrot.slane %v3091, 1
      %v3093 = vmax.f32 %v3091, %v3092
      %v3094 = vsel %vm2981, %v2921, -inf
      %v3095 = vrot.slane %v3094, 4
      %v3096 = vmax.f32 %v3094, %v3095
      %v3097 = vrot.slane %v3096, 2
      %v3098 = vmax.f32 %v3096, %v3097
      %v3099 = vrot.slane %v3098, 1
      %v3100 = vmax.f32 %v3098, %v3099
      %v3101 = vsel %vm2981, %v2945, -inf
      %v3102 = vrot.slane %v3101, 4
      %v3103 = vmax.f32 %v3101, %v3102
      %v3104 = vrot.slane %v3103, 2
      %v3105 = vmax.f32 %v3103, %v3104
      %v3106 = vrot.slane %v3105, 1
      %v3107 = vmax.f32 %v3105, %v3106
      %v3108 = vsel %vm2981, %v2946, -inf
      %v3109 = vrot.slane %v3108, 4
      %v3110 = vmax.f32 %v3108, %v3109
      %v3111 = vrot.slane %v3110, 2
      %v3112 = vmax.f32 %v3110, %v3111
      %v3113 = vrot.slane %v3112, 1
      %v3114 = vmax.f32 %v3112, %v3113
      %v3115 = vsel %vm2981, %v2947, -inf
      %v3116 = vrot.slane %v3115, 4
      %v3117 = vmax.f32 %v3115, %v3116
      %v3118 = vrot.slane %v3117, 2
      %v3119 = vmax.f32 %v3117, %v3118
      %v3120 = vrot.slane %v3119, 1
      %v3121 = vmax.f32 %v3119, %v3120
      %v3122 = vsel %vm2981, %v2922, -inf
      %v3123 = vrot.slane %v3122, 4
      %v3124 = vmax.f32 %v3122, %v3123
      %v3125 = vrot.slane %v3124, 2
      %v3126 = vmax.f32 %v3124, %v3125
      %v3127 = vrot.slane %v3126, 1
      %v3128 = vmax.f32 %v3126, %v3127
      %v3129 = vsel %vm2981, %v2948, -inf
      %v3130 = vrot.slane %v3129, 4
      %v3131 = vmax.f32 %v3129, %v3130
      %v3132 = vrot.slane %v3131, 2
      %v3133 = vmax.f32 %v3131, %v3132
      %v3134 = vrot.slane %v3133, 1
      %v3135 = vmax.f32 %v3133, %v3134
      %v3136 = vsel %vm2981, %v2949, -inf
      %v3137 = vrot.slane %v3136, 4
      %v3138 = vmax.f32 %v3136, %v3137
      %v3139 = vrot.slane %v3138, 2
      %v3140 = vmax.f32 %v3138, %v3139
      %v3141 = vrot.slane %v3140, 1
      %v3142 = vmax.f32 %v3140, %v3141
      %v3143 = vsel %vm2981, %v2950, -inf
      %v3144 = vrot.slane %v3143, 4
      %v3145 = vmax.f32 %v3143, %v3144
      %v3146 = vrot.slane %v3145, 2
      %v3147 = vmax.f32 %v3145, %v3146
      %v3148 = vrot.slane %v3147, 1
      %v3149 = vmax.f32 %v3147, %v3148
      %v3150 = vsel %vm2981, %v2923, -inf
      %v3151 = vrot.slane %v3150, 4
      %v3152 = vmax.f32 %v3150, %v3151
      %v3153 = vrot.slane %v3152, 2
      %v3154 = vmax.f32 %v3152, %v3153
      %v3155 = vrot.slane %v3154, 1
      %v3156 = vmax.f32 %v3154, %v3155
      %v3157 = vsel %vm2981, %v2951, -inf
      %v3158 = vrot.slane %v3157, 4
      %v3159 = vmax.f32 %v3157, %v3158
      %v3160 = vrot.slane %v3159, 2
      %v3161 = vmax.f32 %v3159, %v3160
      %v3162 = vrot.slane %v3161, 1
      %v3163 = vmax.f32 %v3161, %v3162
      %v3164 = vsel %vm2981, %v2952, -inf
      %v3165 = vrot.slane %v3164, 4
      %v3166 = vmax.f32 %v3164, %v3165
      %v3167 = vrot.slane %v3166, 2
      %v3168 = vmax.f32 %v3166, %v3167
      %v3169 = vrot.slane %v3168, 1
      %v3170 = vmax.f32 %v3168, %v3169
      %v3171 = vsel %vm2981, %v2953, -inf
      %v3172 = vrot.slane %v3171, 4
      %v3173 = vmax.f32 %v3171, %v3172
      %v3174 = vrot.slane %v3173, 2
      %v3175 = vmax.f32 %v3173, %v3174
      %v3176 = vrot.slane %v3175, 1
      %v3177 = vmax.f32 %v3175, %v3176
      %v3178 = vsel %vm2981, %v2924, -inf
      %v3179 = vrot.slane %v3178, 4
      %v3180 = vmax.f32 %v3178, %v3179
      %v3181 = vrot.slane %v3180, 2
      %v3182 = vmax.f32 %v3180, %v3181
      %v3183 = vrot.slane %v3182, 1
      %v3184 = vmax.f32 %v3182, %v3183
      %v3185 = vsel %vm2981, %v2954, -inf
      %v3186 = vrot.slane %v3185, 4
      %v3187 = vmax.f32 %v3185, %v3186
      %v3188 = vrot.slane %v3187, 2
      %v3189 = vmax.f32 %v3187, %v3188
      %v3190 = vrot.slane %v3189, 1
      %v3191 = vmax.f32 %v3189, %v3190
      %v3192 = vsel %vm2981, %v2955, -inf
      %v3193 = vrot.slane %v3192, 4
      %v3194 = vmax.f32 %v3192, %v3193
      %v3195 = vrot.slane %v3194, 2
      %v3196 = vmax.f32 %v3194, %v3195
      %v3197 = vrot.slane %v3196, 1
      %v3198 = vmax.f32 %v3196, %v3197
      %v3199 = vsel %vm2981, %v2956, -inf
      %v3200 = vrot.slane %v3199, 4
      %v3201 = vmax.f32 %v3199, %v3200
      %v3202 = vrot.slane %v3201, 2
      %v3203 = vmax.f32 %v3201, %v3202
      %v3204 = vrot.slane %v3203, 1
      %v3205 = vmax.f32 %v3203, %v3204
      %vm3206 = vcmask 523264
      %v3207 = vsel %vm3206, %v2988, -inf
      %v3208 = vsel %vm3206, %v3016, -inf
      %v3209 = vmax.f32 %v3207, %v3208
      %v3210 = vsel %vm3206, %v2995, -inf
      %v3211 = vsel %vm3206, %v3023, -inf
      %v3212 = vmax.f32 %v3210, %v3211
      %v3213 = vsel %vm3206, %v3002, -inf
      %v3214 = vsel %vm3206, %v3030, -inf
      %v3215 = vmax.f32 %v3213, %v3214
      %v3216 = vsel %vm3206, %v3009, -inf
      %v3217 = vsel %vm3206, %v3037, -inf
      %v3218 = vmax.f32 %v3216, %v3217
      %v3219 = vsel %vm3206, %v3044, -inf
      %v3220 = vsel %vm3206, %v3072, -inf
      %v3221 = vmax.f32 %v3219, %v3220
      %v3222 = vsel %vm3206, %v3051, -inf
      %v3223 = vsel %vm3206, %v3079, -inf
      %v3224 = vmax.f32 %v3222, %v3223
      %v3225 = vsel %vm3206, %v3058, -inf
      %v3226 = vsel %vm3206, %v3086, -inf
      %v3227 = vmax.f32 %v3225, %v3226
      %v3228 = vsel %vm3206, %v3065, -inf
      %v3229 = vsel %vm3206, %v3093, -inf
      %v3230 = vmax.f32 %v3228, %v3229
      %v3231 = vsel %vm3206, %v3100, -inf
      %v3232 = vsel %vm3206, %v3128, -inf
      %v3233 = vmax.f32 %v3231, %v3232
      %v3234 = vsel %vm3206, %v3107, -inf
      %v3235 = vsel %vm3206, %v3135, -inf
      %v3236 = vmax.f32 %v3234, %v3235
      %v3237 = vsel %vm3206, %v3114, -inf
      %v3238 = vsel %vm3206, %v3142, -inf
      %v3239 = vmax.f32 %v3237, %v3238
      %v3240 = vsel %vm3206, %v3121, -inf
      %v3241 = vsel %vm3206, %v3149, -inf
      %v3242 = vmax.f32 %v3240, %v3241
      %v3243 = vsel %vm3206, %v3156, -inf
      %v3244 = vsel %vm3206, %v3184, -inf
      %v3245 = vmax.f32 %v3243, %v3244
      %v3246 = vsel %vm3206, %v3163, -inf
      %v3247 = vsel %vm3206, %v3191, -inf
      %v3248 = vmax.f32 %v3246, %v3247
      %v3249 = vsel %vm3206, %v3170, -inf
      %v3250 = vsel %vm3206, %v3198, -inf
      %v3251 = vmax.f32 %v3249, %v3250
      %v3252 = vsel %vm3206, %v3177, -inf
      %v3253 = vsel %vm3206, %v3205, -inf
      %v3254 = vmax.f32 %v3252, %v3253
      %vm3255 = vcmask 521216
      %3256 = vst.msk [vmem:[#allocation3] sm:$0x3f] %vm3255, 0.0
      %3257 = vst.msk [vmem:[#allocation3 + $0x8] sm:$0x3f] %vm3255, 0.0
      %3258 = vst.msk [vmem:[#allocation3 + $0x10] sm:$0x3f] %vm3255, 0.0
      %3259 = vst.msk [vmem:[#allocation3 + $0x18] sm:$0x3f] %vm3255, 0.0
      %3260 = vst.msk [vmem:[#allocation3 + $0x20] sm:$0x3f] %vm3255, 0.0
      %3261 = vst.msk [vmem:[#allocation3 + $0x28] sm:$0x3f] %vm3255, 0.0
      %v3278 = vsel %vm2067, %v3212, %v3209
      %v3279 = vsel %vm2069, %v3215, %v3278
      %v3280 = vsel %vm2071, %v3218, %v3279
      %v3281 = vsel %vm2067, %v3224, %v3221
      %v3282 = vsel %vm2069, %v3227, %v3281
      %v3283 = vsel %vm2071, %v3230, %v3282
      %v3284 = vsel %vm2067, %v3236, %v3233
      %v3285 = vsel %vm2069, %v3239, %v3284
      %v3286 = vsel %vm2071, %v3242, %v3285
      %v3287 = vsel %vm2067, %v3248, %v3245
      %v3288 = vsel %vm2069, %v3251, %v3287
      %v3289 = vsel %vm2071, %v3254, %v3288
      %s3294 = scalar_lea.vmem [#allocation3], 8
      %vm3295 = vcmask 519168
      %3296 = vst.msk [vmem:[%s3294 + $0x1] sm:$0xf] %vm3295, %v3280
      %3297 = vst.msk [vmem:[%s3294 + $0x9] sm:$0xf] %vm3295, %v3283
      %3298 = vst.msk [vmem:[%s3294 + $0x11] sm:$0xf] %vm3295, %v3286
      %3299 = vst.msk [vmem:[%s3294 + $0x19] sm:$0xf] %vm3295, %v3289
      %v3300 = vld [vmem:[#allocation3] sm:$0xf]
      %v3301 = vld [vmem:[#allocation3 + $0x8] sm:$0xf]
      %v3302 = vld [vmem:[#allocation3 + $0x10] sm:$0xf]
      %v3303 = vld [vmem:[#allocation3 + $0x18] sm:$0xf]
      %v3304 = vld [vmem:[%s5] sm:$0xff]
      %v3305 = vld [vmem:[%s5 + $0x8] sm:$0xff]
      %v3306 = vld [vmem:[%s5 + $0x10] sm:$0xff]
      %v3307 = vld [vmem:[%s5 + $0x18] sm:$0xff]
      %v3308 = vld [vmem:[%s5 + $0x20] sm:$0xff]
      %v3309 = vld [vmem:[%s5 + $0x28] sm:$0xff]
      %v3310 = vld [vmem:[%s5 + $0x30] sm:$0xff]
      %v3311 = vld [vmem:[%s5 + $0x38] sm:$0xff]
      %v3312 = vld [vmem:[#allocation3 + $0x1] sm:$0xf]
      %v3313 = vld [vmem:[#allocation3 + $0x9] sm:$0xf]
      %v3314 = vld [vmem:[#allocation3 + $0x11] sm:$0xf]
      %v3315 = vld [vmem:[#allocation3 + $0x19] sm:$0xf]
      %s3316 = scalar_lea.vmem %s5, 64
      %v3317 = vld [vmem:[%s3316] sm:$0xff]
      %v3318 = vld [vmem:[%s3316 + $0x8] sm:$0xff]
      %v3319 = vld [vmem:[%s3316 + $0x10] sm:$0xff]
      %v3320 = vld [vmem:[%s3316 + $0x18] sm:$0xff]
      %v3321 = vld [vmem:[%s3316 + $0x20] sm:$0xff]
      %v3322 = vld [vmem:[%s3316 + $0x28] sm:$0xff]
      %v3323 = vld [vmem:[%s3316 + $0x30] sm:$0xff]
      %v3324 = vld [vmem:[%s3316 + $0x38] sm:$0xff]
      %3329 = vst [vmem:[#allocation1] ss:$2 sm:$0xff] %v3312
      %s3330 = scalar_lea.vmem [#allocation1], 1
      %3331 = vst [vmem:[%s3330] ss:$2 sm:$0xff] %v3313
      %s3332 = scalar_lea.vmem [#allocation1], 16
      %3333 = vst [vmem:[%s3332] ss:$2 sm:$0xff] %v3314
      %s3334 = scalar_lea.vmem [#allocation1], 17
      %3335 = vst [vmem:[%s3334] ss:$2 sm:$0xff] %v3315
      %v3336 = vld.sshfl [vmem:[#allocation1] sm:$0xff pattern:$0x75316420]
      %v3337 = vld.sshfl [vmem:[#allocation1 + $0x10] sm:$0xff pattern:$0x75316420]
      %v3338 = vsel %vm3206, %v3336, 0
      %v3340 = vsel %vm3206, %v3337, 0
      %3342 = vmatpush.msra.mxu0 0.0
      %3343 = vmatpush.msra.mxu0 0.0
      %3344 = vmatpush.msra.mxu0 0.0
      %3345 = vmatpush.msra.mxu0 0.0
      %3346 = vmatpush.msra.mxu0 0.0
      %3347 = vmatpush.msra.mxu0 0.0
      %3348 = vmatpush.msra.mxu0 0.0
      %3349 = vmatpush.msra.mxu0 0.0
      %3350 = vmatpush.msra.mxu0 %v3324
      %3351 = vmatpush.msra.mxu0 %v3323
      %3352 = vmatpush.msra.mxu0 %v3322
      %3353 = vmatpush.msra.mxu0 %v3321
      %3354 = vmatpush.msra.mxu0 %v3320
      %3355 = vmatpush.msra.mxu0 %v3319
      %3356 = vmatpush.msra.mxu0 %v3318
      %3357 = vmatpush.msra.mxu0 %v3317
      %3358 = vmatmul.f32.gmra.mxu0 %v3338
      %v3359 = vpop.f32.mrf.mxu0
      %v3360 = vadd.f32 0.0, %v3359
      %3361 = vmatmul.f32.gmra.mxu0 %v3340
      %v3362 = vpop.f32.mrf.mxu0
      %v3363 = vadd.f32 0.0, %v3362
      %3364 = vdwg.mxu0
      %3369 = vst [vmem:[#allocation1] ss:$2 sm:$0xff] %v3300
      %s3370 = scalar_lea.vmem [#allocation1], 1
      %3371 = vst [vmem:[%s3370] ss:$2 sm:$0xff] %v3301
      %s3372 = scalar_lea.vmem [#allocation1], 16
      %3373 = vst [vmem:[%s3372] ss:$2 sm:$0xff] %v3302
      %s3374 = scalar_lea.vmem [#allocation1], 17
      %3375 = vst [vmem:[%s3374] ss:$2 sm:$0xff] %v3303
      %v3376 = vld.sshfl [vmem:[#allocation1] sm:$0xff pattern:$0x75316420]
      %v3377 = vld.sshfl [vmem:[#allocation1 + $0x10] sm:$0xff pattern:$0x75316420]
      %v3378 = vsel %vm3206, %v3376, 0
      %v3380 = vsel %vm3206, %v3377, 0
      %3382 = vmatpush.msra.mxu0 0.0
      %3383 = vmatpush.msra.mxu0 0.0
      %3384 = vmatpush.msra.mxu0 0.0
      %3385 = vmatpush.msra.mxu0 0.0
      %3386 = vmatpush.msra.mxu0 0.0
      %3387 = vmatpush.msra.mxu0 0.0
      %3388 = vmatpush.msra.mxu0 0.0
      %3389 = vmatpush.msra.mxu0 0.0
      %3390 = vmatpush.msra.mxu0 %v3311
      %3391 = vmatpush.msra.mxu0 %v3310
      %3392 = vmatpush.msra.mxu0 %v3309
      %3393 = vmatpush.msra.mxu0 %v3308
      %3394 = vmatpush.msra.mxu0 %v3307
      %3395 = vmatpush.msra.mxu0 %v3306
      %3396 = vmatpush.msra.mxu0 %v3305
      %3397 = vmatpush.msra.mxu0 %v3304
      %3398 = vmatmul.f32.gmra.mxu0 %v3378
      %v3399 = vpop.f32.mrf.mxu0
      %v3400 = vadd.f32 %v3360, %v3399
      %3401 = vmatmul.f32.gmra.mxu0 %v3380
      %v3402 = vpop.f32.mrf.mxu0
      %v3403 = vadd.f32 %v3363, %v3402
      %3404 = vdwg.mxu0
      %v3405 = vld [vmem:[#allocation3 + $0x2] sm:$0xf]
      %v3406 = vld [vmem:[#allocation3 + $0xa] sm:$0xf]
      %v3407 = vld [vmem:[#allocation3 + $0x12] sm:$0xf]
      %v3408 = vld [vmem:[#allocation3 + $0x1a] sm:$0xf]
      %s3409 = scalar_lea.vmem %s5, 128
      %v3410 = vld [vmem:[%s3409] sm:$0xff]
      %v3411 = vld [vmem:[%s3409 + $0x8] sm:$0xff]
      %v3412 = vld [vmem:[%s3409 + $0x10] sm:$0xff]
      %v3413 = vld [vmem:[%s3409 + $0x18] sm:$0xff]
      %v3414 = vld [vmem:[%s3409 + $0x20] sm:$0xff]
      %v3415 = vld [vmem:[%s3409 + $0x28] sm:$0xff]
      %v3416 = vld [vmem:[%s3409 + $0x30] sm:$0xff]
      %v3417 = vld [vmem:[%s3409 + $0x38] sm:$0xff]
      %3422 = vst [vmem:[#allocation1] ss:$2 sm:$0xff] %v3405
      %s3423 = scalar_lea.vmem [#allocation1], 1
      %3424 = vst [vmem:[%s3423] ss:$2 sm:$0xff] %v3406
      %s3425 = scalar_lea.vmem [#allocation1], 16
      %3426 = vst [vmem:[%s3425] ss:$2 sm:$0xff] %v3407
      %s3427 = scalar_lea.vmem [#allocation1], 17
      %3428 = vst [vmem:[%s3427] ss:$2 sm:$0xff] %v3408
      %v3429 = vld.sshfl [vmem:[#allocation1] sm:$0xff pattern:$0x75316420]
      %v3430 = vld.sshfl [vmem:[#allocation1 + $0x10] sm:$0xff pattern:$0x75316420]
      %v3431 = vsel %vm3206, %v3429, 0
      %v3433 = vsel %vm3206, %v3430, 0
      %3435 = vmatpush.msra.mxu0 0.0
      %3436 = vmatpush.msra.mxu0 0.0
      %3437 = vmatpush.msra.mxu0 0.0
      %3438 = vmatpush.msra.mxu0 0.0
      %3439 = vmatpush.msra.mxu0 0.0
      %3440 = vmatpush.msra.mxu0 0.0
      %3441 = vmatpush.msra.mxu0 0.0
      %3442 = vmatpush.msra.mxu0 0.0
      %3443 = vmatpush.msra.mxu0 %v3417
      %3444 = vmatpush.msra.mxu0 %v3416
      %3445 = vmatpush.msra.mxu0 %v3415
      %3446 = vmatpush.msra.mxu0 %v3414
      %3447 = vmatpush.msra.mxu0 %v3413
      %3448 = vmatpush.msra.mxu0 %v3412
      %3449 = vmatpush.msra.mxu0 %v3411
      %3450 = vmatpush.msra.mxu0 %v3410
      %3451 = vmatmul.f32.gmra.mxu0 %v3431
      %v3452 = vpop.f32.mrf.mxu0
      %v3453 = vadd.f32 0.0, %v3452
      %3454 = vmatmul.f32.gmra.mxu0 %v3433
      %v3455 = vpop.f32.mrf.mxu0
      %v3456 = vadd.f32 0.0, %v3455
      %3457 = vdwg.mxu0
      %v3458 = vadd.f32 %v3400, %v3453
      %v3459 = vadd.f32 %v3403, %v3456
      %v3460 = vld [vmem:[%s3294] sm:$0xf]
      %v3461 = vld [vmem:[%s3294 + $0x8] sm:$0xf]
      %v3462 = vld [vmem:[%s3294 + $0x10] sm:$0xf]
      %v3463 = vld [vmem:[%s3294 + $0x18] sm:$0xf]
      %s3464 = scalar_lea.vmem %s5, 192
      %v3465 = vld [vmem:[%s3464] sm:$0xff]
      %v3466 = vld [vmem:[%s3464 + $0x8] sm:$0xff]
      %v3467 = vld [vmem:[%s3464 + $0x10] sm:$0xff]
      %v3468 = vld [vmem:[%s3464 + $0x18] sm:$0xff]
      %v3469 = vld [vmem:[%s3464 + $0x20] sm:$0xff]
      %v3470 = vld [vmem:[%s3464 + $0x28] sm:$0xff]
      %v3471 = vld [vmem:[%s3464 + $0x30] sm:$0xff]
      %v3472 = vld [vmem:[%s3464 + $0x38] sm:$0xff]
      %3477 = vst [vmem:[#allocation1] ss:$2 sm:$0xff] %v3460
      %s3478 = scalar_lea.vmem [#allocation1], 1
      %3479 = vst [vmem:[%s3478] ss:$2 sm:$0xff] %v3461
      %s3480 = scalar_lea.vmem [#allocation1], 16
      %3481 = vst [vmem:[%s3480] ss:$2 sm:$0xff] %v3462
      %s3482 = scalar_lea.vmem [#allocation1], 17
      %3483 = vst [vmem:[%s3482] ss:$2 sm:$0xff] %v3463
      %v3484 = vld.sshfl [vmem:[#allocation1] sm:$0xff pattern:$0x75316420]
      %v3485 = vld.sshfl [vmem:[#allocation1 + $0x10] sm:$0xff pattern:$0x75316420]
      %v3486 = vsel %vm3206, %v3484, 0
      %v3488 = vsel %vm3206, %v3485, 0
      %3490 = vmatpush.msra.mxu0 0.0
      %3491 = vmatpush.msra.mxu0 0.0
      %3492 = vmatpush.msra.mxu0 0.0
      %3493 = vmatpush.msra.mxu0 0.0
      %3494 = vmatpush.msra.mxu0 0.0
      %3495 = vmatpush.msra.mxu0 0.0
      %3496 = vmatpush.msra.mxu0 0.0
      %3497 = vmatpush.msra.mxu0 0.0
      %3498 = vmatpush.msra.mxu0 %v3472
      %3499 = vmatpush.msra.mxu0 %v3471
      %3500 = vmatpush.msra.mxu0 %v3470
      %3501 = vmatpush.msra.mxu0 %v3469
      %3502 = vmatpush.msra.mxu0 %v3468
      %3503 = vmatpush.msra.mxu0 %v3467
      %3504 = vmatpush.msra.mxu0 %v3466
      %3505 = vmatpush.msra.mxu0 %v3465
      %3506 = vmatmul.f32.gmra.mxu0 %v3486
      %v3507 = vpop.f32.mrf.mxu0
      %v3508 = vadd.f32 0.0, %v3507
      %3509 = vmatmul.f32.gmra.mxu0 %v3488
      %v3510 = vpop.f32.mrf.mxu0
      %v3511 = vadd.f32 0.0, %v3510
      %3512 = vdwg.mxu0
      %v3513 = vadd.f32 %v3458, %v3508
      %v3514 = vadd.f32 %v3459, %v3511
      %v3515 = vld [vmem:[%s3294 + $0x1] sm:$0xf]
      %v3516 = vld [vmem:[%s3294 + $0x9] sm:$0xf]
      %v3517 = vld [vmem:[%s3294 + $0x11] sm:$0xf]
      %v3518 = vld [vmem:[%s3294 + $0x19] sm:$0xf]
      %s3519 = scalar_lea.vmem %s5, 256
      %v3520 = vld [vmem:[%s3519] sm:$0xff]
      %v3521 = vld [vmem:[%s3519 + $0x8] sm:$0xff]
      %v3522 = vld [vmem:[%s3519 + $0x10] sm:$0xff]
      %v3523 = vld [vmem:[%s3519 + $0x18] sm:$0xff]
      %v3524 = vld [vmem:[%s3519 + $0x20] sm:$0xff]
      %v3525 = vld [vmem:[%s3519 + $0x28] sm:$0xff]
      %v3526 = vld [vmem:[%s3519 + $0x30] sm:$0xff]
      %v3527 = vld [vmem:[%s3519 + $0x38] sm:$0xff]
      %3532 = vst [vmem:[#allocation1] ss:$2 sm:$0xff] %v3515
      %s3533 = scalar_lea.vmem [#allocation1], 1
      %3534 = vst [vmem:[%s3533] ss:$2 sm:$0xff] %v3516
      %s3535 = scalar_lea.vmem [#allocation1], 16
      %3536 = vst [vmem:[%s3535] ss:$2 sm:$0xff] %v3517
      %s3537 = scalar_lea.vmem [#allocation1], 17
      %3538 = vst [vmem:[%s3537] ss:$2 sm:$0xff] %v3518
      %v3539 = vld.sshfl [vmem:[#allocation1] sm:$0xff pattern:$0x75316420]
      %v3540 = vld.sshfl [vmem:[#allocation1 + $0x10] sm:$0xff pattern:$0x75316420]
      %v3541 = vsel %vm3206, %v3539, 0
      %v3543 = vsel %vm3206, %v3540, 0
      %3545 = vmatpush.msra.mxu0 0.0
      %3546 = vmatpush.msra.mxu0 0.0
      %3547 = vmatpush.msra.mxu0 0.0
      %3548 = vmatpush.msra.mxu0 0.0
      %3549 = vmatpush.msra.mxu0 0.0
      %3550 = vmatpush.msra.mxu0 0.0
      %3551 = vmatpush.msra.mxu0 0.0
      %3552 = vmatpush.msra.mxu0 0.0
      %3553 = vmatpush.msra.mxu0 %v3527
      %3554 = vmatpush.msra.mxu0 %v3526
      %3555 = vmatpush.msra.mxu0 %v3525
      %3556 = vmatpush.msra.mxu0 %v3524
      %3557 = vmatpush.msra.mxu0 %v3523
      %3558 = vmatpush.msra.mxu0 %v3522
      %3559 = vmatpush.msra.mxu0 %v3521
      %3560 = vmatpush.msra.mxu0 %v3520
      %3561 = vmatmul.f32.gmra.mxu0 %v3541
      %v3562 = vpop.f32.mrf.mxu0
      %v3563 = vadd.f32 0.0, %v3562
      %3564 = vmatmul.f32.gmra.mxu0 %v3543
      %v3565 = vpop.f32.mrf.mxu0
      %v3566 = vadd.f32 0.0, %v3565
      %3567 = vdwg.mxu0
      %v3568 = vadd.f32 %v3513, %v3563
      %v3569 = vadd.f32 %v3514, %v3566
      %v3570 = vld [vmem:[%s3294 + $0x2] sm:$0xf]
      %v3571 = vld [vmem:[%s3294 + $0xa] sm:$0xf]
      %v3572 = vld [vmem:[%s3294 + $0x12] sm:$0xf]
      %v3573 = vld [vmem:[%s3294 + $0x1a] sm:$0xf]
      %s3574 = scalar_lea.vmem %s5, 320
      %v3575 = vld [vmem:[%s3574] sm:$0xff]
      %v3576 = vld [vmem:[%s3574 + $0x8] sm:$0xff]
      %v3577 = vld [vmem:[%s3574 + $0x10] sm:$0xff]
      %v3578 = vld [vmem:[%s3574 + $0x18] sm:$0xff]
      %v3579 = vld [vmem:[%s3574 + $0x20] sm:$0xff]
      %v3580 = vld [vmem:[%s3574 + $0x28] sm:$0xff]
      %v3581 = vld [vmem:[%s3574 + $0x30] sm:$0xff]
      %v3582 = vld [vmem:[%s3574 + $0x38] sm:$0xff]
      %3587 = vst [vmem:[#allocation1] ss:$2 sm:$0xff] %v3570
      %s3588 = scalar_lea.vmem [#allocation1], 1
      %3589 = vst [vmem:[%s3588] ss:$2 sm:$0xff] %v3571
      %s3590 = scalar_lea.vmem [#allocation1], 16
      %3591 = vst [vmem:[%s3590] ss:$2 sm:$0xff] %v3572
      %s3592 = scalar_lea.vmem [#allocation1], 17
      %3593 = vst [vmem:[%s3592] ss:$2 sm:$0xff] %v3573
      %v3594 = vld.sshfl [vmem:[#allocation1] sm:$0xff pattern:$0x75316420]
      %v3595 = vld.sshfl [vmem:[#allocation1 + $0x10] sm:$0xff pattern:$0x75316420]
      %v3596 = vsel %vm3206, %v3594, 0
      %v3598 = vsel %vm3206, %v3595, 0
      %3600 = vmatpush.msra.mxu0 0.0
      %3601 = vmatpush.msra.mxu0 0.0
      %3602 = vmatpush.msra.mxu0 0.0
      %3603 = vmatpush.msra.mxu0 0.0
      %3604 = vmatpush.msra.mxu0 0.0
      %3605 = vmatpush.msra.mxu0 0.0
      %3606 = vmatpush.msra.mxu0 0.0
      %3607 = vmatpush.msra.mxu0 0.0
      %3608 = vmatpush.msra.mxu0 %v3582
      %3609 = vmatpush.msra.mxu0 %v3581
      %3610 = vmatpush.msra.mxu0 %v3580
      %3611 = vmatpush.msra.mxu0 %v3579
      %3612 = vmatpush.msra.mxu0 %v3578
      %3613 = vmatpush.msra.mxu0 %v3577
      %3614 = vmatpush.msra.mxu0 %v3576
      %3615 = vmatpush.msra.mxu0 %v3575
      %3616 = vmatmul.f32.gmra.mxu0 %v3596
      %v3617 = vpop.f32.mrf.mxu0
      %v3618 = vadd.f32 0.0, %v3617
      %3619 = vmatmul.f32.gmra.mxu0 %v3598
      %v3620 = vpop.f32.mrf.mxu0
      %v3621 = vadd.f32 0.0, %v3620
      %3622 = vdwg.mxu0
      %v3623 = vadd.f32 %v3568, %v3618
      %v3624 = vadd.f32 %v3569, %v3621
      %s3625 = scalar_lea.vmem [#allocation3], 16
      %v3626 = vld [vmem:[%s3625] sm:$0xf]
      %v3627 = vld [vmem:[%s3625 + $0x8] sm:$0xf]
      %v3628 = vld [vmem:[%s3625 + $0x10] sm:$0xf]
      %v3629 = vld [vmem:[%s3625 + $0x18] sm:$0xf]
      %s3630 = scalar_lea.vmem %s5, 384
      %v3631 = vld [vmem:[%s3630] sm:$0xff]
      %v3632 = vld [vmem:[%s3630 + $0x8] sm:$0xff]
      %v3633 = vld [vmem:[%s3630 + $0x10] sm:$0xff]
      %v3634 = vld [vmem:[%s3630 + $0x18] sm:$0xff]
      %v3635 = vld [vmem:[%s3630 + $0x20] sm:$0xff]
      %v3636 = vld [vmem:[%s3630 + $0x28] sm:$0xff]
      %v3637 = vld [vmem:[%s3630 + $0x30] sm:$0xff]
      %v3638 = vld [vmem:[%s3630 + $0x38] sm:$0xff]
      %3643 = vst [vmem:[#allocation1] ss:$2 sm:$0xff] %v3626
      %s3644 = scalar_lea.vmem [#allocation1], 1
      %3645 = vst [vmem:[%s3644] ss:$2 sm:$0xff] %v3627
      %s3646 = scalar_lea.vmem [#allocation1], 16
      %3647 = vst [vmem:[%s3646] ss:$2 sm:$0xff] %v3628
      %s3648 = scalar_lea.vmem [#allocation1], 17
      %3649 = vst [vmem:[%s3648] ss:$2 sm:$0xff] %v3629
      %v3650 = vld.sshfl [vmem:[#allocation1] sm:$0xff pattern:$0x75316420]
      %v3651 = vld.sshfl [vmem:[#allocation1 + $0x10] sm:$0xff pattern:$0x75316420]
      %v3652 = vsel %vm3206, %v3650, 0
      %v3654 = vsel %vm3206, %v3651, 0
      %3656 = vmatpush.msra.mxu0 0.0
      %3657 = vmatpush.msra.mxu0 0.0
      %3658 = vmatpush.msra.mxu0 0.0
      %3659 = vmatpush.msra.mxu0 0.0
      %3660 = vmatpush.msra.mxu0 0.0
      %3661 = vmatpush.msra.mxu0 0.0
      %3662 = vmatpush.msra.mxu0 0.0
      %3663 = vmatpush.msra.mxu0 0.0
      %3664 = vmatpush.msra.mxu0 %v3638
      %3665 = vmatpush.msra.mxu0 %v3637
      %3666 = vmatpush.msra.mxu0 %v3636
      %3667 = vmatpush.msra.mxu0 %v3635
      %3668 = vmatpush.msra.mxu0 %v3634
      %3669 = vmatpush.msra.mxu0 %v3633
      %3670 = vmatpush.msra.mxu0 %v3632
      %3671 = vmatpush.msra.mxu0 %v3631
      %3672 = vmatmul.f32.gmra.mxu0 %v3652
      %v3673 = vpop.f32.mrf.mxu0
      %v3674 = vadd.f32 0.0, %v3673
      %3675 = vmatmul.f32.gmra.mxu0 %v3654
      %v3676 = vpop.f32.mrf.mxu0
      %v3677 = vadd.f32 0.0, %v3676
      %3678 = vdwg.mxu0
      %v3679 = vadd.f32 %v3623, %v3674
      %v3680 = vadd.f32 %v3624, %v3677
      %v3681 = vld [vmem:[%s3625 + $0x1] sm:$0xf]
      %v3682 = vld [vmem:[%s3625 + $0x9] sm:$0xf]
      %v3683 = vld [vmem:[%s3625 + $0x11] sm:$0xf]
      %v3684 = vld [vmem:[%s3625 + $0x19] sm:$0xf]
      %s3685 = scalar_lea.vmem %s5, 448
      %v3686 = vld [vmem:[%s3685] sm:$0xff]
      %v3687 = vld [vmem:[%s3685 + $0x8] sm:$0xff]
      %v3688 = vld [vmem:[%s3685 + $0x10] sm:$0xff]
      %v3689 = vld [vmem:[%s3685 + $0x18] sm:$0xff]
      %v3690 = vld [vmem:[%s3685 + $0x20] sm:$0xff]
      %v3691 = vld [vmem:[%s3685 + $0x28] sm:$0xff]
      %v3692 = vld [vmem:[%s3685 + $0x30] sm:$0xff]
      %v3693 = vld [vmem:[%s3685 + $0x38] sm:$0xff]
      %3698 = vst [vmem:[#allocation1] ss:$2 sm:$0xff] %v3681
      %s3699 = scalar_lea.vmem [#allocation1], 1
      %3700 = vst [vmem:[%s3699] ss:$2 sm:$0xff] %v3682
      %s3701 = scalar_lea.vmem [#allocation1], 16
      %3702 = vst [vmem:[%s3701] ss:$2 sm:$0xff] %v3683
      %s3703 = scalar_lea.vmem [#allocation1], 17
      %3704 = vst [vmem:[%s3703] ss:$2 sm:$0xff] %v3684
      %v3705 = vld.sshfl [vmem:[#allocation1] sm:$0xff pattern:$0x75316420]
      %v3706 = vld.sshfl [vmem:[#allocation1 + $0x10] sm:$0xff pattern:$0x75316420]
      %v3707 = vsel %vm3206, %v3705, 0
      %v3709 = vsel %vm3206, %v3706, 0
      %3711 = vmatpush.msra.mxu0 0.0
      %3712 = vmatpush.msra.mxu0 0.0
      %3713 = vmatpush.msra.mxu0 0.0
      %3714 = vmatpush.msra.mxu0 0.0
      %3715 = vmatpush.msra.mxu0 0.0
      %3716 = vmatpush.msra.mxu0 0.0
      %3717 = vmatpush.msra.mxu0 0.0
      %3718 = vmatpush.msra.mxu0 0.0
      %3719 = vmatpush.msra.mxu0 %v3693
      %3720 = vmatpush.msra.mxu0 %v3692
      %3721 = vmatpush.msra.mxu0 %v3691
      %3722 = vmatpush.msra.mxu0 %v3690
      %3723 = vmatpush.msra.mxu0 %v3689
      %3724 = vmatpush.msra.mxu0 %v3688
      %3725 = vmatpush.msra.mxu0 %v3687
      %3726 = vmatpush.msra.mxu0 %v3686
      %3727 = vmatmul.f32.gmra.mxu0 %v3707
      %v3728 = vpop.f32.mrf.mxu0
      %v3729 = vadd.f32 0.0, %v3728
      %3730 = vmatmul.f32.gmra.mxu0 %v3709
      %v3731 = vpop.f32.mrf.mxu0
      %v3732 = vadd.f32 0.0, %v3731
      %3733 = vdwg.mxu0
      %v3734 = vadd.f32 %v3679, %v3729
      %v3735 = vadd.f32 %v3680, %v3732
      %v3736 = vld [vmem:[%s3625 + $0x2] sm:$0xf]
      %v3737 = vld [vmem:[%s3625 + $0xa] sm:$0xf]
      %v3738 = vld [vmem:[%s3625 + $0x12] sm:$0xf]
      %v3739 = vld [vmem:[%s3625 + $0x1a] sm:$0xf]
      %s3740 = scalar_lea.vmem %s5, 512
      %v3741 = vld [vmem:[%s3740] sm:$0xff]
      %v3742 = vld [vmem:[%s3740 + $0x8] sm:$0xff]
      %v3743 = vld [vmem:[%s3740 + $0x10] sm:$0xff]
      %v3744 = vld [vmem:[%s3740 + $0x18] sm:$0xff]
      %v3745 = vld [vmem:[%s3740 + $0x20] sm:$0xff]
      %v3746 = vld [vmem:[%s3740 + $0x28] sm:$0xff]
      %v3747 = vld [vmem:[%s3740 + $0x30] sm:$0xff]
      %v3748 = vld [vmem:[%s3740 + $0x38] sm:$0xff]
      %3753 = vst [vmem:[#allocation1] ss:$2 sm:$0xff] %v3736
      %s3754 = scalar_lea.vmem [#allocation1], 1
      %3755 = vst [vmem:[%s3754] ss:$2 sm:$0xff] %v3737
      %s3756 = scalar_lea.vmem [#allocation1], 16
      %3757 = vst [vmem:[%s3756] ss:$2 sm:$0xff] %v3738
      %s3758 = scalar_lea.vmem [#allocation1], 17
      %3759 = vst [vmem:[%s3758] ss:$2 sm:$0xff] %v3739
      %v3760 = vld.sshfl [vmem:[#allocation1] sm:$0xff pattern:$0x75316420]
      %v3761 = vld.sshfl [vmem:[#allocation1 + $0x10] sm:$0xff pattern:$0x75316420]
      %v3762 = vsel %vm3206, %v3760, 0
      %v3764 = vsel %vm3206, %v3761, 0
      %3766 = vmatpush.msra.mxu0 0.0
      %3767 = vmatpush.msra.mxu0 0.0
      %3768 = vmatpush.msra.mxu0 0.0
      %3769 = vmatpush.msra.mxu0 0.0
      %3770 = vmatpush.msra.mxu0 0.0
      %3771 = vmatpush.msra.mxu0 0.0
      %3772 = vmatpush.msra.mxu0 0.0
      %3773 = vmatpush.msra.mxu0 0.0
      %3774 = vmatpush.msra.mxu0 %v3748
      %3775 = vmatpush.msra.mxu0 %v3747
      %3776 = vmatpush.msra.mxu0 %v3746
      %3777 = vmatpush.msra.mxu0 %v3745
      %3778 = vmatpush.msra.mxu0 %v3744
      %3779 = vmatpush.msra.mxu0 %v3743
      %3780 = vmatpush.msra.mxu0 %v3742
      %3781 = vmatpush.msra.mxu0 %v3741
      %3782 = vmatmul.f32.gmra.mxu0 %v3762
      %v3783 = vpop.f32.mrf.mxu0
      %v3784 = vadd.f32 0.0, %v3783
      %3785 = vmatmul.f32.gmra.mxu0 %v3764
      %v3786 = vpop.f32.mrf.mxu0
      %v3787 = vadd.f32 0.0, %v3786
      %3788 = vdwg.mxu0
      %v3789 = vadd.f32 %v3734, %v3784
      %v3790 = vadd.f32 %v3735, %v3787
      %v3791 = vld [vmem:[%s6] sm:$0x1]
      %v3793 = vperm.slane %v3791, 0
      %v3795 = vadd.f32 %v3789, %v3793
      %v3796 = vadd.f32 %v3790, %v3793
      %v3797 = vmax.f32 %v3795, 0.0
      %v3798 = vmax.f32 %v3796, 0.0
      %v3801 = vrot.slane %v3797, 2
      %v3802 = vrot.slane %v3797, 4
      %v3803 = vrot.slane %v3797, 6
      %v3804 = vrot.slane %v3798, 2
      %v3805 = vrot.slane %v3798, 4
      %v3806 = vrot.slane %v3798, 6
      %vm3813 = vcmask 1041408
      %v3814 = vsel %vm3813, %v3797, -inf
      %v3815 = vrot.slane %v3814, 4
      %v3816 = vmax.f32 %v3814, %v3815
      %v3817 = vrot.slane %v3816, 2
      %v3818 = vmax.f32 %v3816, %v3817
      %v3819 = vrot.slane %v3818, 1
      %v3820 = vmax.f32 %v3818, %v3819
      %v3821 = vsel %vm3813, %v3801, -inf
      %v3822 = vrot.slane %v3821, 4
      %v3823 = vmax.f32 %v3821, %v3822
      %v3824 = vrot.slane %v3823, 2
      %v3825 = vmax.f32 %v3823, %v3824
      %v3826 = vrot.slane %v3825, 1
      %v3827 = vmax.f32 %v3825, %v3826
      %v3828 = vsel %vm3813, %v3802, -inf
      %v3829 = vrot.slane %v3828, 4
      %v3830 = vmax.f32 %v3828, %v3829
      %v3831 = vrot.slane %v3830, 2
      %v3832 = vmax.f32 %v3830, %v3831
      %v3833 = vrot.slane %v3832, 1
      %v3834 = vmax.f32 %v3832, %v3833
      %v3835 = vsel %vm3813, %v3803, -inf
      %v3836 = vrot.slane %v3835, 4
      %v3837 = vmax.f32 %v3835, %v3836
      %v3838 = vrot.slane %v3837, 2
      %v3839 = vmax.f32 %v3837, %v3838
      %v3840 = vrot.slane %v3839, 1
      %v3841 = vmax.f32 %v3839, %v3840
      %v3842 = vsel %vm3813, %v3798, -inf
      %v3843 = vrot.slane %v3842, 4
      %v3844 = vmax.f32 %v3842, %v3843
      %v3845 = vrot.slane %v3844, 2
      %v3846 = vmax.f32 %v3844, %v3845
      %v3847 = vrot.slane %v3846, 1
      %v3848 = vmax.f32 %v3846, %v3847
      %v3849 = vsel %vm3813, %v3804, -inf
      %v3850 = vrot.slane %v3849, 4
      %v3851 = vmax.f32 %v3849, %v3850
      %v3852 = vrot.slane %v3851, 2
      %v3853 = vmax.f32 %v3851, %v3852
      %v3854 = vrot.slane %v3853, 1
      %v3855 = vmax.f32 %v3853, %v3854
      %v3856 = vsel %vm3813, %v3805, -inf
      %v3857 = vrot.slane %v3856, 4
      %v3858 = vmax.f32 %v3856, %v3857
      %v3859 = vrot.slane %v3858, 2
      %v3860 = vmax.f32 %v3858, %v3859
      %v3861 = vrot.slane %v3860, 1
      %v3862 = vmax.f32 %v3860, %v3861
      %v3863 = vsel %vm3813, %v3806, -inf
      %v3864 = vrot.slane %v3863, 4
      %v3865 = vmax.f32 %v3863, %v3864
      %v3866 = vrot.slane %v3865, 2
      %v3867 = vmax.f32 %v3865, %v3866
      %v3868 = vrot.slane %v3867, 1
      %v3869 = vmax.f32 %v3867, %v3868
      %v3870 = vmax.f32 %v3820, %v3834
      %v3871 = vmax.f32 %v3827, %v3841
      %v3872 = vmax.f32 %v3848, %v3862
      %v3873 = vmax.f32 %v3855, %v3869
      %v3874 = vld [vmem:[%s8] sm:$0xf]
      %v3875 = vld [vmem:[%s7] sm:$0xff]
      %v3876 = vld [vmem:[%s7 + $0x8] sm:$0xff]
      %v3877 = vld [vmem:[%s7 + $0x10] sm:$0xff]
      %v3878 = vld [vmem:[%s7 + $0x18] sm:$0xff]
      %v3879 = vld [vmem:[%s7 + $0x20] sm:$0xff]
      %v3880 = vld [vmem:[%s7 + $0x28] sm:$0xff]
      %v3881 = vld [vmem:[%s7 + $0x30] sm:$0xff]
      %v3882 = vld [vmem:[%s7 + $0x38] sm:$0xff]
      %v3883 = vld [vmem:[%s7 + $0x40] sm:$0xff]
      %v3884 = vld [vmem:[%s7 + $0x48] sm:$0xff]
      %v3885 = vld [vmem:[%s7 + $0x50] sm:$0xff]
      %v3886 = vld [vmem:[%s7 + $0x58] sm:$0xff]
      %v3887 = vld [vmem:[%s7 + $0x60] sm:$0xff]
      %v3888 = vld [vmem:[%s7 + $0x68] sm:$0xff]
      %v3889 = vld [vmem:[%s7 + $0x70] sm:$0xff]
      %v3890 = vld [vmem:[%s7 + $0x78] sm:$0xff]
      %v3891 = vld [vmem:[%s7 + $0x80] sm:$0xff]
      %v3892 = vld [vmem:[%s7 + $0x88] sm:$0xff]
      %v3893 = vld [vmem:[%s7 + $0x90] sm:$0xff]
      %v3894 = vld [vmem:[%s7 + $0x98] sm:$0xff]
      %v3895 = vld [vmem:[%s7 + $0xa0] sm:$0xff]
      %v3896 = vld [vmem:[%s7 + $0xa8] sm:$0xff]
      %v3897 = vld [vmem:[%s7 + $0xb0] sm:$0xff]
      %v3898 = vld [vmem:[%s7 + $0xb8] sm:$0xff]
      %v3899 = vld [vmem:[%s7 + $0xc0] sm:$0xff]
      %v3900 = vld [vmem:[%s7 + $0xc8] sm:$0xff]
      %v3901 = vld [vmem:[%s7 + $0xd0] sm:$0xff]
      %v3902 = vld [vmem:[%s7 + $0xd8] sm:$0xff]
      %v3903 = vld [vmem:[%s7 + $0xe0] sm:$0xff]
      %v3904 = vld [vmem:[%s7 + $0xe8] sm:$0xff]
      %v3905 = vld [vmem:[%s7 + $0xf0] sm:$0xff]
      %v3906 = vld [vmem:[%s7 + $0xf8] sm:$0xff]
      %v3907 = vld [vmem:[%s7 + $0x100] sm:$0xff]
      %v3908 = vld [vmem:[%s7 + $0x108] sm:$0xff]
      %v3909 = vld [vmem:[%s7 + $0x110] sm:$0xff]
      %v3910 = vld [vmem:[%s7 + $0x118] sm:$0xff]
      %v3911 = vld [vmem:[%s7 + $0x120] sm:$0xff]
      %v3912 = vld [vmem:[%s7 + $0x128] sm:$0xff]
      %v3913 = vld [vmem:[%s7 + $0x130] sm:$0xff]
      %v3914 = vld [vmem:[%s7 + $0x138] sm:$0xff]
      %v3915 = vld [vmem:[%s7 + $0x140] sm:$0xff]
      %v3916 = vld [vmem:[%s7 + $0x148] sm:$0xff]
      %v3917 = vld [vmem:[%s7 + $0x150] sm:$0xff]
      %v3918 = vld [vmem:[%s7 + $0x158] sm:$0xff]
      %v3919 = vld [vmem:[%s7 + $0x160] sm:$0xff]
      %v3920 = vld [vmem:[%s7 + $0x168] sm:$0xff]
      %v3921 = vld [vmem:[%s7 + $0x170] sm:$0xff]
      %v3922 = vld [vmem:[%s7 + $0x178] sm:$0xff]
      %v3923 = vld [vmem:[%s7 + $0x180] sm:$0xff]
      %v3924 = vld [vmem:[%s7 + $0x188] sm:$0xff]
      %v3925 = vld [vmem:[%s7 + $0x190] sm:$0xff]
      %v3926 = vld [vmem:[%s7 + $0x198] sm:$0xff]
      %v3927 = vld [vmem:[%s7 + $0x1a0] sm:$0xff]
      %v3928 = vld [vmem:[%s7 + $0x1a8] sm:$0xff]
      %v3929 = vld [vmem:[%s7 + $0x1b0] sm:$0xff]
      %v3930 = vld [vmem:[%s7 + $0x1b8] sm:$0xff]
      %v3931 = vld [vmem:[%s7 + $0x1c0] sm:$0xff]
      %v3932 = vld [vmem:[%s7 + $0x1c8] sm:$0xff]
      %v3933 = vld [vmem:[%s7 + $0x1d0] sm:$0xff]
      %v3934 = vld [vmem:[%s7 + $0x1d8] sm:$0xff]
      %v3935 = vld [vmem:[%s7 + $0x1e0] sm:$0xff]
      %v3936 = vld [vmem:[%s7 + $0x1e8] sm:$0xff]
      %v3937 = vld [vmem:[%s7 + $0x1f0] sm:$0xff]
      %v3938 = vld [vmem:[%s7 + $0x1f8] sm:$0xff]
      %3939 = vmatpush.msra.mxu0 %v3935
      %3940 = vmatpush.msra.mxu0 %v3931
      %3941 = vmatpush.msra.mxu0 %v3927
      %3942 = vmatpush.msra.mxu0 %v3923
      %3943 = vmatpush.msra.mxu0 %v3919
      %3944 = vmatpush.msra.mxu0 %v3915
      %3945 = vmatpush.msra.mxu0 %v3911
      %3946 = vmatpush.msra.mxu0 %v3907
      %3947 = vmatpush.msra.mxu0 %v3903
      %3948 = vmatpush.msra.mxu0 %v3899
      %3949 = vmatpush.msra.mxu0 %v3895
      %3950 = vmatpush.msra.mxu0 %v3891
      %3951 = vmatpush.msra.mxu0 %v3887
      %3952 = vmatpush.msra.mxu0 %v3883
      %3953 = vmatpush.msra.mxu0 %v3879
      %3954 = vmatpush.msra.mxu0 %v3875
      %3955 = vmatmul.f32.gmra.mxu0 %v3870
      %v3956 = vpop.f32.mrf.mxu0
      %v3957 = vadd.f32 0.0, %v3956
      %3958 = vdwg.mxu0
      %3959 = vmatpush.msra.mxu0 %v3936
      %3960 = vmatpush.msra.mxu0 %v3932
      %3961 = vmatpush.msra.mxu0 %v3928
      %3962 = vmatpush.msra.mxu0 %v3924
      %3963 = vmatpush.msra.mxu0 %v3920
      %3964 = vmatpush.msra.mxu0 %v3916
      %3965 = vmatpush.msra.mxu0 %v3912
      %3966 = vmatpush.msra.mxu0 %v3908
      %3967 = vmatpush.msra.mxu0 %v3904
      %3968 = vmatpush.msra.mxu0 %v3900
      %3969 = vmatpush.msra.mxu0 %v3896
      %3970 = vmatpush.msra.mxu0 %v3892
      %3971 = vmatpush.msra.mxu0 %v3888
      %3972 = vmatpush.msra.mxu0 %v3884
      %3973 = vmatpush.msra.mxu0 %v3880
      %3974 = vmatpush.msra.mxu0 %v3876
      %3975 = vmatmul.f32.gmra.mxu0 %v3870
      %v3976 = vpop.f32.mrf.mxu0
      %v3977 = vadd.f32 0.0, %v3976
      %3978 = vdwg.mxu0
      %3979 = vmatpush.msra.mxu0 %v3937
      %3980 = vmatpush.msra.mxu0 %v3933
      %3981 = vmatpush.msra.mxu0 %v3929
      %3982 = vmatpush.msra.mxu0 %v3925
      %3983 = vmatpush.msra.mxu0 %v3921
      %3984 = vmatpush.msra.mxu0 %v3917
      %3985 = vmatpush.msra.mxu0 %v3913
      %3986 = vmatpush.msra.mxu0 %v3909
      %3987 = vmatpush.msra.mxu0 %v3905
      %3988 = vmatpush.msra.mxu0 %v3901
      %3989 = vmatpush.msra.mxu0 %v3897
      %3990 = vmatpush.msra.mxu0 %v3893
      %3991 = vmatpush.msra.mxu0 %v3889
      %3992 = vmatpush.msra.mxu0 %v3885
      %3993 = vmatpush.msra.mxu0 %v3881
      %3994 = vmatpush.msra.mxu0 %v3877
      %3995 = vmatmul.f32.gmra.mxu0 %v3870
      %v3996 = vpop.f32.mrf.mxu0
      %v3997 = vadd.f32 0.0, %v3996
      %3998 = vdwg.mxu0
      %3999 = vmatpush.msra.mxu0 %v3938
      %4000 = vmatpush.msra.mxu0 %v3934
      %4001 = vmatpush.msra.mxu0 %v3930
      %4002 = vmatpush.msra.mxu0 %v3926
      %4003 = vmatpush.msra.mxu0 %v3922
      %4004 = vmatpush.msra.mxu0 %v3918
      %4005 = vmatpush.msra.mxu0 %v3914
      %4006 = vmatpush.msra.mxu0 %v3910
      %4007 = vmatpush.msra.mxu0 %v3906
      %4008 = vmatpush.msra.mxu0 %v3902
      %4009 = vmatpush.msra.mxu0 %v3898
      %4010 = vmatpush.msra.mxu0 %v3894
      %4011 = vmatpush.msra.mxu0 %v3890
      %4012 = vmatpush.msra.mxu0 %v3886
      %4013 = vmatpush.msra.mxu0 %v3882
      %4014 = vmatpush.msra.mxu0 %v3878
      %4015 = vmatmul.f32.gmra.mxu0 %v3870
      %v4016 = vpop.f32.mrf.mxu0
      %v4017 = vadd.f32 0.0, %v4016
      %4018 = vdwg.mxu0
      %v4023 = vrot.slane %v3977, 7
      %v4024 = vrot.slane %v3997, 6
      %v4025 = vrot.slane %v4017, 5
      %vm4026 = vcmask 1040384
      %v4027 = vsel %vm4026, %v3957, %v4023
      %v4028 = vsel %vm2069, %v4024, %v4025
      %v4029 = vsel %vm3813, %v4027, %v4028
      %v4031 = vadd.f32 %v3874, %v4029
      %s4032 = scalar_lea.vmem %s7, 512
      %v4033 = vld [vmem:[%s4032] sm:$0xff]
      %v4034 = vld [vmem:[%s4032 + $0x8] sm:$0xff]
      %v4035 = vld [vmem:[%s4032 + $0x10] sm:$0xff]
      %v4036 = vld [vmem:[%s4032 + $0x18] sm:$0xff]
      %v4037 = vld [vmem:[%s4032 + $0x20] sm:$0xff]
      %v4038 = vld [vmem:[%s4032 + $0x28] sm:$0xff]
      %v4039 = vld [vmem:[%s4032 + $0x30] sm:$0xff]
      %v4040 = vld [vmem:[%s4032 + $0x38] sm:$0xff]
      %v4041 = vld [vmem:[%s4032 + $0x40] sm:$0xff]
      %v4042 = vld [vmem:[%s4032 + $0x48] sm:$0xff]
      %v4043 = vld [vmem:[%s4032 + $0x50] sm:$0xff]
      %v4044 = vld [vmem:[%s4032 + $0x58] sm:$0xff]
      %v4045 = vld [vmem:[%s4032 + $0x60] sm:$0xff]
      %v4046 = vld [vmem:[%s4032 + $0x68] sm:$0xff]
      %v4047 = vld [vmem:[%s4032 + $0x70] sm:$0xff]
      %v4048 = vld [vmem:[%s4032 + $0x78] sm:$0xff]
      %v4049 = vld [vmem:[%s4032 + $0x80] sm:$0xff]
      %v4050 = vld [vmem:[%s4032 + $0x88] sm:$0xff]
      %v4051 = vld [vmem:[%s4032 + $0x90] sm:$0xff]
      %v4052 = vld [vmem:[%s4032 + $0x98] sm:$0xff]
      %v4053 = vld [vmem:[%s4032 + $0xa0] sm:$0xff]
      %v4054 = vld [vmem:[%s4032 + $0xa8] sm:$0xff]
      %v4055 = vld [vmem:[%s4032 + $0xb0] sm:$0xff]
      %v4056 = vld [vmem:[%s4032 + $0xb8] sm:$0xff]
      %v4057 = vld [vmem:[%s4032 + $0xc0] sm:$0xff]
      %v4058 = vld [vmem:[%s4032 + $0xc8] sm:$0xff]
      %v4059 = vld [vmem:[%s4032 + $0xd0] sm:$0xff]
      %v4060 = vld [vmem:[%s4032 + $0xd8] sm:$0xff]
      %v4061 = vld [vmem:[%s4032 + $0xe0] sm:$0xff]
      %v4062 = vld [vmem:[%s4032 + $0xe8] sm:$0xff]
      %v4063 = vld [vmem:[%s4032 + $0xf0] sm:$0xff]
      %v4064 = vld [vmem:[%s4032 + $0xf8] sm:$0xff]
      %v4065 = vld [vmem:[%s4032 + $0x100] sm:$0xff]
      %v4066 = vld [vmem:[%s4032 + $0x108] sm:$0xff]
      %v4067 = vld [vmem:[%s4032 + $0x110] sm:$0xff]
      %v4068 = vld [vmem:[%s4032 + $0x118] sm:$0xff]
      %v4069 = vld [vmem:[%s4032 + $0x120] sm:$0xff]
      %v4070 = vld [vmem:[%s4032 + $0x128] sm:$0xff]
      %v4071 = vld [vmem:[%s4032 + $0x130] sm:$0xff]
      %v4072 = vld [vmem:[%s4032 + $0x138] sm:$0xff]
      %v4073 = vld [vmem:[%s4032 + $0x140] sm:$0xff]
      %v4074 = vld [vmem:[%s4032 + $0x148] sm:$0xff]
      %v4075 = vld [vmem:[%s4032 + $0x150] sm:$0xff]
      %v4076 = vld [vmem:[%s4032 + $0x158] sm:$0xff]
      %v4077 = vld [vmem:[%s4032 + $0x160] sm:$0xff]
      %v4078 = vld [vmem:[%s4032 + $0x168] sm:$0xff]
      %v4079 = vld [vmem:[%s4032 + $0x170] sm:$0xff]
      %v4080 = vld [vmem:[%s4032 + $0x178] sm:$0xff]
      %v4081 = vld [vmem:[%s4032 + $0x180] sm:$0xff]
      %v4082 = vld [vmem:[%s4032 + $0x188] sm:$0xff]
      %v4083 = vld [vmem:[%s4032 + $0x190] sm:$0xff]
      %v4084 = vld [vmem:[%s4032 + $0x198] sm:$0xff]
      %v4085 = vld [vmem:[%s4032 + $0x1a0] sm:$0xff]
      %v4086 = vld [vmem:[%s4032 + $0x1a8] sm:$0xff]
      %v4087 = vld [vmem:[%s4032 + $0x1b0] sm:$0xff]
      %v4088 = vld [vmem:[%s4032 + $0x1b8] sm:$0xff]
      %v4089 = vld [vmem:[%s4032 + $0x1c0] sm:$0xff]
      %v4090 = vld [vmem:[%s4032 + $0x1c8] sm:$0xff]
      %v4091 = vld [vmem:[%s4032 + $0x1d0] sm:$0xff]
      %v4092 = vld [vmem:[%s4032 + $0x1d8] sm:$0xff]
      %v4093 = vld [vmem:[%s4032 + $0x1e0] sm:$0xff]
      %v4094 = vld [vmem:[%s4032 + $0x1e8] sm:$0xff]
      %v4095 = vld [vmem:[%s4032 + $0x1f0] sm:$0xff]
      %v4096 = vld [vmem:[%s4032 + $0x1f8] sm:$0xff]
      %4097 = vmatpush.msra.mxu0 %v4093
      %4098 = vmatpush.msra.mxu0 %v4089
      %4099 = vmatpush.msra.mxu0 %v4085
      %4100 = vmatpush.msra.mxu0 %v4081
      %4101 = vmatpush.msra.mxu0 %v4077
      %4102 = vmatpush.msra.mxu0 %v4073
      %4103 = vmatpush.msra.mxu0 %v4069
      %4104 = vmatpush.msra.mxu0 %v4065
      %4105 = vmatpush.msra.mxu0 %v4061
      %4106 = vmatpush.msra.mxu0 %v4057
      %4107 = vmatpush.msra.mxu0 %v4053
      %4108 = vmatpush.msra.mxu0 %v4049
      %4109 = vmatpush.msra.mxu0 %v4045
      %4110 = vmatpush.msra.mxu0 %v4041
      %4111 = vmatpush.msra.mxu0 %v4037
      %4112 = vmatpush.msra.mxu0 %v4033
      %4113 = vmatmul.f32.gmra.mxu0 %v3871
      %v4114 = vpop.f32.mrf.mxu0
      %v4115 = vadd.f32 0.0, %v4114
      %4116 = vdwg.mxu0
      %4117 = vmatpush.msra.mxu0 %v4094
      %4118 = vmatpush.msra.mxu0 %v4090
      %4119 = vmatpush.msra.mxu0 %v4086
      %4120 = vmatpush.msra.mxu0 %v4082
      %4121 = vmatpush.msra.mxu0 %v4078
      %4122 = vmatpush.msra.mxu0 %v4074
      %4123 = vmatpush.msra.mxu0 %v4070
      %4124 = vmatpush.msra.mxu0 %v4066
      %4125 = vmatpush.msra.mxu0 %v4062
      %4126 = vmatpush.msra.mxu0 %v4058
      %4127 = vmatpush.msra.mxu0 %v4054
      %4128 = vmatpush.msra.mxu0 %v4050
      %4129 = vmatpush.msra.mxu0 %v4046
      %4130 = vmatpush.msra.mxu0 %v4042
      %4131 = vmatpush.msra.mxu0 %v4038
      %4132 = vmatpush.msra.mxu0 %v4034
      %4133 = vmatmul.f32.gmra.mxu0 %v3871
      %v4134 = vpop.f32.mrf.mxu0
      %v4135 = vadd.f32 0.0, %v4134
      %4136 = vdwg.mxu0
      %4137 = vmatpush.msra.mxu0 %v4095
      %4138 = vmatpush.msra.mxu0 %v4091
      %4139 = vmatpush.msra.mxu0 %v4087
      %4140 = vmatpush.msra.mxu0 %v4083
      %4141 = vmatpush.msra.mxu0 %v4079
      %4142 = vmatpush.msra.mxu0 %v4075
      %4143 = vmatpush.msra.mxu0 %v4071
      %4144 = vmatpush.msra.mxu0 %v4067
      %4145 = vmatpush.msra.mxu0 %v4063
      %4146 = vmatpush.msra.mxu0 %v4059
      %4147 = vmatpush.msra.mxu0 %v4055
      %4148 = vmatpush.msra.mxu0 %v4051
      %4149 = vmatpush.msra.mxu0 %v4047
      %4150 = vmatpush.msra.mxu0 %v4043
      %4151 = vmatpush.msra.mxu0 %v4039
      %4152 = vmatpush.msra.mxu0 %v4035
      %4153 = vmatmul.f32.gmra.mxu0 %v3871
      %v4154 = vpop.f32.mrf.mxu0
      %v4155 = vadd.f32 0.0, %v4154
      %4156 = vdwg.mxu0
      %4157 = vmatpush.msra.mxu0 %v4096
      %4158 = vmatpush.msra.mxu0 %v4092
      %4159 = vmatpush.msra.mxu0 %v4088
      %4160 = vmatpush.msra.mxu0 %v4084
      %4161 = vmatpush.msra.mxu0 %v4080
      %4162 = vmatpush.msra.mxu0 %v4076
      %4163 = vmatpush.msra.mxu0 %v4072
      %4164 = vmatpush.msra.mxu0 %v4068
      %4165 = vmatpush.msra.mxu0 %v4064
      %4166 = vmatpush.msra.mxu0 %v4060
      %4167 = vmatpush.msra.mxu0 %v4056
      %4168 = vmatpush.msra.mxu0 %v4052
      %4169 = vmatpush.msra.mxu0 %v4048
      %4170 = vmatpush.msra.mxu0 %v4044
      %4171 = vmatpush.msra.mxu0 %v4040
      %4172 = vmatpush.msra.mxu0 %v4036
      %4173 = vmatmul.f32.gmra.mxu0 %v3871
      %v4174 = vpop.f32.mrf.mxu0
      %v4175 = vadd.f32 0.0, %v4174
      %4176 = vdwg.mxu0
      %v4181 = vrot.slane %v4135, 7
      %v4182 = vrot.slane %v4155, 6
      %v4183 = vrot.slane %v4175, 5
      %v4184 = vsel %vm4026, %v4115, %v4181
      %v4185 = vsel %vm2069, %v4182, %v4183
      %v4186 = vsel %vm3813, %v4184, %v4185
      %v4188 = vadd.f32 %v4031, %v4186
      %s4189 = scalar_lea.vmem %s7, 1024
      %v4190 = vld [vmem:[%s4189] sm:$0xff]
      %v4191 = vld [vmem:[%s4189 + $0x8] sm:$0xff]
      %v4192 = vld [vmem:[%s4189 + $0x10] sm:$0xff]
      %v4193 = vld [vmem:[%s4189 + $0x18] sm:$0xff]
      %v4194 = vld [vmem:[%s4189 + $0x20] sm:$0xff]
      %v4195 = vld [vmem:[%s4189 + $0x28] sm:$0xff]
      %v4196 = vld [vmem:[%s4189 + $0x30] sm:$0xff]
      %v4197 = vld [vmem:[%s4189 + $0x38] sm:$0xff]
      %v4198 = vld [vmem:[%s4189 + $0x40] sm:$0xff]
      %v4199 = vld [vmem:[%s4189 + $0x48] sm:$0xff]
      %v4200 = vld [vmem:[%s4189 + $0x50] sm:$0xff]
      %v4201 = vld [vmem:[%s4189 + $0x58] sm:$0xff]
      %v4202 = vld [vmem:[%s4189 + $0x60] sm:$0xff]
      %v4203 = vld [vmem:[%s4189 + $0x68] sm:$0xff]
      %v4204 = vld [vmem:[%s4189 + $0x70] sm:$0xff]
      %v4205 = vld [vmem:[%s4189 + $0x78] sm:$0xff]
      %v4206 = vld [vmem:[%s4189 + $0x80] sm:$0xff]
      %v4207 = vld [vmem:[%s4189 + $0x88] sm:$0xff]
      %v4208 = vld [vmem:[%s4189 + $0x90] sm:$0xff]
      %v4209 = vld [vmem:[%s4189 + $0x98] sm:$0xff]
      %v4210 = vld [vmem:[%s4189 + $0xa0] sm:$0xff]
      %v4211 = vld [vmem:[%s4189 + $0xa8] sm:$0xff]
      %v4212 = vld [vmem:[%s4189 + $0xb0] sm:$0xff]
      %v4213 = vld [vmem:[%s4189 + $0xb8] sm:$0xff]
      %v4214 = vld [vmem:[%s4189 + $0xc0] sm:$0xff]
      %v4215 = vld [vmem:[%s4189 + $0xc8] sm:$0xff]
      %v4216 = vld [vmem:[%s4189 + $0xd0] sm:$0xff]
      %v4217 = vld [vmem:[%s4189 + $0xd8] sm:$0xff]
      %v4218 = vld [vmem:[%s4189 + $0xe0] sm:$0xff]
      %v4219 = vld [vmem:[%s4189 + $0xe8] sm:$0xff]
      %v4220 = vld [vmem:[%s4189 + $0xf0] sm:$0xff]
      %v4221 = vld [vmem:[%s4189 + $0xf8] sm:$0xff]
      %v4222 = vld [vmem:[%s4189 + $0x100] sm:$0xff]
      %v4223 = vld [vmem:[%s4189 + $0x108] sm:$0xff]
      %v4224 = vld [vmem:[%s4189 + $0x110] sm:$0xff]
      %v4225 = vld [vmem:[%s4189 + $0x118] sm:$0xff]
      %v4226 = vld [vmem:[%s4189 + $0x120] sm:$0xff]
      %v4227 = vld [vmem:[%s4189 + $0x128] sm:$0xff]
      %v4228 = vld [vmem:[%s4189 + $0x130] sm:$0xff]
      %v4229 = vld [vmem:[%s4189 + $0x138] sm:$0xff]
      %v4230 = vld [vmem:[%s4189 + $0x140] sm:$0xff]
      %v4231 = vld [vmem:[%s4189 + $0x148] sm:$0xff]
      %v4232 = vld [vmem:[%s4189 + $0x150] sm:$0xff]
      %v4233 = vld [vmem:[%s4189 + $0x158] sm:$0xff]
      %v4234 = vld [vmem:[%s4189 + $0x160] sm:$0xff]
      %v4235 = vld [vmem:[%s4189 + $0x168] sm:$0xff]
      %v4236 = vld [vmem:[%s4189 + $0x170] sm:$0xff]
      %v4237 = vld [vmem:[%s4189 + $0x178] sm:$0xff]
      %v4238 = vld [vmem:[%s4189 + $0x180] sm:$0xff]
      %v4239 = vld [vmem:[%s4189 + $0x188] sm:$0xff]
      %v4240 = vld [vmem:[%s4189 + $0x190] sm:$0xff]
      %v4241 = vld [vmem:[%s4189 + $0x198] sm:$0xff]
      %v4242 = vld [vmem:[%s4189 + $0x1a0] sm:$0xff]
      %v4243 = vld [vmem:[%s4189 + $0x1a8] sm:$0xff]
      %v4244 = vld [vmem:[%s4189 + $0x1b0] sm:$0xff]
      %v4245 = vld [vmem:[%s4189 + $0x1b8] sm:$0xff]
      %v4246 = vld [vmem:[%s4189 + $0x1c0] sm:$0xff]
      %v4247 = vld [vmem:[%s4189 + $0x1c8] sm:$0xff]
      %v4248 = vld [vmem:[%s4189 + $0x1d0] sm:$0xff]
      %v4249 = vld [vmem:[%s4189 + $0x1d8] sm:$0xff]
      %v4250 = vld [vmem:[%s4189 + $0x1e0] sm:$0xff]
      %v4251 = vld [vmem:[%s4189 + $0x1e8] sm:$0xff]
      %v4252 = vld [vmem:[%s4189 + $0x1f0] sm:$0xff]
      %v4253 = vld [vmem:[%s4189 + $0x1f8] sm:$0xff]
      %4254 = vmatpush.msra.mxu0 %v4250
      %4255 = vmatpush.msra.mxu0 %v4246
      %4256 = vmatpush.msra.mxu0 %v4242
      %4257 = vmatpush.msra.mxu0 %v4238
      %4258 = vmatpush.msra.mxu0 %v4234
      %4259 = vmatpush.msra.mxu0 %v4230
      %4260 = vmatpush.msra.mxu0 %v4226
      %4261 = vmatpush.msra.mxu0 %v4222
      %4262 = vmatpush.msra.mxu0 %v4218
      %4263 = vmatpush.msra.mxu0 %v4214
      %4264 = vmatpush.msra.mxu0 %v4210
      %4265 = vmatpush.msra.mxu0 %v4206
      %4266 = vmatpush.msra.mxu0 %v4202
      %4267 = vmatpush.msra.mxu0 %v4198
      %4268 = vmatpush.msra.mxu0 %v4194
      %4269 = vmatpush.msra.mxu0 %v4190
      %4270 = vmatmul.f32.gmra.mxu0 %v3872
      %v4271 = vpop.f32.mrf.mxu0
      %v4272 = vadd.f32 0.0, %v4271
      %4273 = vdwg.mxu0
      %4274 = vmatpush.msra.mxu0 %v4251
      %4275 = vmatpush.msra.mxu0 %v4247
      %4276 = vmatpush.msra.mxu0 %v4243
      %4277 = vmatpush.msra.mxu0 %v4239
      %4278 = vmatpush.msra.mxu0 %v4235
      %4279 = vmatpush.msra.mxu0 %v4231
      %4280 = vmatpush.msra.mxu0 %v4227
      %4281 = vmatpush.msra.mxu0 %v4223
      %4282 = vmatpush.msra.mxu0 %v4219
      %4283 = vmatpush.msra.mxu0 %v4215
      %4284 = vmatpush.msra.mxu0 %v4211
      %4285 = vmatpush.msra.mxu0 %v4207
      %4286 = vmatpush.msra.mxu0 %v4203
      %4287 = vmatpush.msra.mxu0 %v4199
      %4288 = vmatpush.msra.mxu0 %v4195
      %4289 = vmatpush.msra.mxu0 %v4191
      %4290 = vmatmul.f32.gmra.mxu0 %v3872
      %v4291 = vpop.f32.mrf.mxu0
      %v4292 = vadd.f32 0.0, %v4291
      %4293 = vdwg.mxu0
      %4294 = vmatpush.msra.mxu0 %v4252
      %4295 = vmatpush.msra.mxu0 %v4248
      %4296 = vmatpush.msra.mxu0 %v4244
      %4297 = vmatpush.msra.mxu0 %v4240
      %4298 = vmatpush.msra.mxu0 %v4236
      %4299 = vmatpush.msra.mxu0 %v4232
      %4300 = vmatpush.msra.mxu0 %v4228
      %4301 = vmatpush.msra.mxu0 %v4224
      %4302 = vmatpush.msra.mxu0 %v4220
      %4303 = vmatpush.msra.mxu0 %v4216
      %4304 = vmatpush.msra.mxu0 %v4212
      %4305 = vmatpush.msra.mxu0 %v4208
      %4306 = vmatpush.msra.mxu0 %v4204
      %4307 = vmatpush.msra.mxu0 %v4200
      %4308 = vmatpush.msra.mxu0 %v4196
      %4309 = vmatpush.msra.mxu0 %v4192
      %4310 = vmatmul.f32.gmra.mxu0 %v3872
      %v4311 = vpop.f32.mrf.mxu0
      %v4312 = vadd.f32 0.0, %v4311
      %4313 = vdwg.mxu0
      %4314 = vmatpush.msra.mxu0 %v4253
      %4315 = vmatpush.msra.mxu0 %v4249
      %4316 = vmatpush.msra.mxu0 %v4245
      %4317 = vmatpush.msra.mxu0 %v4241
      %4318 = vmatpush.msra.mxu0 %v4237
      %4319 = vmatpush.msra.mxu0 %v4233
      %4320 = vmatpush.msra.mxu0 %v4229
      %4321 = vmatpush.msra.mxu0 %v4225
      %4322 = vmatpush.msra.mxu0 %v4221
      %4323 = vmatpush.msra.mxu0 %v4217
      %4324 = vmatpush.msra.mxu0 %v4213
      %4325 = vmatpush.msra.mxu0 %v4209
      %4326 = vmatpush.msra.mxu0 %v4205
      %4327 = vmatpush.msra.mxu0 %v4201
      %4328 = vmatpush.msra.mxu0 %v4197
      %4329 = vmatpush.msra.mxu0 %v4193
      %4330 = vmatmul.f32.gmra.mxu0 %v3872
      %v4331 = vpop.f32.mrf.mxu0
      %v4332 = vadd.f32 0.0, %v4331
      %4333 = vdwg.mxu0
      %v4338 = vrot.slane %v4292, 7
      %v4339 = vrot.slane %v4312, 6
      %v4340 = vrot.slane %v4332, 5
      %v4341 = vsel %vm4026, %v4272, %v4338
      %v4342 = vsel %vm2069, %v4339, %v4340
      %v4343 = vsel %vm3813, %v4341, %v4342
      %v4345 = vadd.f32 %v4188, %v4343
      %s4346 = scalar_lea.vmem %s7, 1536
      %v4347 = vld [vmem:[%s4346] sm:$0xff]
      %v4348 = vld [vmem:[%s4346 + $0x8] sm:$0xff]
      %v4349 = vld [vmem:[%s4346 + $0x10] sm:$0xff]
      %v4350 = vld [vmem:[%s4346 + $0x18] sm:$0xff]
      %v4351 = vld [vmem:[%s4346 + $0x20] sm:$0xff]
      %v4352 = vld [vmem:[%s4346 + $0x28] sm:$0xff]
      %v4353 = vld [vmem:[%s4346 + $0x30] sm:$0xff]
      %v4354 = vld [vmem:[%s4346 + $0x38] sm:$0xff]
      %v4355 = vld [vmem:[%s4346 + $0x40] sm:$0xff]
      %v4356 = vld [vmem:[%s4346 + $0x48] sm:$0xff]
      %v4357 = vld [vmem:[%s4346 + $0x50] sm:$0xff]
      %v4358 = vld [vmem:[%s4346 + $0x58] sm:$0xff]
      %v4359 = vld [vmem:[%s4346 + $0x60] sm:$0xff]
      %v4360 = vld [vmem:[%s4346 + $0x68] sm:$0xff]
      %v4361 = vld [vmem:[%s4346 + $0x70] sm:$0xff]
      %v4362 = vld [vmem:[%s4346 + $0x78] sm:$0xff]
      %v4363 = vld [vmem:[%s4346 + $0x80] sm:$0xff]
      %v4364 = vld [vmem:[%s4346 + $0x88] sm:$0xff]
      %v4365 = vld [vmem:[%s4346 + $0x90] sm:$0xff]
      %v4366 = vld [vmem:[%s4346 + $0x98] sm:$0xff]
      %v4367 = vld [vmem:[%s4346 + $0xa0] sm:$0xff]
      %v4368 = vld [vmem:[%s4346 + $0xa8] sm:$0xff]
      %v4369 = vld [vmem:[%s4346 + $0xb0] sm:$0xff]
      %v4370 = vld [vmem:[%s4346 + $0xb8] sm:$0xff]
      %v4371 = vld [vmem:[%s4346 + $0xc0] sm:$0xff]
      %v4372 = vld [vmem:[%s4346 + $0xc8] sm:$0xff]
      %v4373 = vld [vmem:[%s4346 + $0xd0] sm:$0xff]
      %v4374 = vld [vmem:[%s4346 + $0xd8] sm:$0xff]
      %v4375 = vld [vmem:[%s4346 + $0xe0] sm:$0xff]
      %v4376 = vld [vmem:[%s4346 + $0xe8] sm:$0xff]
      %v4377 = vld [vmem:[%s4346 + $0xf0] sm:$0xff]
      %v4378 = vld [vmem:[%s4346 + $0xf8] sm:$0xff]
      %v4379 = vld [vmem:[%s4346 + $0x100] sm:$0xff]
      %v4380 = vld [vmem:[%s4346 + $0x108] sm:$0xff]
      %v4381 = vld [vmem:[%s4346 + $0x110] sm:$0xff]
      %v4382 = vld [vmem:[%s4346 + $0x118] sm:$0xff]
      %v4383 = vld [vmem:[%s4346 + $0x120] sm:$0xff]
      %v4384 = vld [vmem:[%s4346 + $0x128] sm:$0xff]
      %v4385 = vld [vmem:[%s4346 + $0x130] sm:$0xff]
      %v4386 = vld [vmem:[%s4346 + $0x138] sm:$0xff]
      %v4387 = vld [vmem:[%s4346 + $0x140] sm:$0xff]
      %v4388 = vld [vmem:[%s4346 + $0x148] sm:$0xff]
      %v4389 = vld [vmem:[%s4346 + $0x150] sm:$0xff]
      %v4390 = vld [vmem:[%s4346 + $0x158] sm:$0xff]
      %v4391 = vld [vmem:[%s4346 + $0x160] sm:$0xff]
      %v4392 = vld [vmem:[%s4346 + $0x168] sm:$0xff]
      %v4393 = vld [vmem:[%s4346 + $0x170] sm:$0xff]
      %v4394 = vld [vmem:[%s4346 + $0x178] sm:$0xff]
      %v4395 = vld [vmem:[%s4346 + $0x180] sm:$0xff]
      %v4396 = vld [vmem:[%s4346 + $0x188] sm:$0xff]
      %v4397 = vld [vmem:[%s4346 + $0x190] sm:$0xff]
      %v4398 = vld [vmem:[%s4346 + $0x198] sm:$0xff]
      %v4399 = vld [vmem:[%s4346 + $0x1a0] sm:$0xff]
      %v4400 = vld [vmem:[%s4346 + $0x1a8] sm:$0xff]
      %v4401 = vld [vmem:[%s4346 + $0x1b0] sm:$0xff]
      %v4402 = vld [vmem:[%s4346 + $0x1b8] sm:$0xff]
      %v4403 = vld [vmem:[%s4346 + $0x1c0] sm:$0xff]
      %v4404 = vld [vmem:[%s4346 + $0x1c8] sm:$0xff]
      %v4405 = vld [vmem:[%s4346 + $0x1d0] sm:$0xff]
      %v4406 = vld [vmem:[%s4346 + $0x1d8] sm:$0xff]
      %v4407 = vld [vmem:[%s4346 + $0x1e0] sm:$0xff]
      %v4408 = vld [vmem:[%s4346 + $0x1e8] sm:$0xff]
      %v4409 = vld [vmem:[%s4346 + $0x1f0] sm:$0xff]
      %v4410 = vld [vmem:[%s4346 + $0x1f8] sm:$0xff]
      %4411 = vmatpush.msra.mxu0 %v4407
      %4412 = vmatpush.msra.mxu0 %v4403
      %4413 = vmatpush.msra.mxu0 %v4399
      %4414 = vmatpush.msra.mxu0 %v4395
      %4415 = vmatpush.msra.mxu0 %v4391
      %4416 = vmatpush.msra.mxu0 %v4387
      %4417 = vmatpush.msra.mxu0 %v4383
      %4418 = vmatpush.msra.mxu0 %v4379
      %4419 = vmatpush.msra.mxu0 %v4375
      %4420 = vmatpush.msra.mxu0 %v4371
      %4421 = vmatpush.msra.mxu0 %v4367
      %4422 = vmatpush.msra.mxu0 %v4363
      %4423 = vmatpush.msra.mxu0 %v4359
      %4424 = vmatpush.msra.mxu0 %v4355
      %4425 = vmatpush.msra.mxu0 %v4351
      %4426 = vmatpush.msra.mxu0 %v4347
      %4427 = vmatmul.f32.gmra.mxu0 %v3873
      %v4428 = vpop.f32.mrf.mxu0
      %v4429 = vadd.f32 0.0, %v4428
      %4430 = vdwg.mxu0
      %4431 = vmatpush.msra.mxu0 %v4408
      %4432 = vmatpush.msra.mxu0 %v4404
      %4433 = vmatpush.msra.mxu0 %v4400
      %4434 = vmatpush.msra.mxu0 %v4396
      %4435 = vmatpush.msra.mxu0 %v4392
      %4436 = vmatpush.msra.mxu0 %v4388
      %4437 = vmatpush.msra.mxu0 %v4384
      %4438 = vmatpush.msra.mxu0 %v4380
      %4439 = vmatpush.msra.mxu0 %v4376
      %4440 = vmatpush.msra.mxu0 %v4372
      %4441 = vmatpush.msra.mxu0 %v4368
      %4442 = vmatpush.msra.mxu0 %v4364
      %4443 = vmatpush.msra.mxu0 %v4360
      %4444 = vmatpush.msra.mxu0 %v4356
      %4445 = vmatpush.msra.mxu0 %v4352
      %4446 = vmatpush.msra.mxu0 %v4348
      %4447 = vmatmul.f32.gmra.mxu0 %v3873
      %v4448 = vpop.f32.mrf.mxu0
      %v4449 = vadd.f32 0.0, %v4448
      %4450 = vdwg.mxu0
      %4451 = vmatpush.msra.mxu0 %v4409
      %4452 = vmatpush.msra.mxu0 %v4405
      %4453 = vmatpush.msra.mxu0 %v4401
      %4454 = vmatpush.msra.mxu0 %v4397
      %4455 = vmatpush.msra.mxu0 %v4393
      %4456 = vmatpush.msra.mxu0 %v4389
      %4457 = vmatpush.msra.mxu0 %v4385
      %4458 = vmatpush.msra.mxu0 %v4381
      %4459 = vmatpush.msra.mxu0 %v4377
      %4460 = vmatpush.msra.mxu0 %v4373
      %4461 = vmatpush.msra.mxu0 %v4369
      %4462 = vmatpush.msra.mxu0 %v4365
      %4463 = vmatpush.msra.mxu0 %v4361
      %4464 = vmatpush.msra.mxu0 %v4357
      %4465 = vmatpush.msra.mxu0 %v4353
      %4466 = vmatpush.msra.mxu0 %v4349
      %4467 = vmatmul.f32.gmra.mxu0 %v3873
      %v4468 = vpop.f32.mrf.mxu0
      %v4469 = vadd.f32 0.0, %v4468
      %4470 = vdwg.mxu0
      %4471 = vmatpush.msra.mxu0 %v4410
      %4472 = vmatpush.msra.mxu0 %v4406
      %4473 = vmatpush.msra.mxu0 %v4402
      %4474 = vmatpush.msra.mxu0 %v4398
      %4475 = vmatpush.msra.mxu0 %v4394
      %4476 = vmatpush.msra.mxu0 %v4390
      %4477 = vmatpush.msra.mxu0 %v4386
      %4478 = vmatpush.msra.mxu0 %v4382
      %4479 = vmatpush.msra.mxu0 %v4378
      %4480 = vmatpush.msra.mxu0 %v4374
      %4481 = vmatpush.msra.mxu0 %v4370
      %4482 = vmatpush.msra.mxu0 %v4366
      %4483 = vmatpush.msra.mxu0 %v4362
      %4484 = vmatpush.msra.mxu0 %v4358
      %4485 = vmatpush.msra.mxu0 %v4354
      %4486 = vmatpush.msra.mxu0 %v4350
      %4487 = vmatmul.f32.gmra.mxu0 %v3873
      %v4488 = vpop.f32.mrf.mxu0
      %v4489 = vadd.f32 0.0, %v4488
      %4490 = vdwg.mxu0
      %v4495 = vrot.slane %v4449, 7
      %v4496 = vrot.slane %v4469, 6
      %v4497 = vrot.slane %v4489, 5
      %v4498 = vsel %vm4026, %v4429, %v4495
      %v4499 = vsel %vm2069, %v4496, %v4497
      %v4500 = vsel %vm3813, %v4498, %v4499
      %v4502 = vadd.f32 %v4345, %v4500
      %v4503 = vmax.f32 %v4502, 0.0
      %v4504 = vld [vmem:[%s9] sm:$0xff]
      %v4505 = vld [vmem:[%s9 + $0x8] sm:$0xff]
      %v4506 = vld [vmem:[%s9 + $0x10] sm:$0xff]
      %v4507 = vld [vmem:[%s9 + $0x18] sm:$0xff]
      %v4508 = vld [vmem:[%s9 + $0x20] sm:$0xff]
      %v4509 = vld [vmem:[%s9 + $0x28] sm:$0xff]
      %v4510 = vld [vmem:[%s9 + $0x30] sm:$0xff]
      %v4511 = vld [vmem:[%s9 + $0x38] sm:$0xff]
      %v4512 = vld [vmem:[%s9 + $0x40] sm:$0xff]
      %v4513 = vld [vmem:[%s9 + $0x48] sm:$0xff]
      %v4514 = vld [vmem:[%s9 + $0x50] sm:$0xff]
      %v4515 = vld [vmem:[%s9 + $0x58] sm:$0xff]
      %v4516 = vld [vmem:[%s9 + $0x60] sm:$0xff]
      %v4517 = vld [vmem:[%s9 + $0x68] sm:$0xff]
      %v4518 = vld [vmem:[%s9 + $0x70] sm:$0xff]
      %v4519 = vld [vmem:[%s9 + $0x78] sm:$0xff]
      %v4520 = vld [vmem:[%s9 + $0x80] sm:$0xff]
      %v4521 = vld [vmem:[%s9 + $0x88] sm:$0xff]
      %v4522 = vld [vmem:[%s9 + $0x90] sm:$0xff]
      %v4523 = vld [vmem:[%s9 + $0x98] sm:$0xff]
      %v4524 = vld [vmem:[%s9 + $0xa0] sm:$0xff]
      %v4525 = vld [vmem:[%s9 + $0xa8] sm:$0xff]
      %v4526 = vld [vmem:[%s9 + $0xb0] sm:$0xff]
      %v4527 = vld [vmem:[%s9 + $0xb8] sm:$0xff]
      %v4528 = vld [vmem:[%s9 + $0xc0] sm:$0xff]
      %v4529 = vld [vmem:[%s9 + $0xc8] sm:$0xff]
      %v4530 = vld [vmem:[%s9 + $0xd0] sm:$0xff]
      %v4531 = vld [vmem:[%s9 + $0xd8] sm:$0xff]
      %v4532 = vld [vmem:[%s9 + $0xe0] sm:$0xff]
      %v4533 = vld [vmem:[%s9 + $0xe8] sm:$0xff]
      %v4534 = vld [vmem:[%s9 + $0xf0] sm:$0xff]
      %v4535 = vld [vmem:[%s9 + $0xf8] sm:$0xff]
      %v4536 = vld [vmem:[%s9 + $0x100] sm:$0xff]
      %v4537 = vld [vmem:[%s9 + $0x108] sm:$0xff]
      %v4538 = vld [vmem:[%s9 + $0x110] sm:$0xff]
      %v4539 = vld [vmem:[%s9 + $0x118] sm:$0xff]
      %v4540 = vld [vmem:[%s9 + $0x120] sm:$0xff]
      %v4541 = vld [vmem:[%s9 + $0x128] sm:$0xff]
      %v4542 = vld [vmem:[%s9 + $0x130] sm:$0xff]
      %v4543 = vld [vmem:[%s9 + $0x138] sm:$0xff]
      %v4544 = vld [vmem:[%s9 + $0x140] sm:$0xff]
      %v4545 = vld [vmem:[%s9 + $0x148] sm:$0xff]
      %v4546 = vld [vmem:[%s9 + $0x150] sm:$0xff]
      %v4547 = vld [vmem:[%s9 + $0x158] sm:$0xff]
      %v4548 = vld [vmem:[%s9 + $0x160] sm:$0xff]
      %v4549 = vld [vmem:[%s9 + $0x168] sm:$0xff]
      %v4550 = vld [vmem:[%s9 + $0x170] sm:$0xff]
      %v4551 = vld [vmem:[%s9 + $0x178] sm:$0xff]
      %v4552 = vld [vmem:[%s9 + $0x180] sm:$0xff]
      %v4553 = vld [vmem:[%s9 + $0x188] sm:$0xff]
      %v4554 = vld [vmem:[%s9 + $0x190] sm:$0xff]
      %v4555 = vld [vmem:[%s9 + $0x198] sm:$0xff]
      %v4556 = vld [vmem:[%s9 + $0x1a0] sm:$0xff]
      %v4557 = vld [vmem:[%s9 + $0x1a8] sm:$0xff]
      %v4558 = vld [vmem:[%s9 + $0x1b0] sm:$0xff]
      %v4559 = vld [vmem:[%s9 + $0x1b8] sm:$0xff]
      %v4560 = vld [vmem:[%s9 + $0x1c0] sm:$0xff]
      %v4561 = vld [vmem:[%s9 + $0x1c8] sm:$0xff]
      %v4562 = vld [vmem:[%s9 + $0x1d0] sm:$0xff]
      %v4563 = vld [vmem:[%s9 + $0x1d8] sm:$0xff]
      %v4564 = vld [vmem:[%s9 + $0x1e0] sm:$0xff]
      %v4565 = vld [vmem:[%s9 + $0x1e8] sm:$0xff]
      %v4566 = vld [vmem:[%s9 + $0x1f0] sm:$0xff]
      %v4567 = vld [vmem:[%s9 + $0x1f8] sm:$0xff]
      %v4568 = vld [vmem:[%s10] sm:$0x1]
      %v4570 = vperm.slane %v4503, 0
      %v4571 = vperm.slane %v4503, 1
      %v4572 = vperm.slane %v4503, 2
      %v4573 = vperm.slane %v4503, 3
      %4578 = vmatpush.msra.mxu0 %v4519
      %4579 = vmatpush.msra.mxu0 %v4518
      %4580 = vmatpush.msra.mxu0 %v4517
      %4581 = vmatpush.msra.mxu0 %v4516
      %4582 = vmatpush.msra.mxu0 %v4515
      %4583 = vmatpush.msra.mxu0 %v4514
      %4584 = vmatpush.msra.mxu0 %v4513
      %4585 = vmatpush.msra.mxu0 %v4512
      %4586 = vmatpush.msra.mxu0 %v4511
      %4587 = vmatpush.msra.mxu0 %v4510
      %4588 = vmatpush.msra.mxu0 %v4509
      %4589 = vmatpush.msra.mxu0 %v4508
      %4590 = vmatpush.msra.mxu0 %v4507
      %4591 = vmatpush.msra.mxu0 %v4506
      %4592 = vmatpush.msra.mxu0 %v4505
      %4593 = vmatpush.msra.mxu0 %v4504
      %4594 = vmatmul.f32.gmra.mxu0 %v4570
      %v4595 = vpop.f32.mrf.mxu0
      %v4596 = vadd.f32 %v4568, %v4595
      %4597 = vdwg.mxu0
      %4598 = vmatpush.msra.mxu0 %v4535
      %4599 = vmatpush.msra.mxu0 %v4534
      %4600 = vmatpush.msra.mxu0 %v4533
      %4601 = vmatpush.msra.mxu0 %v4532
      %4602 = vmatpush.msra.mxu0 %v4531
      %4603 = vmatpush.msra.mxu0 %v4530
      %4604 = vmatpush.msra.mxu0 %v4529
      %4605 = vmatpush.msra.mxu0 %v4528
      %4606 = vmatpush.msra.mxu0 %v4527
      %4607 = vmatpush.msra.mxu0 %v4526
      %4608 = vmatpush.msra.mxu0 %v4525
      %4609 = vmatpush.msra.mxu0 %v4524
      %4610 = vmatpush.msra.mxu0 %v4523
      %4611 = vmatpush.msra.mxu0 %v4522
      %4612 = vmatpush.msra.mxu0 %v4521
      %4613 = vmatpush.msra.mxu0 %v4520
      %4614 = vmatmul.f32.gmra.mxu0 %v4571
      %v4615 = vpop.f32.mrf.mxu0
      %v4616 = vadd.f32 %v4596, %v4615
      %4617 = vdwg.mxu0
      %4618 = vmatpush.msra.mxu0 %v4551
      %4619 = vmatpush.msra.mxu0 %v4550
      %4620 = vmatpush.msra.mxu0 %v4549
      %4621 = vmatpush.msra.mxu0 %v4548
      %4622 = vmatpush.msra.mxu0 %v4547
      %4623 = vmatpush.msra.mxu0 %v4546
      %4624 = vmatpush.msra.mxu0 %v4545
      %4625 = vmatpush.msra.mxu0 %v4544
      %4626 = vmatpush.msra.mxu0 %v4543
      %4627 = vmatpush.msra.mxu0 %v4542
      %4628 = vmatpush.msra.mxu0 %v4541
      %4629 = vmatpush.msra.mxu0 %v4540
      %4630 = vmatpush.msra.mxu0 %v4539
      %4631 = vmatpush.msra.mxu0 %v4538
      %4632 = vmatpush.msra.mxu0 %v4537
      %4633 = vmatpush.msra.mxu0 %v4536
      %4634 = vmatmul.f32.gmra.mxu0 %v4572
      %v4635 = vpop.f32.mrf.mxu0
      %v4636 = vadd.f32 %v4616, %v4635
      %4637 = vdwg.mxu0
      %4638 = vmatpush.msra.mxu0 %v4567
      %4639 = vmatpush.msra.mxu0 %v4566
      %4640 = vmatpush.msra.mxu0 %v4565
      %4641 = vmatpush.msra.mxu0 %v4564
      %4642 = vmatpush.msra.mxu0 %v4563
      %4643 = vmatpush.msra.mxu0 %v4562
      %4644 = vmatpush.msra.mxu0 %v4561
      %4645 = vmatpush.msra.mxu0 %v4560
      %4646 = vmatpush.msra.mxu0 %v4559
      %4647 = vmatpush.msra.mxu0 %v4558
      %4648 = vmatpush.msra.mxu0 %v4557
      %4649 = vmatpush.msra.mxu0 %v4556
      %4650 = vmatpush.msra.mxu0 %v4555
      %4651 = vmatpush.msra.mxu0 %v4554
      %4652 = vmatpush.msra.mxu0 %v4553
      %4653 = vmatpush.msra.mxu0 %v4552
      %4654 = vmatmul.f32.gmra.mxu0 %v4573
      %v4655 = vpop.f32.mrf.mxu0
      %v4656 = vadd.f32 %v4636, %v4655
      %4657 = vdwg.mxu0
      %4658 = vst [vmem:[%s382] sm:$0x1] %v4656
      %p4659 = scmp.lt.s32.totalorder %s22, 1
      %s4660 = scalar_select %p4659, %s22, 1
      %s4661 = scalar_lea.vmem %s11, %s4660
      // Predicated region
      $region65: #{cnn_model1_forward.1} parent=63 // pred_check
        %p4662 = pneg %p276
      $region66: #{cnn_model1_forward.1} parent=63 // pred_check_branch
        %4664 = sbr.rel (%p4662) target = $region68
      $region67: #{cnn_model1_forward.1} parent=63 // pred_region
        _
      $region68: #{cnn_model1_forward.1} parent=63 // pred_fallthru
        _
    $region64: #{cnn_model1_forward.1} parent=5 // pred_fallthru
      _
    %p4665 = scmp.le.s32.totalorder 2, %s17
    // Predicated region
    $region69: #{cnn_model1_forward.1} parent=5 // pred_check
      %p4666 = pneg %p4665
    $region70: #{cnn_model1_forward.1} parent=5 // pred_check_branch
      %4668 = sbr.rel (%p4666) target = $region72
    $region71: #{cnn_model1_forward.1} parent=5 // pred_region
      %s4669 = ssub.s32 %s17, 2
      // Predicated region
      $region73: #{cnn_model1_forward.1} parent=71 // pred_check
        %p4670 = pneg %p282
      $region74: #{cnn_model1_forward.1} parent=71 // pred_check_branch
        %4672 = sbr.rel (%p4670) target = $region76
      $region75: #{cnn_model1_forward.1} parent=71 // pred_region
        %p4673 = scmp.lt.s32.totalorder %s23, 1
        %s4674 = scalar_select %p4673, %s23, 1
        %s4675 = scalar_lea.vmem %s11, %s4674
      $region76: #{cnn_model1_forward.1} parent=71 // pred_fallthru
        _
    $region72: #{cnn_model1_forward.1} parent=5 // pred_fallthru
      _
  $region6: #{cnn_model1_forward.1} parent=0 // loop_footer
    %s21 = sadd.s32 1, %s17
  $region7: #{cnn_model1_forward.1} parent=0 // loop_footer_branch
    %16 = sbr.rel target = $region3
  $region8: #{cnn_model1_forward.1} parent=0 // loop_exit
    _

</llo_original>
